<compile_context>
chip_gen: v6e
topology: v6e:2x2x1
jax: 0.10.0
libtpu: 0.0.40
codegen_flags: <defaults>
</compile_context>

<pallas_src>
import functools

import jax
import jax.numpy as jnp
from jax.experimental import pallas as pl
from jax.experimental.pallas import tpu as pltpu

LN_EPS = 1e-5
HEAD_DIM = 256


def _round_up(n, m):
    return ((n + m - 1) // m) * m


def _ln_relu_bf16(h, gamma, beta):
    """Single-pass LayerNorm stats (f32) + bf16 affine + bf16 ReLU."""
    n = h.shape[-1]
    s1 = jnp.sum(h, axis=-1, keepdims=True)
    s2 = jnp.sum(h * h, axis=-1, keepdims=True)
    mu = s1 * (1.0 / n)
    var = s2 * (1.0 / n) - mu * mu
    inv = jax.lax.rsqrt(var + LN_EPS)
    y = ((h - mu) * inv).astype(jnp.bfloat16) * gamma + beta
    return jnp.maximum(y, 0)


def dueling_kernel(
    inv_num_actions,
    x_ref,
    w1_ref, b1_ref, g1_ref, be1_ref,
    w2_ref, b2_ref, g2_ref, be2_ref,
    wh_ref, bh_ref, gv_ref, bev_ref, ga_ref, bea_ref,
    wo_ref, bo_ref,
    out_ref,
):
    x = x_ref[...]  # bf16 (tile_m, F) -- cast done in the wrapper

    # fc1 -> ln1 -> relu
    h1 = jnp.dot(x, w1_ref[...], preferred_element_type=jnp.float32) + b1_ref[...]
    h1 = _ln_relu_bf16(h1, g1_ref[...], be1_ref[...])

    # TODO(synk): nn.Dropout(0.3) implemented as eval-mode identity (no stochastic masking).

    # fc2 -> ln2 -> relu
    h2 = jnp.dot(h1, w2_ref[...], preferred_element_type=jnp.float32) + b2_ref[...]
    h2 = _ln_relu_bf16(h2, g2_ref[...], be2_ref[...])

    # fused [value_fc | adv_fc] projection: one wide (512 -> 512) MXU matmul
    heads = jnp.dot(h2, wh_ref[...], preferred_element_type=jnp.float32) + bh_ref[...]
    v = _ln_relu_bf16(heads[:, :HEAD_DIM], gv_ref[...], bev_ref[...])
    a = _ln_relu_bf16(heads[:, HEAD_DIM:], ga_ref[...], bea_ref[...])

    # fused head output + dueling combine:
    #   cols [0, A) = adv, col A = -A * value, cols > A = exactly 0
    #   row_sum = adv_sum - A*value  ->  out = head_out - row_sum/A
    #   so out[:, j] = adv[:, j] + value - adv_mean for j < A.
    va = jnp.concatenate([v, a], axis=-1)  # (tile_m, 512) bf16
    ho = jnp.dot(va, wo_ref[...], preferred_element_type=jnp.float32) + bo_ref[...]
    s = jnp.sum(ho, axis=-1, keepdims=True)
    out_ref[...] = ho - s * inv_num_actions


def init_params(key, input_size, num_actions):
    """Deterministic synthetic parameters (shapes match the PyTorch module,
    with Linear weights pre-transposed to (in_features, out_features))."""
    ks = jax.random.split(key, 7)

    def lin(k, fan_in, fan_out):
        w = jax.random.normal(k, (fan_in, fan_out), jnp.float32) * 0.02
        b = jnp.zeros((1, fan_out), jnp.float32)
        return w, b

    def ln(dim):
        return jnp.ones((1, dim), jnp.float32), jnp.zeros((1, dim), jnp.float32)

    w1, b1 = lin(ks[0], input_size, 1024)
    g1, be1 = ln(1024)
    w2, b2 = lin(ks[1], 1024, 512)
    g2, be2 = ln(512)
    wvf, bvf = lin(ks[2], 512, HEAD_DIM)
    gv, bev = ln(HEAD_DIM)
    wvo, bvo = lin(ks[3], HEAD_DIM, 1)
    waf, baf = lin(ks[4], 512, HEAD_DIM)
    ga, bea = ln(HEAD_DIM)
    wao, bao = lin(ks[5], HEAD_DIM, num_actions)

    return (w1, b1, g1, be1,
            w2, b2, g2, be2,
            wvf, bvf, gv, bev,
            wvo, bvo,
            waf, baf, ga, bea,
            wao, bao)


def pack_params(raw, num_actions):
    """Fuse/pad/cast raw params into the kernel's resident-weight layout."""
    (w1, b1, g1, be1, w2, b2, g2, be2,
     wvf, bvf, gv, bev, wvo, bvo,
     waf, baf, ga, bea, wao, bao) = raw

    A = num_actions
    out_pad = _round_up(A + 1, 128)
    bf16 = jnp.bfloat16

    # fused value_fc | adv_fc projection
    w_heads = jnp.concatenate([wvf, waf], axis=1).astype(bf16)   # (512, 512)
    b_heads = jnp.concatenate([bvf, baf], axis=1)                # (1, 512) f32

    # fused head-output weight (512, out_pad); invariant: all columns >= A+1
    # and all unused entries are exactly zero (dueling combine relies on it).
    w_out = jnp.zeros((2 * HEAD_DIM, out_pad), jnp.float32)
    w_out = w_out.at[HEAD_DIM:, :A].set(wao)                     # adv rows -> adv cols
    w_out = w_out.at[:HEAD_DIM, A].set(-float(A) * wvo[:, 0])    # value rows -> col A
    b_out = jnp.zeros((1, out_pad), jnp.float32)
    b_out = b_out.at[0, :A].set(bao[0])
    b_out = b_out.at[0, A].set(-float(A) * bvo[0, 0])

    return (w1.astype(bf16), b1, g1.astype(bf16), be1.astype(bf16),
            w2.astype(bf16), b2, g2.astype(bf16), be2.astype(bf16),
            w_heads, b_heads, gv.astype(bf16), bev.astype(bf16),
            ga.astype(bf16), bea.astype(bf16),
            w_out.astype(bf16), b_out)


def dueling_poker_nn(x, packed, num_actions, tile_m=None):
    batch, in_features = x.shape
    out_pad = _round_up(num_actions + 1, 128)

    # Tile selection: >= 2 grid steps for batch > 8 (megacore sharding on
    # v7x), <= 512 rows per tile (amortizes per-step overhead, fits scoped
    # VMEM easily), padding waste bounded to < one 8-row sublane group.
    if tile_m is None:
        if batch <= 8:
            tile_m = 8
        else:
            n_steps = max(2, pl.cdiv(batch, 512))
            tile_m = min(512, _round_up(pl.cdiv(batch, n_steps), 8))

    grid_m = pl.cdiv(batch, tile_m)
    padded_batch = grid_m * tile_m

    x = x.astype(jnp.bfloat16)
    if padded_batch != batch:
        x = jnp.pad(x, ((0, padded_batch - batch), (0, 0)))

    # Weights/biases: same block for every grid step -> DMA'd once, resident.
    def resident(p):
        return pl.BlockSpec(p.shape, lambda i: (0, 0))

    in_specs = [pl.BlockSpec((tile_m, in_features), lambda i: (i, 0))]
    in_specs += [resident(p) for p in packed]

    out = pl.pallas_call(
        functools.partial(dueling_kernel, 1.0 / num_actions),
        out_shape=jax.ShapeDtypeStruct((padded_batch, out_pad), jnp.float32),
        grid=(grid_m,),
        in_specs=in_specs,
        out_specs=pl.BlockSpec((tile_m, out_pad), lambda i: (i, 0)),
        compiler_params=pltpu.CompilerParams(
            dimension_semantics=("parallel",),
            vmem_limit_bytes=32 * 1024 * 1024,
        ),
    )(x, *packed)

    return out[:batch, :num_actions]


def reference_forward(x, raw):
    """Pure-JAX reference with the same bf16-weight / f32-accumulate numerics."""
    (w1, b1, g1, be1, w2, b2, g2, be2,
     wvf, bvf, gv, bev, wvo, bvo,
     waf, baf, ga, bea, wao, bao) = raw

    def dot_bf16(a, b):
        return jnp.dot(a.astype(jnp.bfloat16), b.astype(jnp.bfloat16),
                       preferred_element_type=jnp.float32)

    def ln(h, g, b):
        mu = jnp.mean(h, axis=-1, keepdims=True)
        d = h - mu
        var = jnp.mean(d * d, axis=-1, keepdims=True)
        return d * jax.lax.rsqrt(var + LN_EPS) * g + b

    h1 = jnp.maximum(ln(dot_bf16(x, w1) + b1, g1, be1), 0.0)
    h2 = jnp.maximum(ln(dot_bf16(h1, w2) + b2, g2, be2), 0.0)
    v = jnp.maximum(ln(dot_bf16(h2, wvf) + bvf, gv, bev), 0.0)
    value = jnp.dot(v, wvo) + bvo
    a = jnp.maximum(ln(dot_bf16(h2, waf) + baf, ga, bea), 0.0)
    adv = dot_bf16(a, wao) + bao
    return value + (adv - jnp.mean(adv, axis=1, keepdims=True))


if __name__ == "__main__":
    batch = 8
    input_size = 128
    num_actions = 8

    key = jax.random.PRNGKey(0)
    k_x, k_p = jax.random.split(key)
    x = jax.random.normal(k_x, (batch, input_size), jnp.float32)

    raw = init_params(k_p, input_size, num_actions)
    packed = pack_params(raw, num_actions)

    out = dueling_poker_nn(x, packed, num_actions)
    out = jax.block_until_ready(out)

    ref = reference_forward(x, raw)
    assert out.shape == (batch, num_actions)
    max_diff = float(jnp.max(jnp.abs(out - ref)))
    assert jnp.allclose(out, ref, atol=2e-2, rtol=2e-2), (
        f"kernel != reference (max abs diff {max_diff:.3e})")

    print("KERNEL_OK")
</pallas_src>

<mosaic_0001>
module attributes {stable_mosaic.version = 11 : i64} {
  func.func @dueling_kernel(%arg0: i32, %arg1: memref<8x128xbf16, #tpu.memory_space<vmem>>, %arg2: memref<128x1024xbf16, #tpu.memory_space<vmem>>, %arg3: memref<1x1024xf32, #tpu.memory_space<vmem>>, %arg4: memref<1x1024xbf16, #tpu.memory_space<vmem>>, %arg5: memref<1x1024xbf16, #tpu.memory_space<vmem>>, %arg6: memref<1024x512xbf16, #tpu.memory_space<vmem>>, %arg7: memref<1x512xf32, #tpu.memory_space<vmem>>, %arg8: memref<1x512xbf16, #tpu.memory_space<vmem>>, %arg9: memref<1x512xbf16, #tpu.memory_space<vmem>>, %arg10: memref<512x512xbf16, #tpu.memory_space<vmem>>, %arg11: memref<1x512xf32, #tpu.memory_space<vmem>>, %arg12: memref<1x256xbf16, #tpu.memory_space<vmem>>, %arg13: memref<1x256xbf16, #tpu.memory_space<vmem>>, %arg14: memref<1x256xbf16, #tpu.memory_space<vmem>>, %arg15: memref<1x256xbf16, #tpu.memory_space<vmem>>, %arg16: memref<512x128xbf16, #tpu.memory_space<vmem>>, %arg17: memref<1x128xf32, #tpu.memory_space<vmem>>, %arg18: memref<8x128xf32, #tpu.memory_space<vmem>>) attributes {dimension_semantics = [#tpu.dimension_semantics<parallel>], iteration_bounds = array<i64: 1>, scalar_prefetch = 0 : i64, scratch_operands = 0 : i64, tpu.core_type = #tpu.core_type<tc>, window_params = [{transform_indices = @transform_0, window_bounds = array<i64: 8, 128>}, {pipeline_mode = #tpu.pipeline_mode<synchronous>, transform_indices = @transform_1, window_bounds = array<i64: 128, 1024>}, {pipeline_mode = #tpu.pipeline_mode<synchronous>, transform_indices = @transform_2, window_bounds = array<i64: 1, 1024>}, {pipeline_mode = #tpu.pipeline_mode<synchronous>, transform_indices = @transform_3, window_bounds = array<i64: 1, 1024>}, {pipeline_mode = #tpu.pipeline_mode<synchronous>, transform_indices = @transform_4, window_bounds = array<i64: 1, 1024>}, {pipeline_mode = #tpu.pipeline_mode<synchronous>, transform_indices = @transform_5, window_bounds = array<i64: 1024, 512>}, {pipeline_mode = #tpu.pipeline_mode<synchronous>, transform_indices = @transform_6, window_bounds = array<i64: 1, 512>}, {pipeline_mode = #tpu.pipeline_mode<synchronous>, transform_indices = @transform_7, window_bounds = array<i64: 1, 512>}, {pipeline_mode = #tpu.pipeline_mode<synchronous>, transform_indices = @transform_8, window_bounds = array<i64: 1, 512>}, {pipeline_mode = #tpu.pipeline_mode<synchronous>, transform_indices = @transform_9, window_bounds = array<i64: 512, 512>}, {pipeline_mode = #tpu.pipeline_mode<synchronous>, transform_indices = @transform_10, window_bounds = array<i64: 1, 512>}, {pipeline_mode = #tpu.pipeline_mode<synchronous>, transform_indices = @transform_11, window_bounds = array<i64: 1, 256>}, {pipeline_mode = #tpu.pipeline_mode<synchronous>, transform_indices = @transform_12, window_bounds = array<i64: 1, 256>}, {pipeline_mode = #tpu.pipeline_mode<synchronous>, transform_indices = @transform_13, window_bounds = array<i64: 1, 256>}, {pipeline_mode = #tpu.pipeline_mode<synchronous>, transform_indices = @transform_14, window_bounds = array<i64: 1, 256>}, {pipeline_mode = #tpu.pipeline_mode<synchronous>, transform_indices = @transform_15, window_bounds = array<i64: 512, 128>}, {pipeline_mode = #tpu.pipeline_mode<synchronous>, transform_indices = @transform_16, window_bounds = array<i64: 1, 128>}, {transform_indices = @transform_17, window_bounds = array<i64: 8, 128>}]} {
    %c0 = arith.constant 0 : index
    %c0_0 = arith.constant 0 : index
    %0 = vector.load %arg1[%c0, %c0_0] : memref<8x128xbf16, #tpu.memory_space<vmem>>, vector<8x128xbf16>
    %c0_1 = arith.constant 0 : index
    %c0_2 = arith.constant 0 : index
    %1 = vector.load %arg2[%c0_1, %c0_2] : memref<128x1024xbf16, #tpu.memory_space<vmem>>, vector<128x1024xbf16>
    %cst = arith.constant dense<0.000000e+00> : vector<8x1024xf32>
    %2 = tpu.matmul %0, %1, %cst {dimension_numbers = #tpu.dot_dimension_numbers<[1], [0], [0], [1], [0, 0, 1, 1], [], []>} : vector<8x128xbf16>, vector<128x1024xbf16>, vector<8x1024xf32> -> vector<8x1024xf32>
    %c0_3 = arith.constant 0 : index
    %c0_4 = arith.constant 0 : index
    %3 = vector.load %arg3[%c0_3, %c0_4] : memref<1x1024xf32, #tpu.memory_space<vmem>>, vector<1x1024xf32>
    %4 = vector.broadcast %3 : vector<1x1024xf32> to vector<8x1024xf32>
    %5 = arith.addf %2, %4 : vector<8x1024xf32>
    %c0_5 = arith.constant 0 : index
    %c0_6 = arith.constant 0 : index
    %6 = vector.load %arg4[%c0_5, %c0_6] : memref<1x1024xbf16, #tpu.memory_space<vmem>>, vector<1x1024xbf16>
    %c0_7 = arith.constant 0 : index
    %c0_8 = arith.constant 0 : index
    %7 = vector.load %arg5[%c0_7, %c0_8] : memref<1x1024xbf16, #tpu.memory_space<vmem>>, vector<1x1024xbf16>
    %cst_9 = arith.constant dense<0.000000e+00> : vector<8xf32>
    %8 = vector.multi_reduction <add>, %5, %cst_9 [1] : vector<8x1024xf32> to vector<8xf32>
    %9 = vector.shape_cast %8 : vector<8xf32> to vector<8x1xf32>
    %10 = arith.mulf %5, %5 : vector<8x1024xf32>
    %cst_10 = arith.constant dense<0.000000e+00> : vector<8xf32>
    %11 = vector.multi_reduction <add>, %10, %cst_10 [1] : vector<8x1024xf32> to vector<8xf32>
    %12 = vector.shape_cast %11 : vector<8xf32> to vector<8x1xf32>
    %cst_11 = arith.constant 9.765625E-4 : f32
    %13 = vector.broadcast %cst_11 : f32 to vector<8x1xf32>
    %14 = arith.mulf %9, %13 : vector<8x1xf32>
    %cst_12 = arith.constant 9.765625E-4 : f32
    %15 = vector.broadcast %cst_12 : f32 to vector<8x1xf32>
    %16 = arith.mulf %12, %15 : vector<8x1xf32>
    %17 = arith.mulf %14, %14 : vector<8x1xf32>
    %18 = arith.subf %16, %17 : vector<8x1xf32>
    %cst_13 = arith.constant 9.99999974E-6 : f32
    %19 = vector.broadcast %cst_13 : f32 to vector<8x1xf32>
    %20 = arith.addf %18, %19 : vector<8x1xf32>
    %21 = math.rsqrt %20 : vector<8x1xf32>
    %22 = vector.broadcast %14 : vector<8x1xf32> to vector<8x1024xf32>
    %23 = arith.subf %5, %22 : vector<8x1024xf32>
    %24 = vector.broadcast %21 : vector<8x1xf32> to vector<8x1024xf32>
    %25 = arith.mulf %23, %24 : vector<8x1024xf32>
    %26 = arith.truncf %25 : vector<8x1024xf32> to vector<8x1024xbf16>
    %27 = vector.broadcast %6 : vector<1x1024xbf16> to vector<8x1024xbf16>
    %28 = arith.mulf %26, %27 : vector<8x1024xbf16>
    %29 = vector.broadcast %7 : vector<1x1024xbf16> to vector<8x1024xbf16>
    %30 = arith.addf %28, %29 : vector<8x1024xbf16>
    %cst_14 = arith.constant 0.000000e+00 : bf16
    %31 = vector.broadcast %cst_14 : bf16 to vector<8x1024xbf16>
    %32 = arith.maximumf %30, %31 : vector<8x1024xbf16>
    %c0_15 = arith.constant 0 : index
    %c0_16 = arith.constant 0 : index
    %33 = vector.load %arg6[%c0_15, %c0_16] : memref<1024x512xbf16, #tpu.memory_space<vmem>>, vector<1024x512xbf16>
    %cst_17 = arith.constant dense<0.000000e+00> : vector<8x512xf32>
    %34 = tpu.matmul %32, %33, %cst_17 {dimension_numbers = #tpu.dot_dimension_numbers<[1], [0], [0], [1], [0, 0, 1, 1], [], []>} : vector<8x1024xbf16>, vector<1024x512xbf16>, vector<8x512xf32> -> vector<8x512xf32>
    %c0_18 = arith.constant 0 : index
    %c0_19 = arith.constant 0 : index
    %35 = vector.load %arg7[%c0_18, %c0_19] : memref<1x512xf32, #tpu.memory_space<vmem>>, vector<1x512xf32>
    %36 = vector.broadcast %35 : vector<1x512xf32> to vector<8x512xf32>
    %37 = arith.addf %34, %36 : vector<8x512xf32>
    %c0_20 = arith.constant 0 : index
    %c0_21 = arith.constant 0 : index
    %38 = vector.load %arg8[%c0_20, %c0_21] : memref<1x512xbf16, #tpu.memory_space<vmem>>, vector<1x512xbf16>
    %c0_22 = arith.constant 0 : index
    %c0_23 = arith.constant 0 : index
    %39 = vector.load %arg9[%c0_22, %c0_23] : memref<1x512xbf16, #tpu.memory_space<vmem>>, vector<1x512xbf16>
    %cst_24 = arith.constant dense<0.000000e+00> : vector<8xf32>
    %40 = vector.multi_reduction <add>, %37, %cst_24 [1] : vector<8x512xf32> to vector<8xf32>
    %41 = vector.shape_cast %40 : vector<8xf32> to vector<8x1xf32>
    %42 = arith.mulf %37, %37 : vector<8x512xf32>
    %cst_25 = arith.constant dense<0.000000e+00> : vector<8xf32>
    %43 = vector.multi_reduction <add>, %42, %cst_25 [1] : vector<8x512xf32> to vector<8xf32>
    %44 = vector.shape_cast %43 : vector<8xf32> to vector<8x1xf32>
    %cst_26 = arith.constant 0.001953125 : f32
    %45 = vector.broadcast %cst_26 : f32 to vector<8x1xf32>
    %46 = arith.mulf %41, %45 : vector<8x1xf32>
    %cst_27 = arith.constant 0.001953125 : f32
    %47 = vector.broadcast %cst_27 : f32 to vector<8x1xf32>
    %48 = arith.mulf %44, %47 : vector<8x1xf32>
    %49 = arith.mulf %46, %46 : vector<8x1xf32>
    %50 = arith.subf %48, %49 : vector<8x1xf32>
    %cst_28 = arith.constant 9.99999974E-6 : f32
    %51 = vector.broadcast %cst_28 : f32 to vector<8x1xf32>
    %52 = arith.addf %50, %51 : vector<8x1xf32>
    %53 = math.rsqrt %52 : vector<8x1xf32>
    %54 = vector.broadcast %46 : vector<8x1xf32> to vector<8x512xf32>
    %55 = arith.subf %37, %54 : vector<8x512xf32>
    %56 = vector.broadcast %53 : vector<8x1xf32> to vector<8x512xf32>
    %57 = arith.mulf %55, %56 : vector<8x512xf32>
    %58 = arith.truncf %57 : vector<8x512xf32> to vector<8x512xbf16>
    %59 = vector.broadcast %38 : vector<1x512xbf16> to vector<8x512xbf16>
    %60 = arith.mulf %58, %59 : vector<8x512xbf16>
    %61 = vector.broadcast %39 : vector<1x512xbf16> to vector<8x512xbf16>
    %62 = arith.addf %60, %61 : vector<8x512xbf16>
    %cst_29 = arith.constant 0.000000e+00 : bf16
    %63 = vector.broadcast %cst_29 : bf16 to vector<8x512xbf16>
    %64 = arith.maximumf %62, %63 : vector<8x512xbf16>
    %c0_30 = arith.constant 0 : index
    %c0_31 = arith.constant 0 : index
    %65 = vector.load %arg10[%c0_30, %c0_31] : memref<512x512xbf16, #tpu.memory_space<vmem>>, vector<512x512xbf16>
    %cst_32 = arith.constant dense<0.000000e+00> : vector<8x512xf32>
    %66 = tpu.matmul %64, %65, %cst_32 {dimension_numbers = #tpu.dot_dimension_numbers<[1], [0], [0], [1], [0, 0, 1, 1], [], []>} : vector<8x512xbf16>, vector<512x512xbf16>, vector<8x512xf32> -> vector<8x512xf32>
    %c0_33 = arith.constant 0 : index
    %c0_34 = arith.constant 0 : index
    %67 = vector.load %arg11[%c0_33, %c0_34] : memref<1x512xf32, #tpu.memory_space<vmem>>, vector<1x512xf32>
    %68 = vector.broadcast %67 : vector<1x512xf32> to vector<8x512xf32>
    %69 = arith.addf %66, %68 : vector<8x512xf32>
    %70 = vector.extract_strided_slice %69 {offsets = [0, 0], sizes = [8, 256], strides = [1, 1]} : vector<8x512xf32> to vector<8x256xf32>
    %c0_35 = arith.constant 0 : index
    %c0_36 = arith.constant 0 : index
    %71 = vector.load %arg12[%c0_35, %c0_36] : memref<1x256xbf16, #tpu.memory_space<vmem>>, vector<1x256xbf16>
    %c0_37 = arith.constant 0 : index
    %c0_38 = arith.constant 0 : index
    %72 = vector.load %arg13[%c0_37, %c0_38] : memref<1x256xbf16, #tpu.memory_space<vmem>>, vector<1x256xbf16>
    %cst_39 = arith.constant dense<0.000000e+00> : vector<8xf32>
    %73 = vector.multi_reduction <add>, %70, %cst_39 [1] : vector<8x256xf32> to vector<8xf32>
    %74 = vector.shape_cast %73 : vector<8xf32> to vector<8x1xf32>
    %75 = arith.mulf %70, %70 : vector<8x256xf32>
    %cst_40 = arith.constant dense<0.000000e+00> : vector<8xf32>
    %76 = vector.multi_reduction <add>, %75, %cst_40 [1] : vector<8x256xf32> to vector<8xf32>
    %77 = vector.shape_cast %76 : vector<8xf32> to vector<8x1xf32>
    %cst_41 = arith.constant 3.906250e-03 : f32
    %78 = vector.broadcast %cst_41 : f32 to vector<8x1xf32>
    %79 = arith.mulf %74, %78 : vector<8x1xf32>
    %cst_42 = arith.constant 3.906250e-03 : f32
    %80 = vector.broadcast %cst_42 : f32 to vector<8x1xf32>
    %81 = arith.mulf %77, %80 : vector<8x1xf32>
    %82 = arith.mulf %79, %79 : vector<8x1xf32>
    %83 = arith.subf %81, %82 : vector<8x1xf32>
    %cst_43 = arith.constant 9.99999974E-6 : f32
    %84 = vector.broadcast %cst_43 : f32 to vector<8x1xf32>
    %85 = arith.addf %83, %84 : vector<8x1xf32>
    %86 = math.rsqrt %85 : vector<8x1xf32>
    %87 = vector.broadcast %79 : vector<8x1xf32> to vector<8x256xf32>
    %88 = arith.subf %70, %87 : vector<8x256xf32>
    %89 = vector.broadcast %86 : vector<8x1xf32> to vector<8x256xf32>
    %90 = arith.mulf %88, %89 : vector<8x256xf32>
    %91 = arith.truncf %90 : vector<8x256xf32> to vector<8x256xbf16>
    %92 = vector.broadcast %71 : vector<1x256xbf16> to vector<8x256xbf16>
    %93 = arith.mulf %91, %92 : vector<8x256xbf16>
    %94 = vector.broadcast %72 : vector<1x256xbf16> to vector<8x256xbf16>
    %95 = arith.addf %93, %94 : vector<8x256xbf16>
    %cst_44 = arith.constant 0.000000e+00 : bf16
    %96 = vector.broadcast %cst_44 : bf16 to vector<8x256xbf16>
    %97 = arith.maximumf %95, %96 : vector<8x256xbf16>
    %98 = vector.extract_strided_slice %69 {offsets = [0, 256], sizes = [8, 256], strides = [1, 1]} : vector<8x512xf32> to vector<8x256xf32>
    %c0_45 = arith.constant 0 : index
    %c0_46 = arith.constant 0 : index
    %99 = vector.load %arg14[%c0_45, %c0_46] : memref<1x256xbf16, #tpu.memory_space<vmem>>, vector<1x256xbf16>
    %c0_47 = arith.constant 0 : index
    %c0_48 = arith.constant 0 : index
    %100 = vector.load %arg15[%c0_47, %c0_48] : memref<1x256xbf16, #tpu.memory_space<vmem>>, vector<1x256xbf16>
    %cst_49 = arith.constant dense<0.000000e+00> : vector<8xf32>
    %101 = vector.multi_reduction <add>, %98, %cst_49 [1] : vector<8x256xf32> to vector<8xf32>
    %102 = vector.shape_cast %101 : vector<8xf32> to vector<8x1xf32>
    %103 = arith.mulf %98, %98 : vector<8x256xf32>
    %cst_50 = arith.constant dense<0.000000e+00> : vector<8xf32>
    %104 = vector.multi_reduction <add>, %103, %cst_50 [1] : vector<8x256xf32> to vector<8xf32>
    %105 = vector.shape_cast %104 : vector<8xf32> to vector<8x1xf32>
    %cst_51 = arith.constant 3.906250e-03 : f32
    %106 = vector.broadcast %cst_51 : f32 to vector<8x1xf32>
    %107 = arith.mulf %102, %106 : vector<8x1xf32>
    %cst_52 = arith.constant 3.906250e-03 : f32
    %108 = vector.broadcast %cst_52 : f32 to vector<8x1xf32>
    %109 = arith.mulf %105, %108 : vector<8x1xf32>
    %110 = arith.mulf %107, %107 : vector<8x1xf32>
    %111 = arith.subf %109, %110 : vector<8x1xf32>
    %cst_53 = arith.constant 9.99999974E-6 : f32
    %112 = vector.broadcast %cst_53 : f32 to vector<8x1xf32>
    %113 = arith.addf %111, %112 : vector<8x1xf32>
    %114 = math.rsqrt %113 : vector<8x1xf32>
    %115 = vector.broadcast %107 : vector<8x1xf32> to vector<8x256xf32>
    %116 = arith.subf %98, %115 : vector<8x256xf32>
    %117 = vector.broadcast %114 : vector<8x1xf32> to vector<8x256xf32>
    %118 = arith.mulf %116, %117 : vector<8x256xf32>
    %119 = arith.truncf %118 : vector<8x256xf32> to vector<8x256xbf16>
    %120 = vector.broadcast %99 : vector<1x256xbf16> to vector<8x256xbf16>
    %121 = arith.mulf %119, %120 : vector<8x256xbf16>
    %122 = vector.broadcast %100 : vector<1x256xbf16> to vector<8x256xbf16>
    %123 = arith.addf %121, %122 : vector<8x256xbf16>
    %cst_54 = arith.constant 0.000000e+00 : bf16
    %124 = vector.broadcast %cst_54 : bf16 to vector<8x256xbf16>
    %125 = arith.maximumf %123, %124 : vector<8x256xbf16>
    %126 = tpu.concatenate %97, %125 in 1 : vector<8x256xbf16>, vector<8x256xbf16> -> vector<8x512xbf16>
    %c0_55 = arith.constant 0 : index
    %c0_56 = arith.constant 0 : index
    %127 = vector.load %arg16[%c0_55, %c0_56] : memref<512x128xbf16, #tpu.memory_space<vmem>>, vector<512x128xbf16>
    %cst_57 = arith.constant dense<0.000000e+00> : vector<8x128xf32>
    %128 = tpu.matmul %126, %127, %cst_57 {dimension_numbers = #tpu.dot_dimension_numbers<[1], [0], [0], [1], [0, 0, 1, 1], [], []>} : vector<8x512xbf16>, vector<512x128xbf16>, vector<8x128xf32> -> vector<8x128xf32>
    %c0_58 = arith.constant 0 : index
    %c0_59 = arith.constant 0 : index
    %129 = vector.load %arg17[%c0_58, %c0_59] : memref<1x128xf32, #tpu.memory_space<vmem>>, vector<1x128xf32>
    %130 = vector.broadcast %129 : vector<1x128xf32> to vector<8x128xf32>
    %131 = arith.addf %128, %130 : vector<8x128xf32>
    %cst_60 = arith.constant dense<0.000000e+00> : vector<8xf32>
    %132 = vector.multi_reduction <add>, %131, %cst_60 [1] : vector<8x128xf32> to vector<8xf32>
    %133 = vector.shape_cast %132 : vector<8xf32> to vector<8x1xf32>
    %cst_61 = arith.constant 1.250000e-01 : f32
    %134 = vector.broadcast %cst_61 : f32 to vector<8x1xf32>
    %135 = arith.mulf %133, %134 : vector<8x1xf32>
    %136 = vector.broadcast %135 : vector<8x1xf32> to vector<8x128xf32>
    %137 = arith.subf %131, %136 : vector<8x128xf32>
    %c0_62 = arith.constant 0 : index
    %c0_63 = arith.constant 0 : index
    %138 = vector.load %arg18[%c0_62, %c0_63] : memref<8x128xf32, #tpu.memory_space<vmem>>, vector<8x128xf32>
    tpu.vector_store %arg18[%c0_62, %c0_63], %137 {strides = array<i32>} : memref<8x128xf32, #tpu.memory_space<vmem>>, vector<8x128xf32>,
    return
  }
  func.func @transform_0(%arg0: i32) -> (i32, i32) {
    %c0_i32 = arith.constant 0 : i32
    %c0_i32_0 = arith.constant 0 : i32
    return %arg0, %c0_i32 : i32, i32
  }
  func.func @transform_1(%arg0: i32) -> (i32, i32) {
    %c0_i32 = arith.constant 0 : i32
    %c0_i32_0 = arith.constant 0 : i32
    %c0_i32_1 = arith.constant 0 : i32
    return %c0_i32, %c0_i32_0 : i32, i32
  }
  func.func @transform_2(%arg0: i32) -> (i32, i32) {
    %c0_i32 = arith.constant 0 : i32
    %c0_i32_0 = arith.constant 0 : i32
    %c0_i32_1 = arith.constant 0 : i32
    return %c0_i32, %c0_i32_0 : i32, i32
  }
  func.func @transform_3(%arg0: i32) -> (i32, i32) {
    %c0_i32 = arith.constant 0 : i32
    %c0_i32_0 = arith.constant 0 : i32
    %c0_i32_1 = arith.constant 0 : i32
    return %c0_i32, %c0_i32_0 : i32, i32
  }
  func.func @transform_4(%arg0: i32) -> (i32, i32) {
    %c0_i32 = arith.constant 0 : i32
    %c0_i32_0 = arith.constant 0 : i32
    %c0_i32_1 = arith.constant 0 : i32
    return %c0_i32, %c0_i32_0 : i32, i32
  }
  func.func @transform_5(%arg0: i32) -> (i32, i32) {
    %c0_i32 = arith.constant 0 : i32
    %c0_i32_0 = arith.constant 0 : i32
    %c0_i32_1 = arith.constant 0 : i32
    return %c0_i32, %c0_i32_0 : i32, i32
  }
  func.func @transform_6(%arg0: i32) -> (i32, i32) {
    %c0_i32 = arith.constant 0 : i32
    %c0_i32_0 = arith.constant 0 : i32
    %c0_i32_1 = arith.constant 0 : i32
    return %c0_i32, %c0_i32_0 : i32, i32
  }
  func.func @transform_7(%arg0: i32) -> (i32, i32) {
    %c0_i32 = arith.constant 0 : i32
    %c0_i32_0 = arith.constant 0 : i32
    %c0_i32_1 = arith.constant 0 : i32
    return %c0_i32, %c0_i32_0 : i32, i32
  }
  func.func @transform_8(%arg0: i32) -> (i32, i32) {
    %c0_i32 = arith.constant 0 : i32
    %c0_i32_0 = arith.constant 0 : i32
    %c0_i32_1 = arith.constant 0 : i32
    return %c0_i32, %c0_i32_0 : i32, i32
  }
  func.func @transform_9(%arg0: i32) -> (i32, i32) {
    %c0_i32 = arith.constant 0 : i32
    %c0_i32_0 = arith.constant 0 : i32
    %c0_i32_1 = arith.constant 0 : i32
    return %c0_i32, %c0_i32_0 : i32, i32
  }
  func.func @transform_10(%arg0: i32) -> (i32, i32) {
    %c0_i32 = arith.constant 0 : i32
    %c0_i32_0 = arith.constant 0 : i32
    %c0_i32_1 = arith.constant 0 : i32
    return %c0_i32, %c0_i32_0 : i32, i32
  }
  func.func @transform_11(%arg0: i32) -> (i32, i32) {
    %c0_i32 = arith.constant 0 : i32
    %c0_i32_0 = arith.constant 0 : i32
    %c0_i32_1 = arith.constant 0 : i32
    return %c0_i32, %c0_i32_0 : i32, i32
  }
  func.func @transform_12(%arg0: i32) -> (i32, i32) {
    %c0_i32 = arith.constant 0 : i32
    %c0_i32_0 = arith.constant 0 : i32
    %c0_i32_1 = arith.constant 0 : i32
    return %c0_i32, %c0_i32_0 : i32, i32
  }
  func.func @transform_13(%arg0: i32) -> (i32, i32) {
    %c0_i32 = arith.constant 0 : i32
    %c0_i32_0 = arith.constant 0 : i32
    %c0_i32_1 = arith.constant 0 : i32
    return %c0_i32, %c0_i32_0 : i32, i32
  }
  func.func @transform_14(%arg0: i32) -> (i32, i32) {
    %c0_i32 = arith.constant 0 : i32
    %c0_i32_0 = arith.constant 0 : i32
    %c0_i32_1 = arith.constant 0 : i32
    return %c0_i32, %c0_i32_0 : i32, i32
  }
  func.func @transform_15(%arg0: i32) -> (i32, i32) {
    %c0_i32 = arith.constant 0 : i32
    %c0_i32_0 = arith.constant 0 : i32
    %c0_i32_1 = arith.constant 0 : i32
    return %c0_i32, %c0_i32_0 : i32, i32
  }
  func.func @transform_16(%arg0: i32) -> (i32, i32) {
    %c0_i32 = arith.constant 0 : i32
    %c0_i32_0 = arith.constant 0 : i32
    %c0_i32_1 = arith.constant 0 : i32
    return %c0_i32, %c0_i32_0 : i32, i32
  }
  func.func @transform_17(%arg0: i32) -> (i32, i32) {
    %c0_i32 = arith.constant 0 : i32
    %c0_i32_0 = arith.constant 0 : i32
    return %arg0, %c0_i32 : i32, i32
  }
}

</mosaic_0001>

<llo_original>
// kernel: tpu_custom_call.1
$region0: #{tpu_custom_call.1}
  #allocation0 [shape = 'u32[]', space=smem, size = 0x4, offset = 0x4, fixed_abs, tag = 'smem constant byte address 0x4 - core index']
  #allocation1 [shape = 'u32[144,128]{1,0:T(1,128)}', space=vmem, size = 0x12000, scoped, tag = 'internal scratch']
  %s0 = inlined_call_operand.hbm [shape: bf16[8,128], index: 0, kind: input, shape index: {}]
  %s1 = inlined_call_operand.hbm [shape: bf16[128,1024], index: 1, kind: input, shape index: {}]
  %s2 = inlined_call_operand.hbm [shape: f32[1,1024], index: 2, kind: input, shape index: {}]
  %s3 = inlined_call_operand.hbm [shape: bf16[1,1024], index: 3, kind: input, shape index: {}]
  %s4 = inlined_call_operand.hbm [shape: bf16[1,1024], index: 4, kind: input, shape index: {}]
  %s5 = inlined_call_operand.hbm [shape: bf16[1024,512], index: 5, kind: input, shape index: {}]
  %s6 = inlined_call_operand.vmem [shape: f32[1,512], index: 6, kind: input, shape index: {}]
  %s7 = inlined_call_operand.vmem [shape: bf16[1,512], index: 7, kind: input, shape index: {}]
  %s8 = inlined_call_operand.vmem [shape: bf16[1,512], index: 8, kind: input, shape index: {}]
  %s9 = inlined_call_operand.hbm [shape: bf16[512,512], index: 9, kind: input, shape index: {}]
  %s10 = inlined_call_operand.vmem [shape: f32[1,512], index: 10, kind: input, shape index: {}]
  %s11 = inlined_call_operand.vmem [shape: bf16[1,256], index: 11, kind: input, shape index: {}]
  %s12 = inlined_call_operand.vmem [shape: bf16[1,256], index: 12, kind: input, shape index: {}]
  %s13 = inlined_call_operand.vmem [shape: bf16[1,256], index: 13, kind: input, shape index: {}]
  %s14 = inlined_call_operand.vmem [shape: bf16[1,256], index: 14, kind: input, shape index: {}]
  %s15 = inlined_call_operand.hbm [shape: bf16[512,128], index: 15, kind: input, shape index: {}]
  %s16 = inlined_call_operand.vmem [shape: f32[1,128], index: 16, kind: input, shape index: {}]
  %s17 = inlined_call_operand.hbm [shape: f32[8,128], index: 17, kind: output, shape index: {}]
  %s18 = sld [smem:[#allocation0]]
  $region110: #{tpu_custom_call.1} parent=0
    _
  %s20 = ssub.s32 1, %s18
  %s21 = scalar_select 0, %s20, %s18
  $region1: #{tpu_custom_call.1} parent=0
    #allocation2 [shape = 'u8[2048]{0}', space=vmem, size = 0x800, scoped, tag = 'input window, operand 0, single buffered']
    #allocation3 [shape = 's32[1]{0}', space=sflag, size = 0x4, scoped, tag = 'scoped memory for tpu_custom_call.1']
    #allocation4 [shape = 's32[1]{0}', space=sflag, size = 0x4, scoped, tag = 'scoped memory for tpu_custom_call.1']
    #allocation5 [shape = 'u8[262144]{0}', space=vmem, size = 0x40000, scoped, tag = 'input window, operand 1, single buffered']
    #allocation6 [shape = 's32[1]{0}', space=sflag, size = 0x4, scoped, tag = 'scoped memory for tpu_custom_call.1']
    #allocation7 [shape = 'u8[4096]{0}', space=vmem, size = 0x1000, scoped, tag = 'input window, operand 2, single buffered']
    #allocation8 [shape = 'u8[4096]{0}', space=vmem, size = 0x1000, scoped, tag = 'input window, operand 3, single buffered']
    #allocation9 [shape = 's32[1]{0}', space=sflag, size = 0x4, scoped, tag = 'scoped memory for tpu_custom_call.1']
    #allocation10 [shape = 'u8[4096]{0}', space=vmem, size = 0x1000, scoped, tag = 'input window, operand 4, single buffered']
    #allocation11 [shape = 'u8[1048576]{0}', space=vmem, size = 0x100000, scoped, tag = 'input window, operand 5, single buffered']
    #allocation12 [shape = 's32[1]{0}', space=sflag, size = 0x4, scoped, tag = 'scoped memory for tpu_custom_call.1']
    #allocation13 [shape = 'u8[524288]{0}', space=vmem, size = 0x80000, scoped, tag = 'input window, operand 9, single buffered']
    #allocation14 [shape = 'u8[131072]{0}', space=vmem, size = 0x20000, scoped, tag = 'input window, operand 15, single buffered']
    #allocation15 [shape = 's32[1]{0}', space=sflag, size = 0x4, scoped, tag = 'scoped memory for tpu_custom_call.1']
    #allocation16 [shape = 'u8[4096]{0}', space=vmem, size = 0x1000, scoped, tag = 'output window, operand 0, single buffered']
    %22 = vsyncpa [#allocation3], 0
    %23 = vsyncpa [#allocation6], 0
    %24 = vsyncpa [#allocation9], 0
    %25 = vsyncpa [#allocation12], 0
    %26 = vsyncpa [#allocation15], 0
    %27 = vsyncpa [#allocation4], 0
    // Predicated region
    $region2: #{tpu_custom_call.1} parent=1 // pred_check
      _
    $region3: #{tpu_custom_call.1} parent=1 // pred_check_branch
      %29 = sbr.rel (0) target = $region5
    $region4: #{tpu_custom_call.1} parent=1 // pred_region
      %s31 = ssub.s32 64, 64
      %32 = vsyncadd [#allocation3], %s31
      %s34 = sshll.u32 [#allocation2], 4
      %s35 = int_to_ptr.vmem [resolvable:$true] %s34
      %37 = dma.hbm_to_vmem [thread:$0]  %s0, 64, %s35, [#allocation3]
    $region5: #{tpu_custom_call.1} parent=1 // pred_fallthru
      _
    // Predicated region
    $region6: #{tpu_custom_call.1} parent=1 // pred_check
      _
    $region7: #{tpu_custom_call.1} parent=1 // pred_check_branch
      %39 = sbr.rel (0) target = $region9
    $region8: #{tpu_custom_call.1} parent=1 // pred_region
      %s41 = ssub.s32 8192, 8192
      %42 = vsyncadd [#allocation6], %s41
      %s43 = sshll.u32 [#allocation5], 4
      %s44 = int_to_ptr.vmem [resolvable:$true] %s43
      %49 = dma.hbm_to_vmem [thread:$0]  %s1, 8192, %s44, [#allocation6], 512, 512, 32
    $region9: #{tpu_custom_call.1} parent=1 // pred_fallthru
      _
    // Predicated region
    $region10: #{tpu_custom_call.1} parent=1 // pred_check
      _
    $region11: #{tpu_custom_call.1} parent=1 // pred_check_branch
      %51 = sbr.rel (0) target = $region13
    $region12: #{tpu_custom_call.1} parent=1 // pred_region
      %s53 = ssub.s32 128, 128
      %54 = vsyncadd [#allocation6], %s53
      %s56 = sshll.u32 [#allocation7], 4
      %s57 = int_to_ptr.vmem [resolvable:$true] %s56
      %59 = dma.hbm_to_vmem [thread:$0]  %s2, 128, %s57, [#allocation6]
    $region13: #{tpu_custom_call.1} parent=1 // pred_fallthru
      _
    // Predicated region
    $region14: #{tpu_custom_call.1} parent=1 // pred_check
      _
    $region15: #{tpu_custom_call.1} parent=1 // pred_check_branch
      %61 = sbr.rel (0) target = $region17
    $region16: #{tpu_custom_call.1} parent=1 // pred_region
      %s63 = ssub.s32 128, 128
      %64 = vsyncadd [#allocation9], %s63
      %s66 = sshll.u32 [#allocation8], 4
      %s67 = int_to_ptr.vmem [resolvable:$true] %s66
      %69 = dma.hbm_to_vmem [thread:$0]  %s3, 128, %s67, [#allocation9]
    $region17: #{tpu_custom_call.1} parent=1 // pred_fallthru
      _
    // Predicated region
    $region18: #{tpu_custom_call.1} parent=1 // pred_check
      _
    $region19: #{tpu_custom_call.1} parent=1 // pred_check_branch
      %71 = sbr.rel (0) target = $region21
    $region20: #{tpu_custom_call.1} parent=1 // pred_region
      %s73 = ssub.s32 128, 128
      %74 = vsyncadd [#allocation9], %s73
      %s76 = sshll.u32 [#allocation10], 4
      %s77 = int_to_ptr.vmem [resolvable:$true] %s76
      %79 = dma.hbm_to_vmem [thread:$0]  %s4, 128, %s77, [#allocation9]
    $region21: #{tpu_custom_call.1} parent=1 // pred_fallthru
      _
    // Predicated region
    $region22: #{tpu_custom_call.1} parent=1 // pred_check
      _
    $region23: #{tpu_custom_call.1} parent=1 // pred_check_branch
      %81 = sbr.rel (0) target = $region25
    $region24: #{tpu_custom_call.1} parent=1 // pred_region
      %s83 = ssub.s32 32768, 32768
      %84 = vsyncadd [#allocation12], %s83
      %s85 = sshll.u32 [#allocation11], 4
      %s86 = int_to_ptr.vmem [resolvable:$true] %s85
      %91 = dma.hbm_to_vmem [thread:$0]  %s5, 32768, %s86, [#allocation12], 256, 256, 16
    $region25: #{tpu_custom_call.1} parent=1 // pred_fallthru
      _
    // Predicated region
    $region26: #{tpu_custom_call.1} parent=1 // pred_check
      _
    $region27: #{tpu_custom_call.1} parent=1 // pred_check_branch
      %93 = sbr.rel (0) target = $region29
    $region28: #{tpu_custom_call.1} parent=1 // pred_region
      _
    $region29: #{tpu_custom_call.1} parent=1 // pred_fallthru
      _
    // Predicated region
    $region30: #{tpu_custom_call.1} parent=1 // pred_check
      _
    $region31: #{tpu_custom_call.1} parent=1 // pred_check_branch
      %95 = sbr.rel (0) target = $region33
    $region32: #{tpu_custom_call.1} parent=1 // pred_region
      _
    $region33: #{tpu_custom_call.1} parent=1 // pred_fallthru
      _
    // Predicated region
    $region34: #{tpu_custom_call.1} parent=1 // pred_check
      _
    $region35: #{tpu_custom_call.1} parent=1 // pred_check_branch
      %97 = sbr.rel (0) target = $region37
    $region36: #{tpu_custom_call.1} parent=1 // pred_region
      _
    $region37: #{tpu_custom_call.1} parent=1 // pred_fallthru
      _
    // Predicated region
    $region38: #{tpu_custom_call.1} parent=1 // pred_check
      _
    $region39: #{tpu_custom_call.1} parent=1 // pred_check_branch
      %99 = sbr.rel (0) target = $region41
    $region40: #{tpu_custom_call.1} parent=1 // pred_region
      %s101 = ssub.s32 16384, 16384
      %102 = vsyncadd [#allocation12], %s101
      %s103 = sshll.u32 [#allocation13], 4
      %s104 = int_to_ptr.vmem [resolvable:$true] %s103
      %109 = dma.hbm_to_vmem [thread:$0]  %s9, 16384, %s104, [#allocation12], 256, 256, 16
    $region41: #{tpu_custom_call.1} parent=1 // pred_fallthru
      _
    // Predicated region
    $region42: #{tpu_custom_call.1} parent=1 // pred_check
      _
    $region43: #{tpu_custom_call.1} parent=1 // pred_check_branch
      %111 = sbr.rel (0) target = $region45
    $region44: #{tpu_custom_call.1} parent=1 // pred_region
      _
    $region45: #{tpu_custom_call.1} parent=1 // pred_fallthru
      _
    // Predicated region
    $region46: #{tpu_custom_call.1} parent=1 // pred_check
      _
    $region47: #{tpu_custom_call.1} parent=1 // pred_check_branch
      %113 = sbr.rel (0) target = $region49
    $region48: #{tpu_custom_call.1} parent=1 // pred_region
      _
    $region49: #{tpu_custom_call.1} parent=1 // pred_fallthru
      _
    // Predicated region
    $region50: #{tpu_custom_call.1} parent=1 // pred_check
      _
    $region51: #{tpu_custom_call.1} parent=1 // pred_check_branch
      %115 = sbr.rel (0) target = $region53
    $region52: #{tpu_custom_call.1} parent=1 // pred_region
      _
    $region53: #{tpu_custom_call.1} parent=1 // pred_fallthru
      _
    // Predicated region
    $region54: #{tpu_custom_call.1} parent=1 // pred_check
      _
    $region55: #{tpu_custom_call.1} parent=1 // pred_check_branch
      %117 = sbr.rel (0) target = $region57
    $region56: #{tpu_custom_call.1} parent=1 // pred_region
      _
    $region57: #{tpu_custom_call.1} parent=1 // pred_fallthru
      _
    // Predicated region
    $region58: #{tpu_custom_call.1} parent=1 // pred_check
      _
    $region59: #{tpu_custom_call.1} parent=1 // pred_check_branch
      %119 = sbr.rel (0) target = $region61
    $region60: #{tpu_custom_call.1} parent=1 // pred_region
      _
    $region61: #{tpu_custom_call.1} parent=1 // pred_fallthru
      _
    // Predicated region
    $region62: #{tpu_custom_call.1} parent=1 // pred_check
      _
    $region63: #{tpu_custom_call.1} parent=1 // pred_check_branch
      %121 = sbr.rel (0) target = $region65
    $region64: #{tpu_custom_call.1} parent=1 // pred_region
      %s123 = ssub.s32 4096, 4096
      %124 = vsyncadd [#allocation15], %s123
      %s125 = sshll.u32 [#allocation14], 4
      %s126 = int_to_ptr.vmem [resolvable:$true] %s125
      %131 = dma.hbm_to_vmem [thread:$0]  %s15, 4096, %s126, [#allocation15], 64, 64, 4
    $region65: #{tpu_custom_call.1} parent=1 // pred_fallthru
      _
    // Predicated region
    $region66: #{tpu_custom_call.1} parent=1 // pred_check
      _
    $region67: #{tpu_custom_call.1} parent=1 // pred_check_branch
      %133 = sbr.rel (0) target = $region69
    $region68: #{tpu_custom_call.1} parent=1 // pred_region
      _
    $region69: #{tpu_custom_call.1} parent=1 // pred_fallthru
      _
    // Predicated region
    $region70: #{tpu_custom_call.1} parent=1 // pred_check
      _
    $region71: #{tpu_custom_call.1} parent=1 // pred_check_branch
      %135 = sbr.rel (0) target = $region73
    $region72: #{tpu_custom_call.1} parent=1 // pred_region
      %136 = dma.done [#allocation3], 64
    $region73: #{tpu_custom_call.1} parent=1 // pred_fallthru
      _
    // Predicated region
    $region74: #{tpu_custom_call.1} parent=1 // pred_check
      _
    $region75: #{tpu_custom_call.1} parent=1 // pred_check_branch
      %138 = sbr.rel (0) target = $region77
    $region76: #{tpu_custom_call.1} parent=1 // pred_region
      %139 = dma.done [#allocation6], 8192
    $region77: #{tpu_custom_call.1} parent=1 // pred_fallthru
      _
    // Predicated region
    $region78: #{tpu_custom_call.1} parent=1 // pred_check
      _
    $region79: #{tpu_custom_call.1} parent=1 // pred_check_branch
      %141 = sbr.rel (0) target = $region81
    $region80: #{tpu_custom_call.1} parent=1 // pred_region
      %142 = dma.done [#allocation6], 128
    $region81: #{tpu_custom_call.1} parent=1 // pred_fallthru
      _
    // Predicated region
    $region82: #{tpu_custom_call.1} parent=1 // pred_check
      _
    $region83: #{tpu_custom_call.1} parent=1 // pred_check_branch
      %144 = sbr.rel (0) target = $region85
    $region84: #{tpu_custom_call.1} parent=1 // pred_region
      %145 = dma.done [#allocation9], 128
    $region85: #{tpu_custom_call.1} parent=1 // pred_fallthru
      _
    // Predicated region
    $region86: #{tpu_custom_call.1} parent=1 // pred_check
      _
    $region87: #{tpu_custom_call.1} parent=1 // pred_check_branch
      %147 = sbr.rel (0) target = $region89
    $region88: #{tpu_custom_call.1} parent=1 // pred_region
      %148 = dma.done [#allocation9], 128
    $region89: #{tpu_custom_call.1} parent=1 // pred_fallthru
      _
    // Predicated region
    $region90: #{tpu_custom_call.1} parent=1 // pred_check
      _
    $region91: #{tpu_custom_call.1} parent=1 // pred_check_branch
      %150 = sbr.rel (0) target = $region93
    $region92: #{tpu_custom_call.1} parent=1 // pred_region
      %151 = dma.done [#allocation12], 32768
    $region93: #{tpu_custom_call.1} parent=1 // pred_fallthru
      _
    // Predicated region
    $region94: #{tpu_custom_call.1} parent=1 // pred_check
      _
    $region95: #{tpu_custom_call.1} parent=1 // pred_check_branch
      %153 = sbr.rel (0) target = $region97
    $region96: #{tpu_custom_call.1} parent=1 // pred_region
      %154 = dma.done [#allocation12], 16384
    $region97: #{tpu_custom_call.1} parent=1 // pred_fallthru
      _
    // Predicated region
    $region98: #{tpu_custom_call.1} parent=1 // pred_check
      _
    $region99: #{tpu_custom_call.1} parent=1 // pred_check_branch
      %156 = sbr.rel (0) target = $region101
    $region100: #{tpu_custom_call.1} parent=1 // pred_region
      %157 = dma.done [#allocation15], 4096
    $region101: #{tpu_custom_call.1} parent=1 // pred_fallthru
      _
    %v159 = vld [vmem:[#allocation2] sm:$0xf]
    %v160 = vld [vmem:[#allocation5] sm:$0xff]
    %v161 = vld [vmem:[#allocation5 + $0x8] sm:$0xff]
    %v162 = vld [vmem:[#allocation5 + $0x10] sm:$0xff]
    %v163 = vld [vmem:[#allocation5 + $0x18] sm:$0xff]
    %v164 = vld [vmem:[#allocation5 + $0x20] sm:$0xff]
    %v165 = vld [vmem:[#allocation5 + $0x28] sm:$0xff]
    %v166 = vld [vmem:[#allocation5 + $0x30] sm:$0xff]
    %v167 = vld [vmem:[#allocation5 + $0x38] sm:$0xff]
    %v168 = vld [vmem:[#allocation5 + $0x40] sm:$0xff]
    %v169 = vld [vmem:[#allocation5 + $0x48] sm:$0xff]
    %v170 = vld [vmem:[#allocation5 + $0x50] sm:$0xff]
    %v171 = vld [vmem:[#allocation5 + $0x58] sm:$0xff]
    %v172 = vld [vmem:[#allocation5 + $0x60] sm:$0xff]
    %v173 = vld [vmem:[#allocation5 + $0x68] sm:$0xff]
    %v174 = vld [vmem:[#allocation5 + $0x70] sm:$0xff]
    %v175 = vld [vmem:[#allocation5 + $0x78] sm:$0xff]
    %v176 = vld [vmem:[#allocation5 + $0x80] sm:$0xff]
    %v177 = vld [vmem:[#allocation5 + $0x88] sm:$0xff]
    %v178 = vld [vmem:[#allocation5 + $0x90] sm:$0xff]
    %v179 = vld [vmem:[#allocation5 + $0x98] sm:$0xff]
    %v180 = vld [vmem:[#allocation5 + $0xa0] sm:$0xff]
    %v181 = vld [vmem:[#allocation5 + $0xa8] sm:$0xff]
    %v182 = vld [vmem:[#allocation5 + $0xb0] sm:$0xff]
    %v183 = vld [vmem:[#allocation5 + $0xb8] sm:$0xff]
    %v184 = vld [vmem:[#allocation5 + $0xc0] sm:$0xff]
    %v185 = vld [vmem:[#allocation5 + $0xc8] sm:$0xff]
    %v186 = vld [vmem:[#allocation5 + $0xd0] sm:$0xff]
    %v187 = vld [vmem:[#allocation5 + $0xd8] sm:$0xff]
    %v188 = vld [vmem:[#allocation5 + $0xe0] sm:$0xff]
    %v189 = vld [vmem:[#allocation5 + $0xe8] sm:$0xff]
    %v190 = vld [vmem:[#allocation5 + $0xf0] sm:$0xff]
    %v191 = vld [vmem:[#allocation5 + $0xf8] sm:$0xff]
    %v192 = vld [vmem:[#allocation5 + $0x100] sm:$0xff]
    %v193 = vld [vmem:[#allocation5 + $0x108] sm:$0xff]
    %v194 = vld [vmem:[#allocation5 + $0x110] sm:$0xff]
    %v195 = vld [vmem:[#allocation5 + $0x118] sm:$0xff]
    %v196 = vld [vmem:[#allocation5 + $0x120] sm:$0xff]
    %v197 = vld [vmem:[#allocation5 + $0x128] sm:$0xff]
    %v198 = vld [vmem:[#allocation5 + $0x130] sm:$0xff]
    %v199 = vld [vmem:[#allocation5 + $0x138] sm:$0xff]
    %v200 = vld [vmem:[#allocation5 + $0x140] sm:$0xff]
    %v201 = vld [vmem:[#allocation5 + $0x148] sm:$0xff]
    %v202 = vld [vmem:[#allocation5 + $0x150] sm:$0xff]
    %v203 = vld [vmem:[#allocation5 + $0x158] sm:$0xff]
    %v204 = vld [vmem:[#allocation5 + $0x160] sm:$0xff]
    %v205 = vld [vmem:[#allocation5 + $0x168] sm:$0xff]
    %v206 = vld [vmem:[#allocation5 + $0x170] sm:$0xff]
    %v207 = vld [vmem:[#allocation5 + $0x178] sm:$0xff]
    %v208 = vld [vmem:[#allocation5 + $0x180] sm:$0xff]
    %v209 = vld [vmem:[#allocation5 + $0x188] sm:$0xff]
    %v210 = vld [vmem:[#allocation5 + $0x190] sm:$0xff]
    %v211 = vld [vmem:[#allocation5 + $0x198] sm:$0xff]
    %v212 = vld [vmem:[#allocation5 + $0x1a0] sm:$0xff]
    %v213 = vld [vmem:[#allocation5 + $0x1a8] sm:$0xff]
    %v214 = vld [vmem:[#allocation5 + $0x1b0] sm:$0xff]
    %v215 = vld [vmem:[#allocation5 + $0x1b8] sm:$0xff]
    %v216 = vld [vmem:[#allocation5 + $0x1c0] sm:$0xff]
    %v217 = vld [vmem:[#allocation5 + $0x1c8] sm:$0xff]
    %v218 = vld [vmem:[#allocation5 + $0x1d0] sm:$0xff]
    %v219 = vld [vmem:[#allocation5 + $0x1d8] sm:$0xff]
    %v220 = vld [vmem:[#allocation5 + $0x1e0] sm:$0xff]
    %v221 = vld [vmem:[#allocation5 + $0x1e8] sm:$0xff]
    %v222 = vld [vmem:[#allocation5 + $0x1f0] sm:$0xff]
    %v223 = vld [vmem:[#allocation5 + $0x1f8] sm:$0xff]
    %v224 = vld [vmem:[#allocation7] sm:$0xff]
    %v226 = vlaneseq
    %v227 = vshrl.u32 %v226, 7
    %v228 = vsub.s32 0, %v227
    %v229 = vrot.slane %v224, %v228
    %v230 = vlaneseq
    %v231 = vshrl.u32 %v230, 7
    %v232 = vsub.s32 1, %v231
    %v233 = vrot.slane %v224, %v232
    %v234 = vlaneseq
    %v235 = vshrl.u32 %v234, 7
    %v236 = vsub.s32 2, %v235
    %v237 = vrot.slane %v224, %v236
    %v238 = vlaneseq
    %v239 = vshrl.u32 %v238, 7
    %v240 = vsub.s32 3, %v239
    %v241 = vrot.slane %v224, %v240
    %v242 = vlaneseq
    %v243 = vshrl.u32 %v242, 7
    %v244 = vsub.s32 4, %v243
    %v245 = vrot.slane %v224, %v244
    %v246 = vlaneseq
    %v247 = vshrl.u32 %v246, 7
    %v248 = vsub.s32 5, %v247
    %v249 = vrot.slane %v224, %v248
    %v250 = vlaneseq
    %v251 = vshrl.u32 %v250, 7
    %v252 = vsub.s32 6, %v251
    %v253 = vrot.slane %v224, %v252
    %v254 = vlaneseq
    %v255 = vshrl.u32 %v254, 7
    %v256 = vsub.s32 7, %v255
    %v257 = vrot.slane %v224, %v256
    %v330 = vunpack.c.l.b16 %v160
    %v331 = vunpack.c.h.b16 %v160
    %v332 = vunpack.c.l.b16 %v161
    %v333 = vunpack.c.h.b16 %v161
    %v334 = vunpack.c.l.b16 %v162
    %v335 = vunpack.c.h.b16 %v162
    %v336 = vunpack.c.l.b16 %v163
    %v337 = vunpack.c.h.b16 %v163
    %v338 = vunpack.c.l.b16 %v164
    %v339 = vunpack.c.h.b16 %v164
    %v340 = vunpack.c.l.b16 %v165
    %v341 = vunpack.c.h.b16 %v165
    %v342 = vunpack.c.l.b16 %v166
    %v343 = vunpack.c.h.b16 %v166
    %v344 = vunpack.c.l.b16 %v167
    %v345 = vunpack.c.h.b16 %v167
    %v346 = vunpack.c.l.b16 %v168
    %v347 = vunpack.c.h.b16 %v168
    %v348 = vunpack.c.l.b16 %v169
    %v349 = vunpack.c.h.b16 %v169
    %v350 = vunpack.c.l.b16 %v170
    %v351 = vunpack.c.h.b16 %v170
    %v352 = vunpack.c.l.b16 %v171
    %v353 = vunpack.c.h.b16 %v171
    %v354 = vunpack.c.l.b16 %v172
    %v355 = vunpack.c.h.b16 %v172
    %v356 = vunpack.c.l.b16 %v173
    %v357 = vunpack.c.h.b16 %v173
    %v358 = vunpack.c.l.b16 %v174
    %v359 = vunpack.c.h.b16 %v174
    %v360 = vunpack.c.l.b16 %v175
    %v361 = vunpack.c.h.b16 %v175
    %v362 = vunpack.c.l.b16 %v176
    %v363 = vunpack.c.h.b16 %v176
    %v364 = vunpack.c.l.b16 %v177
    %v365 = vunpack.c.h.b16 %v177
    %v366 = vunpack.c.l.b16 %v178
    %v367 = vunpack.c.h.b16 %v178
    %v368 = vunpack.c.l.b16 %v179
    %v369 = vunpack.c.h.b16 %v179
    %v370 = vunpack.c.l.b16 %v180
    %v371 = vunpack.c.h.b16 %v180
    %v372 = vunpack.c.l.b16 %v181
    %v373 = vunpack.c.h.b16 %v181
    %v374 = vunpack.c.l.b16 %v182
    %v375 = vunpack.c.h.b16 %v182
    %v376 = vunpack.c.l.b16 %v183
    %v377 = vunpack.c.h.b16 %v183
    %v378 = vunpack.c.l.b16 %v184
    %v379 = vunpack.c.h.b16 %v184
    %v380 = vunpack.c.l.b16 %v185
    %v381 = vunpack.c.h.b16 %v185
    %v382 = vunpack.c.l.b16 %v186
    %v383 = vunpack.c.h.b16 %v186
    %v384 = vunpack.c.l.b16 %v187
    %v385 = vunpack.c.h.b16 %v187
    %v386 = vunpack.c.l.b16 %v188
    %v387 = vunpack.c.h.b16 %v188
    %v388 = vunpack.c.l.b16 %v189
    %v389 = vunpack.c.h.b16 %v189
    %v390 = vunpack.c.l.b16 %v190
    %v391 = vunpack.c.h.b16 %v190
    %v392 = vunpack.c.l.b16 %v191
    %v393 = vunpack.c.h.b16 %v191
    %v394 = vunpack.c.l.b16 %v192
    %v395 = vunpack.c.h.b16 %v192
    %v396 = vunpack.c.l.b16 %v193
    %v397 = vunpack.c.h.b16 %v193
    %v398 = vunpack.c.l.b16 %v194
    %v399 = vunpack.c.h.b16 %v194
    %v400 = vunpack.c.l.b16 %v195
    %v401 = vunpack.c.h.b16 %v195
    %v402 = vunpack.c.l.b16 %v196
    %v403 = vunpack.c.h.b16 %v196
    %v404 = vunpack.c.l.b16 %v197
    %v405 = vunpack.c.h.b16 %v197
    %v406 = vunpack.c.l.b16 %v198
    %v407 = vunpack.c.h.b16 %v198
    %v408 = vunpack.c.l.b16 %v199
    %v409 = vunpack.c.h.b16 %v199
    %v410 = vunpack.c.l.b16 %v200
    %v411 = vunpack.c.h.b16 %v200
    %v412 = vunpack.c.l.b16 %v201
    %v413 = vunpack.c.h.b16 %v201
    %v414 = vunpack.c.l.b16 %v202
    %v415 = vunpack.c.h.b16 %v202
    %v416 = vunpack.c.l.b16 %v203
    %v417 = vunpack.c.h.b16 %v203
    %v418 = vunpack.c.l.b16 %v204
    %v419 = vunpack.c.h.b16 %v204
    %v420 = vunpack.c.l.b16 %v205
    %v421 = vunpack.c.h.b16 %v205
    %v422 = vunpack.c.l.b16 %v206
    %v423 = vunpack.c.h.b16 %v206
    %v424 = vunpack.c.l.b16 %v207
    %v425 = vunpack.c.h.b16 %v207
    %v426 = vunpack.c.l.b16 %v208
    %v427 = vunpack.c.h.b16 %v208
    %v428 = vunpack.c.l.b16 %v209
    %v429 = vunpack.c.h.b16 %v209
    %v430 = vunpack.c.l.b16 %v210
    %v431 = vunpack.c.h.b16 %v210
    %v432 = vunpack.c.l.b16 %v211
    %v433 = vunpack.c.h.b16 %v211
    %v434 = vunpack.c.l.b16 %v212
    %v435 = vunpack.c.h.b16 %v212
    %v436 = vunpack.c.l.b16 %v213
    %v437 = vunpack.c.h.b16 %v213
    %v438 = vunpack.c.l.b16 %v214
    %v439 = vunpack.c.h.b16 %v214
    %v440 = vunpack.c.l.b16 %v215
    %v441 = vunpack.c.h.b16 %v215
    %v442 = vunpack.c.l.b16 %v216
    %v443 = vunpack.c.h.b16 %v216
    %v444 = vunpack.c.l.b16 %v217
    %v445 = vunpack.c.h.b16 %v217
    %v446 = vunpack.c.l.b16 %v218
    %v447 = vunpack.c.h.b16 %v218
    %v448 = vunpack.c.l.b16 %v219
    %v449 = vunpack.c.h.b16 %v219
    %v450 = vunpack.c.l.b16 %v220
    %v451 = vunpack.c.h.b16 %v220
    %v452 = vunpack.c.l.b16 %v221
    %v453 = vunpack.c.h.b16 %v221
    %v454 = vunpack.c.l.b16 %v222
    %v455 = vunpack.c.h.b16 %v222
    %v456 = vunpack.c.l.b16 %v223
    %v457 = vunpack.c.h.b16 %v223
    %v458 = vpack.c.b16 %v338, %v330
    %v459 = vpack.c.b16 %v339, %v331
    %v460 = vpack.c.b16 %v340, %v332
    %v461 = vpack.c.b16 %v341, %v333
    %v462 = vpack.c.b16 %v342, %v334
    %v463 = vpack.c.b16 %v343, %v335
    %v464 = vpack.c.b16 %v344, %v336
    %v465 = vpack.c.b16 %v345, %v337
    %v466 = vpack.c.b16 %v354, %v346
    %v467 = vpack.c.b16 %v355, %v347
    %v468 = vpack.c.b16 %v356, %v348
    %v469 = vpack.c.b16 %v357, %v349
    %v470 = vpack.c.b16 %v358, %v350
    %v471 = vpack.c.b16 %v359, %v351
    %v472 = vpack.c.b16 %v360, %v352
    %v473 = vpack.c.b16 %v361, %v353
    %v474 = vpack.c.b16 %v370, %v362
    %v475 = vpack.c.b16 %v371, %v363
    %v476 = vpack.c.b16 %v372, %v364
    %v477 = vpack.c.b16 %v373, %v365
    %v478 = vpack.c.b16 %v374, %v366
    %v479 = vpack.c.b16 %v375, %v367
    %v480 = vpack.c.b16 %v376, %v368
    %v481 = vpack.c.b16 %v377, %v369
    %v482 = vpack.c.b16 %v386, %v378
    %v483 = vpack.c.b16 %v387, %v379
    %v484 = vpack.c.b16 %v388, %v380
    %v485 = vpack.c.b16 %v389, %v381
    %v486 = vpack.c.b16 %v390, %v382
    %v487 = vpack.c.b16 %v391, %v383
    %v488 = vpack.c.b16 %v392, %v384
    %v489 = vpack.c.b16 %v393, %v385
    %v490 = vpack.c.b16 %v402, %v394
    %v491 = vpack.c.b16 %v403, %v395
    %v492 = vpack.c.b16 %v404, %v396
    %v493 = vpack.c.b16 %v405, %v397
    %v494 = vpack.c.b16 %v406, %v398
    %v495 = vpack.c.b16 %v407, %v399
    %v496 = vpack.c.b16 %v408, %v400
    %v497 = vpack.c.b16 %v409, %v401
    %v498 = vpack.c.b16 %v418, %v410
    %v499 = vpack.c.b16 %v419, %v411
    %v500 = vpack.c.b16 %v420, %v412
    %v501 = vpack.c.b16 %v421, %v413
    %v502 = vpack.c.b16 %v422, %v414
    %v503 = vpack.c.b16 %v423, %v415
    %v504 = vpack.c.b16 %v424, %v416
    %v505 = vpack.c.b16 %v425, %v417
    %v506 = vpack.c.b16 %v434, %v426
    %v507 = vpack.c.b16 %v435, %v427
    %v508 = vpack.c.b16 %v436, %v428
    %v509 = vpack.c.b16 %v437, %v429
    %v510 = vpack.c.b16 %v438, %v430
    %v511 = vpack.c.b16 %v439, %v431
    %v512 = vpack.c.b16 %v440, %v432
    %v513 = vpack.c.b16 %v441, %v433
    %v514 = vpack.c.b16 %v450, %v442
    %v515 = vpack.c.b16 %v451, %v443
    %v516 = vpack.c.b16 %v452, %v444
    %v517 = vpack.c.b16 %v453, %v445
    %v518 = vpack.c.b16 %v454, %v446
    %v519 = vpack.c.b16 %v455, %v447
    %v520 = vpack.c.b16 %v456, %v448
    %v521 = vpack.c.b16 %v457, %v449
    %586 = vmatprep.subr.bf16.mxu0 %v515
    %587 = vmatpush1.bf16.msra.mxu0 %v514
    %588 = vmatprep.subr.bf16.mxu0 %v507
    %589 = vmatpush1.bf16.msra.mxu0 %v506
    %590 = vmatprep.subr.bf16.mxu0 %v499
    %591 = vmatpush1.bf16.msra.mxu0 %v498
    %592 = vmatprep.subr.bf16.mxu0 %v491
    %593 = vmatpush1.bf16.msra.mxu0 %v490
    %594 = vmatprep.subr.bf16.mxu0 %v483
    %595 = vmatpush1.bf16.msra.mxu0 %v482
    %596 = vmatprep.subr.bf16.mxu0 %v475
    %597 = vmatpush1.bf16.msra.mxu0 %v474
    %598 = vmatprep.subr.bf16.mxu0 %v467
    %599 = vmatpush1.bf16.msra.mxu0 %v466
    %600 = vmatprep.subr.bf16.mxu0 %v459
    %601 = vmatpush1.bf16.msra.mxu0 %v458
    %602 = vmatprep.subr.bf16.mxu0 0
    %603 = vmatpush2.bf16.msra.mxu0 0
    %604 = vmatprep.subr.bf16.mxu0 0
    %605 = vmatpush2.bf16.msra.mxu0 0
    %606 = vmatprep.subr.bf16.mxu0 0
    %607 = vmatpush2.bf16.msra.mxu0 0
    %608 = vmatprep.subr.bf16.mxu0 0
    %609 = vmatpush2.bf16.msra.mxu0 0
    %610 = vmatprep.subr.bf16.mxu0 0
    %611 = vmatpush2.bf16.msra.mxu0 0
    %612 = vmatprep.subr.bf16.mxu0 0
    %613 = vmatpush2.bf16.msra.mxu0 0
    %614 = vmatprep.subr.bf16.mxu0 0
    %615 = vmatpush2.bf16.msra.mxu0 0
    %616 = vmatprep.subr.bf16.mxu0 0
    %617 = vmatpush2.bf16.msra.mxu0 0
    %618 = vmatprep.mubr.bf16.mxu0 0
    %619 = vmatmul.mubr.bf16.gmra.mxu0 %v159
    %v620 = vpop.f32.mrf.mxu0
    %v621 = vadd.f32 %v229, %v620
    %v622 = vpop.f32.mrf.mxu0
    %v623 = vadd.f32 %v233, %v622
    %v624 = vpop.f32.mrf.mxu0
    %v625 = vpop.f32.mrf.mxu0
    %626 = vdwg.mxu0
    %627 = vmatprep.subr.bf16.mxu0 %v517
    %628 = vmatpush1.bf16.msra.mxu0 %v516
    %629 = vmatprep.subr.bf16.mxu0 %v509
    %630 = vmatpush1.bf16.msra.mxu0 %v508
    %631 = vmatprep.subr.bf16.mxu0 %v501
    %632 = vmatpush1.bf16.msra.mxu0 %v500
    %633 = vmatprep.subr.bf16.mxu0 %v493
    %634 = vmatpush1.bf16.msra.mxu0 %v492
    %635 = vmatprep.subr.bf16.mxu0 %v485
    %636 = vmatpush1.bf16.msra.mxu0 %v484
    %637 = vmatprep.subr.bf16.mxu0 %v477
    %638 = vmatpush1.bf16.msra.mxu0 %v476
    %639 = vmatprep.subr.bf16.mxu0 %v469
    %640 = vmatpush1.bf16.msra.mxu0 %v468
    %641 = vmatprep.subr.bf16.mxu0 %v461
    %642 = vmatpush1.bf16.msra.mxu0 %v460
    %643 = vmatprep.subr.bf16.mxu0 0
    %644 = vmatpush2.bf16.msra.mxu0 0
    %645 = vmatprep.subr.bf16.mxu0 0
    %646 = vmatpush2.bf16.msra.mxu0 0
    %647 = vmatprep.subr.bf16.mxu0 0
    %648 = vmatpush2.bf16.msra.mxu0 0
    %649 = vmatprep.subr.bf16.mxu0 0
    %650 = vmatpush2.bf16.msra.mxu0 0
    %651 = vmatprep.subr.bf16.mxu0 0
    %652 = vmatpush2.bf16.msra.mxu0 0
    %653 = vmatprep.subr.bf16.mxu0 0
    %654 = vmatpush2.bf16.msra.mxu0 0
    %655 = vmatprep.subr.bf16.mxu0 0
    %656 = vmatpush2.bf16.msra.mxu0 0
    %657 = vmatprep.subr.bf16.mxu0 0
    %658 = vmatpush2.bf16.msra.mxu0 0
    %659 = vmatprep.mubr.bf16.mxu0 0
    %660 = vmatmul.mubr.bf16.gmra.mxu0 %v159
    %v661 = vpop.f32.mrf.mxu0
    %v662 = vadd.f32 %v237, %v661
    %v663 = vpop.f32.mrf.mxu0
    %v664 = vadd.f32 %v241, %v663
    %v665 = vpop.f32.mrf.mxu0
    %v666 = vpop.f32.mrf.mxu0
    %667 = vdwg.mxu0
    %668 = vmatprep.subr.bf16.mxu0 %v519
    %669 = vmatpush1.bf16.msra.mxu0 %v518
    %670 = vmatprep.subr.bf16.mxu0 %v511
    %671 = vmatpush1.bf16.msra.mxu0 %v510
    %672 = vmatprep.subr.bf16.mxu0 %v503
    %673 = vmatpush1.bf16.msra.mxu0 %v502
    %674 = vmatprep.subr.bf16.mxu0 %v495
    %675 = vmatpush1.bf16.msra.mxu0 %v494
    %676 = vmatprep.subr.bf16.mxu0 %v487
    %677 = vmatpush1.bf16.msra.mxu0 %v486
    %678 = vmatprep.subr.bf16.mxu0 %v479
    %679 = vmatpush1.bf16.msra.mxu0 %v478
    %680 = vmatprep.subr.bf16.mxu0 %v471
    %681 = vmatpush1.bf16.msra.mxu0 %v470
    %682 = vmatprep.subr.bf16.mxu0 %v463
    %683 = vmatpush1.bf16.msra.mxu0 %v462
    %684 = vmatprep.subr.bf16.mxu0 0
    %685 = vmatpush2.bf16.msra.mxu0 0
    %686 = vmatprep.subr.bf16.mxu0 0
    %687 = vmatpush2.bf16.msra.mxu0 0
    %688 = vmatprep.subr.bf16.mxu0 0
    %689 = vmatpush2.bf16.msra.mxu0 0
    %690 = vmatprep.subr.bf16.mxu0 0
    %691 = vmatpush2.bf16.msra.mxu0 0
    %692 = vmatprep.subr.bf16.mxu0 0
    %693 = vmatpush2.bf16.msra.mxu0 0
    %694 = vmatprep.subr.bf16.mxu0 0
    %695 = vmatpush2.bf16.msra.mxu0 0
    %696 = vmatprep.subr.bf16.mxu0 0
    %697 = vmatpush2.bf16.msra.mxu0 0
    %698 = vmatprep.subr.bf16.mxu0 0
    %699 = vmatpush2.bf16.msra.mxu0 0
    %700 = vmatprep.mubr.bf16.mxu0 0
    %701 = vmatmul.mubr.bf16.gmra.mxu0 %v159
    %v702 = vpop.f32.mrf.mxu0
    %v703 = vadd.f32 %v245, %v702
    %v704 = vpop.f32.mrf.mxu0
    %v705 = vadd.f32 %v249, %v704
    %v706 = vpop.f32.mrf.mxu0
    %v707 = vpop.f32.mrf.mxu0
    %708 = vdwg.mxu0
    %709 = vmatprep.subr.bf16.mxu0 %v521
    %710 = vmatpush1.bf16.msra.mxu0 %v520
    %711 = vmatprep.subr.bf16.mxu0 %v513
    %712 = vmatpush1.bf16.msra.mxu0 %v512
    %713 = vmatprep.subr.bf16.mxu0 %v505
    %714 = vmatpush1.bf16.msra.mxu0 %v504
    %715 = vmatprep.subr.bf16.mxu0 %v497
    %716 = vmatpush1.bf16.msra.mxu0 %v496
    %717 = vmatprep.subr.bf16.mxu0 %v489
    %718 = vmatpush1.bf16.msra.mxu0 %v488
    %719 = vmatprep.subr.bf16.mxu0 %v481
    %720 = vmatpush1.bf16.msra.mxu0 %v480
    %721 = vmatprep.subr.bf16.mxu0 %v473
    %722 = vmatpush1.bf16.msra.mxu0 %v472
    %723 = vmatprep.subr.bf16.mxu0 %v465
    %724 = vmatpush1.bf16.msra.mxu0 %v464
    %725 = vmatprep.subr.bf16.mxu0 0
    %726 = vmatpush2.bf16.msra.mxu0 0
    %727 = vmatprep.subr.bf16.mxu0 0
    %728 = vmatpush2.bf16.msra.mxu0 0
    %729 = vmatprep.subr.bf16.mxu0 0
    %730 = vmatpush2.bf16.msra.mxu0 0
    %731 = vmatprep.subr.bf16.mxu0 0
    %732 = vmatpush2.bf16.msra.mxu0 0
    %733 = vmatprep.subr.bf16.mxu0 0
    %734 = vmatpush2.bf16.msra.mxu0 0
    %735 = vmatprep.subr.bf16.mxu0 0
    %736 = vmatpush2.bf16.msra.mxu0 0
    %737 = vmatprep.subr.bf16.mxu0 0
    %738 = vmatpush2.bf16.msra.mxu0 0
    %739 = vmatprep.subr.bf16.mxu0 0
    %740 = vmatpush2.bf16.msra.mxu0 0
    %741 = vmatprep.mubr.bf16.mxu0 0
    %742 = vmatmul.mubr.bf16.gmra.mxu0 %v159
    %v743 = vpop.f32.mrf.mxu0
    %v744 = vadd.f32 %v253, %v743
    %v745 = vpop.f32.mrf.mxu0
    %v746 = vadd.f32 %v257, %v745
    %v747 = vpop.f32.mrf.mxu0
    %v748 = vpop.f32.mrf.mxu0
    %749 = vdwg.mxu0
    %v750 = vld [vmem:[#allocation8] sm:$0xff]
    %v751 = vld [vmem:[#allocation10] sm:$0xff]
    %v752 = vadd.f32 %v621, %v623
    %v753 = vadd.f32 %v752, %v662
    %v754 = vadd.f32 %v753, %v664
    %v755 = vadd.f32 %v754, %v703
    %v756 = vadd.f32 %v755, %v705
    %v757 = vadd.f32 %v756, %v744
    %v758 = vadd.f32 %v757, %v746
    %759 = vadd.xlane.f32.xlu0 %v758
    %v760 = vpop.xlane.xlu0 %759
    %v761 = vmul.f32 %v621, %v621
    %v762 = vmul.f32 %v623, %v623
    %v763 = vmul.f32 %v662, %v662
    %v764 = vmul.f32 %v664, %v664
    %v765 = vmul.f32 %v703, %v703
    %v766 = vmul.f32 %v705, %v705
    %v767 = vmul.f32 %v744, %v744
    %v768 = vmul.f32 %v746, %v746
    %v769 = vadd.f32 %v761, %v762
    %v770 = vadd.f32 %v769, %v763
    %v771 = vadd.f32 %v770, %v764
    %v772 = vadd.f32 %v771, %v765
    %v773 = vadd.f32 %v772, %v766
    %v774 = vadd.f32 %v773, %v767
    %v775 = vadd.f32 %v774, %v768
    %776 = vadd.xlane.f32.xlu0 %v775
    %v777 = vpop.xlane.xlu0 %776
    %v778 = vmul.f32 %v760, 0.0009765625
    %v779 = vmul.f32 %v777, 0.0009765625
    %v780 = vmul.f32 %v778, %v778
    %v781 = vsub.f32 %v779, %v780
    %v782 = vadd.f32 %v781, 1e-05
    %v783 = vrsqrt.pop %v782
    %v784 = vsub.f32 %v621, %v778
    %v785 = vsub.f32 %v623, %v778
    %v786 = vsub.f32 %v662, %v778
    %v787 = vsub.f32 %v664, %v778
    %v788 = vsub.f32 %v703, %v778
    %v789 = vsub.f32 %v705, %v778
    %v790 = vsub.f32 %v744, %v778
    %v791 = vsub.f32 %v746, %v778
    %v792 = vmul.f32 %v784, %v783
    %v793 = vmul.f32 %v785, %v783
    %v794 = vmul.f32 %v786, %v783
    %v795 = vmul.f32 %v787, %v783
    %v796 = vmul.f32 %v788, %v783
    %v797 = vmul.f32 %v789, %v783
    %v798 = vmul.f32 %v790, %v783
    %v799 = vmul.f32 %v791, %v783
    %v800 = vpack.c.bf16 %v792, %v792
    %v801 = vpack.c.bf16 %v793, %v793
    %v802 = vpack.c.bf16 %v794, %v794
    %v803 = vpack.c.bf16 %v795, %v795
    %v804 = vpack.c.bf16 %v796, %v796
    %v805 = vpack.c.bf16 %v797, %v797
    %v806 = vpack.c.bf16 %v798, %v798
    %v807 = vpack.c.bf16 %v799, %v799
    %v809 = vcombine.high %v750, %v750
    %v811 = vunpack.c.l.s4 1966171168
    %v812 = vunpack.c.0.s8 %v811
    %v813 = vlaneseq
    %v814 = vshrl.u32 %v813, 7
    %v815 = vsub.s32 %v812, %v814
    %v816 = vrot.slane %v750, %v815
    %v818 = vunpack.c.l.s4 1966171168
    %v819 = vunpack.c.0.s8 %v818
    %v820 = vlaneseq
    %v821 = vshrl.u32 %v820, 7
    %v822 = vsub.s32 %v819, %v821
    %v823 = vrot.slane %v809, %v822
    %v824 = vcombine.high %v816, %v816
    %v825 = vcombine.high %v823, %v823
    %v827 = vunpack.c.l.s4 1966171168
    %v828 = vunpack.c.0.s8 %v827
    %v829 = vlaneseq
    %v830 = vshrl.u32 %v829, 7
    %v831 = vsub.s32 %v828, %v830
    %v832 = vrot.slane %v816, %v831
    %v834 = vunpack.c.l.s4 1966171168
    %v835 = vunpack.c.0.s8 %v834
    %v836 = vlaneseq
    %v837 = vshrl.u32 %v836, 7
    %v838 = vsub.s32 %v835, %v837
    %v839 = vrot.slane %v823, %v838
    %v841 = vunpack.c.l.s4 1966171168
    %v842 = vunpack.c.0.s8 %v841
    %v843 = vlaneseq
    %v844 = vshrl.u32 %v843, 7
    %v845 = vsub.s32 %v842, %v844
    %v846 = vrot.slane %v824, %v845
    %v848 = vunpack.c.l.s4 1966171168
    %v849 = vunpack.c.0.s8 %v848
    %v850 = vlaneseq
    %v851 = vshrl.u32 %v850, 7
    %v852 = vsub.s32 %v849, %v851
    %v853 = vrot.slane %v825, %v852
    %v854 = vcombine.high %v832, %v832
    %v855 = vcombine.high %v839, %v839
    %v856 = vcombine.high %v846, %v846
    %v857 = vcombine.high %v853, %v853
    %v859 = vpack.i.b16 %v832, %v832
    %v861 = vlaneseq
    %v862 = vshrl.u32 %v861, 7
    %v863 = vsub.s32 0, %v862
    %v864 = vrot.slane %v859, %v863
    %v866 = vpack.i.b16 %v846, %v846
    %v868 = vlaneseq
    %v869 = vshrl.u32 %v868, 7
    %v870 = vsub.s32 0, %v869
    %v871 = vrot.slane %v866, %v870
    %v873 = vpack.i.b16 %v854, %v854
    %v875 = vlaneseq
    %v876 = vshrl.u32 %v875, 7
    %v877 = vsub.s32 0, %v876
    %v878 = vrot.slane %v873, %v877
    %v880 = vpack.i.b16 %v856, %v856
    %v882 = vlaneseq
    %v883 = vshrl.u32 %v882, 7
    %v884 = vsub.s32 0, %v883
    %v885 = vrot.slane %v880, %v884
    %v887 = vpack.i.b16 %v839, %v839
    %v889 = vlaneseq
    %v890 = vshrl.u32 %v889, 7
    %v891 = vsub.s32 0, %v890
    %v892 = vrot.slane %v887, %v891
    %v894 = vpack.i.b16 %v853, %v853
    %v896 = vlaneseq
    %v897 = vshrl.u32 %v896, 7
    %v898 = vsub.s32 0, %v897
    %v899 = vrot.slane %v894, %v898
    %v901 = vpack.i.b16 %v855, %v855
    %v903 = vlaneseq
    %v904 = vshrl.u32 %v903, 7
    %v905 = vsub.s32 0, %v904
    %v906 = vrot.slane %v901, %v905
    %v908 = vpack.i.b16 %v857, %v857
    %v910 = vlaneseq
    %v911 = vshrl.u32 %v910, 7
    %v912 = vsub.s32 0, %v911
    %v913 = vrot.slane %v908, %v912
    %v914 = vmul.bf16 %v800, %v864
    %v915 = vmul.bf16 %v801, %v871
    %v916 = vmul.bf16 %v802, %v878
    %v917 = vmul.bf16 %v803, %v885
    %v918 = vmul.bf16 %v804, %v892
    %v919 = vmul.bf16 %v805, %v899
    %v920 = vmul.bf16 %v806, %v906
    %v921 = vmul.bf16 %v807, %v913
    %v923 = vcombine.high %v751, %v751
    %v925 = vunpack.c.l.s4 1966171168
    %v926 = vunpack.c.0.s8 %v925
    %v927 = vlaneseq
    %v928 = vshrl.u32 %v927, 7
    %v929 = vsub.s32 %v926, %v928
    %v930 = vrot.slane %v751, %v929
    %v932 = vunpack.c.l.s4 1966171168
    %v933 = vunpack.c.0.s8 %v932
    %v934 = vlaneseq
    %v935 = vshrl.u32 %v934, 7
    %v936 = vsub.s32 %v933, %v935
    %v937 = vrot.slane %v923, %v936
    %v938 = vcombine.high %v930, %v930
    %v939 = vcombine.high %v937, %v937
    %v941 = vunpack.c.l.s4 1966171168
    %v942 = vunpack.c.0.s8 %v941
    %v943 = vlaneseq
    %v944 = vshrl.u32 %v943, 7
    %v945 = vsub.s32 %v942, %v944
    %v946 = vrot.slane %v930, %v945
    %v948 = vunpack.c.l.s4 1966171168
    %v949 = vunpack.c.0.s8 %v948
    %v950 = vlaneseq
    %v951 = vshrl.u32 %v950, 7
    %v952 = vsub.s32 %v949, %v951
    %v953 = vrot.slane %v937, %v952
    %v955 = vunpack.c.l.s4 1966171168
    %v956 = vunpack.c.0.s8 %v955
    %v957 = vlaneseq
    %v958 = vshrl.u32 %v957, 7
    %v959 = vsub.s32 %v956, %v958
    %v960 = vrot.slane %v938, %v959
    %v962 = vunpack.c.l.s4 1966171168
    %v963 = vunpack.c.0.s8 %v962
    %v964 = vlaneseq
    %v965 = vshrl.u32 %v964, 7
    %v966 = vsub.s32 %v963, %v965
    %v967 = vrot.slane %v939, %v966
    %v968 = vcombine.high %v946, %v946
    %v969 = vcombine.high %v953, %v953
    %v970 = vcombine.high %v960, %v960
    %v971 = vcombine.high %v967, %v967
    %v973 = vpack.i.b16 %v946, %v946
    %v975 = vlaneseq
    %v976 = vshrl.u32 %v975, 7
    %v977 = vsub.s32 0, %v976
    %v978 = vrot.slane %v973, %v977
    %v980 = vpack.i.b16 %v960, %v960
    %v982 = vlaneseq
    %v983 = vshrl.u32 %v982, 7
    %v984 = vsub.s32 0, %v983
    %v985 = vrot.slane %v980, %v984
    %v987 = vpack.i.b16 %v968, %v968
    %v989 = vlaneseq
    %v990 = vshrl.u32 %v989, 7
    %v991 = vsub.s32 0, %v990
    %v992 = vrot.slane %v987, %v991
    %v994 = vpack.i.b16 %v970, %v970
    %v996 = vlaneseq
    %v997 = vshrl.u32 %v996, 7
    %v998 = vsub.s32 0, %v997
    %v999 = vrot.slane %v994, %v998
    %v1001 = vpack.i.b16 %v953, %v953
    %v1003 = vlaneseq
    %v1004 = vshrl.u32 %v1003, 7
    %v1005 = vsub.s32 0, %v1004
    %v1006 = vrot.slane %v1001, %v1005
    %v1008 = vpack.i.b16 %v967, %v967
    %v1010 = vlaneseq
    %v1011 = vshrl.u32 %v1010, 7
    %v1012 = vsub.s32 0, %v1011
    %v1013 = vrot.slane %v1008, %v1012
    %v1015 = vpack.i.b16 %v969, %v969
    %v1017 = vlaneseq
    %v1018 = vshrl.u32 %v1017, 7
    %v1019 = vsub.s32 0, %v1018
    %v1020 = vrot.slane %v1015, %v1019
    %v1022 = vpack.i.b16 %v971, %v971
    %v1024 = vlaneseq
    %v1025 = vshrl.u32 %v1024, 7
    %v1026 = vsub.s32 0, %v1025
    %v1027 = vrot.slane %v1022, %v1026
    %v1028 = vadd.bf16 %v914, %v978
    %v1029 = vadd.bf16 %v915, %v985
    %v1030 = vadd.bf16 %v916, %v992
    %v1031 = vadd.bf16 %v917, %v999
    %v1032 = vadd.bf16 %v918, %v1006
    %v1033 = vadd.bf16 %v919, %v1013
    %v1034 = vadd.bf16 %v920, %v1020
    %v1035 = vadd.bf16 %v921, %v1027
    %v1036 = vmax.bf16 %v1028, 0
    %v1037 = vmax.bf16 %v1029, 0
    %v1038 = vmax.bf16 %v1030, 0
    %v1039 = vmax.bf16 %v1031, 0
    %v1040 = vmax.bf16 %v1032, 0
    %v1041 = vmax.bf16 %v1033, 0
    %v1042 = vmax.bf16 %v1034, 0
    %v1043 = vmax.bf16 %v1035, 0
    %v1044 = vld [vmem:[#allocation11] sm:$0xff]
    %v1045 = vld [vmem:[#allocation11 + $0x8] sm:$0xff]
    %v1046 = vld [vmem:[#allocation11 + $0x10] sm:$0xff]
    %v1047 = vld [vmem:[#allocation11 + $0x18] sm:$0xff]
    %v1048 = vld [vmem:[#allocation11 + $0x20] sm:$0xff]
    %v1049 = vld [vmem:[#allocation11 + $0x28] sm:$0xff]
    %v1050 = vld [vmem:[#allocation11 + $0x30] sm:$0xff]
    %v1051 = vld [vmem:[#allocation11 + $0x38] sm:$0xff]
    %v1052 = vld [vmem:[#allocation11 + $0x40] sm:$0xff]
    %v1053 = vld [vmem:[#allocation11 + $0x48] sm:$0xff]
    %v1054 = vld [vmem:[#allocation11 + $0x50] sm:$0xff]
    %v1055 = vld [vmem:[#allocation11 + $0x58] sm:$0xff]
    %v1056 = vld [vmem:[#allocation11 + $0x60] sm:$0xff]
    %v1057 = vld [vmem:[#allocation11 + $0x68] sm:$0xff]
    %v1058 = vld [vmem:[#allocation11 + $0x70] sm:$0xff]
    %v1059 = vld [vmem:[#allocation11 + $0x78] sm:$0xff]
    %v1060 = vld [vmem:[#allocation11 + $0x80] sm:$0xff]
    %v1061 = vld [vmem:[#allocation11 + $0x88] sm:$0xff]
    %v1062 = vld [vmem:[#allocation11 + $0x90] sm:$0xff]
    %v1063 = vld [vmem:[#allocation11 + $0x98] sm:$0xff]
    %v1064 = vld [vmem:[#allocation11 + $0xa0] sm:$0xff]
    %v1065 = vld [vmem:[#allocation11 + $0xa8] sm:$0xff]
    %v1066 = vld [vmem:[#allocation11 + $0xb0] sm:$0xff]
    %v1067 = vld [vmem:[#allocation11 + $0xb8] sm:$0xff]
    %v1068 = vld [vmem:[#allocation11 + $0xc0] sm:$0xff]
    %v1069 = vld [vmem:[#allocation11 + $0xc8] sm:$0xff]
    %v1070 = vld [vmem:[#allocation11 + $0xd0] sm:$0xff]
    %v1071 = vld [vmem:[#allocation11 + $0xd8] sm:$0xff]
    %v1072 = vld [vmem:[#allocation11 + $0xe0] sm:$0xff]
    %v1073 = vld [vmem:[#allocation11 + $0xe8] sm:$0xff]
    %v1074 = vld [vmem:[#allocation11 + $0xf0] sm:$0xff]
    %v1075 = vld [vmem:[#allocation11 + $0xf8] sm:$0xff]
    %v1076 = vld [vmem:[#allocation11 + $0x100] sm:$0xff]
    %v1077 = vld [vmem:[#allocation11 + $0x108] sm:$0xff]
    %v1078 = vld [vmem:[#allocation11 + $0x110] sm:$0xff]
    %v1079 = vld [vmem:[#allocation11 + $0x118] sm:$0xff]
    %v1080 = vld [vmem:[#allocation11 + $0x120] sm:$0xff]
    %v1081 = vld [vmem:[#allocation11 + $0x128] sm:$0xff]
    %v1082 = vld [vmem:[#allocation11 + $0x130] sm:$0xff]
    %v1083 = vld [vmem:[#allocation11 + $0x138] sm:$0xff]
    %v1084 = vld [vmem:[#allocation11 + $0x140] sm:$0xff]
    %v1085 = vld [vmem:[#allocation11 + $0x148] sm:$0xff]
    %v1086 = vld [vmem:[#allocation11 + $0x150] sm:$0xff]
    %v1087 = vld [vmem:[#allocation11 + $0x158] sm:$0xff]
    %v1088 = vld [vmem:[#allocation11 + $0x160] sm:$0xff]
    %v1089 = vld [vmem:[#allocation11 + $0x168] sm:$0xff]
    %v1090 = vld [vmem:[#allocation11 + $0x170] sm:$0xff]
    %v1091 = vld [vmem:[#allocation11 + $0x178] sm:$0xff]
    %v1092 = vld [vmem:[#allocation11 + $0x180] sm:$0xff]
    %v1093 = vld [vmem:[#allocation11 + $0x188] sm:$0xff]
    %v1094 = vld [vmem:[#allocation11 + $0x190] sm:$0xff]
    %v1095 = vld [vmem:[#allocation11 + $0x198] sm:$0xff]
    %v1096 = vld [vmem:[#allocation11 + $0x1a0] sm:$0xff]
    %v1097 = vld [vmem:[#allocation11 + $0x1a8] sm:$0xff]
    %v1098 = vld [vmem:[#allocation11 + $0x1b0] sm:$0xff]
    %v1099 = vld [vmem:[#allocation11 + $0x1b8] sm:$0xff]
    %v1100 = vld [vmem:[#allocation11 + $0x1c0] sm:$0xff]
    %v1101 = vld [vmem:[#allocation11 + $0x1c8] sm:$0xff]
    %v1102 = vld [vmem:[#allocation11 + $0x1d0] sm:$0xff]
    %v1103 = vld [vmem:[#allocation11 + $0x1d8] sm:$0xff]
    %v1104 = vld [vmem:[#allocation11 + $0x1e0] sm:$0xff]
    %v1105 = vld [vmem:[#allocation11 + $0x1e8] sm:$0xff]
    %v1106 = vld [vmem:[#allocation11 + $0x1f0] sm:$0xff]
    %v1107 = vld [vmem:[#allocation11 + $0x1f8] sm:$0xff]
    %v1108 = vld [vmem:[#allocation11 + $0x200] sm:$0xff]
    %v1109 = vld [vmem:[#allocation11 + $0x208] sm:$0xff]
    %v1110 = vld [vmem:[#allocation11 + $0x210] sm:$0xff]
    %v1111 = vld [vmem:[#allocation11 + $0x218] sm:$0xff]
    %v1112 = vld [vmem:[#allocation11 + $0x220] sm:$0xff]
    %v1113 = vld [vmem:[#allocation11 + $0x228] sm:$0xff]
    %v1114 = vld [vmem:[#allocation11 + $0x230] sm:$0xff]
    %v1115 = vld [vmem:[#allocation11 + $0x238] sm:$0xff]
    %v1116 = vld [vmem:[#allocation11 + $0x240] sm:$0xff]
    %v1117 = vld [vmem:[#allocation11 + $0x248] sm:$0xff]
    %v1118 = vld [vmem:[#allocation11 + $0x250] sm:$0xff]
    %v1119 = vld [vmem:[#allocation11 + $0x258] sm:$0xff]
    %v1120 = vld [vmem:[#allocation11 + $0x260] sm:$0xff]
    %v1121 = vld [vmem:[#allocation11 + $0x268] sm:$0xff]
    %v1122 = vld [vmem:[#allocation11 + $0x270] sm:$0xff]
    %v1123 = vld [vmem:[#allocation11 + $0x278] sm:$0xff]
    %v1124 = vld [vmem:[#allocation11 + $0x280] sm:$0xff]
    %v1125 = vld [vmem:[#allocation11 + $0x288] sm:$0xff]
    %v1126 = vld [vmem:[#allocation11 + $0x290] sm:$0xff]
    %v1127 = vld [vmem:[#allocation11 + $0x298] sm:$0xff]
    %v1128 = vld [vmem:[#allocation11 + $0x2a0] sm:$0xff]
    %v1129 = vld [vmem:[#allocation11 + $0x2a8] sm:$0xff]
    %v1130 = vld [vmem:[#allocation11 + $0x2b0] sm:$0xff]
    %v1131 = vld [vmem:[#allocation11 + $0x2b8] sm:$0xff]
    %v1132 = vld [vmem:[#allocation11 + $0x2c0] sm:$0xff]
    %v1133 = vld [vmem:[#allocation11 + $0x2c8] sm:$0xff]
    %v1134 = vld [vmem:[#allocation11 + $0x2d0] sm:$0xff]
    %v1135 = vld [vmem:[#allocation11 + $0x2d8] sm:$0xff]
    %v1136 = vld [vmem:[#allocation11 + $0x2e0] sm:$0xff]
    %v1137 = vld [vmem:[#allocation11 + $0x2e8] sm:$0xff]
    %v1138 = vld [vmem:[#allocation11 + $0x2f0] sm:$0xff]
    %v1139 = vld [vmem:[#allocation11 + $0x2f8] sm:$0xff]
    %v1140 = vld [vmem:[#allocation11 + $0x300] sm:$0xff]
    %v1141 = vld [vmem:[#allocation11 + $0x308] sm:$0xff]
    %v1142 = vld [vmem:[#allocation11 + $0x310] sm:$0xff]
    %v1143 = vld [vmem:[#allocation11 + $0x318] sm:$0xff]
    %v1144 = vld [vmem:[#allocation11 + $0x320] sm:$0xff]
    %v1145 = vld [vmem:[#allocation11 + $0x328] sm:$0xff]
    %v1146 = vld [vmem:[#allocation11 + $0x330] sm:$0xff]
    %v1147 = vld [vmem:[#allocation11 + $0x338] sm:$0xff]
    %v1148 = vld [vmem:[#allocation11 + $0x340] sm:$0xff]
    %v1149 = vld [vmem:[#allocation11 + $0x348] sm:$0xff]
    %v1150 = vld [vmem:[#allocation11 + $0x350] sm:$0xff]
    %v1151 = vld [vmem:[#allocation11 + $0x358] sm:$0xff]
    %v1152 = vld [vmem:[#allocation11 + $0x360] sm:$0xff]
    %v1153 = vld [vmem:[#allocation11 + $0x368] sm:$0xff]
    %v1154 = vld [vmem:[#allocation11 + $0x370] sm:$0xff]
    %v1155 = vld [vmem:[#allocation11 + $0x378] sm:$0xff]
    %v1156 = vld [vmem:[#allocation11 + $0x380] sm:$0xff]
    %v1157 = vld [vmem:[#allocation11 + $0x388] sm:$0xff]
    %v1158 = vld [vmem:[#allocation11 + $0x390] sm:$0xff]
    %v1159 = vld [vmem:[#allocation11 + $0x398] sm:$0xff]
    %v1160 = vld [vmem:[#allocation11 + $0x3a0] sm:$0xff]
    %v1161 = vld [vmem:[#allocation11 + $0x3a8] sm:$0xff]
    %v1162 = vld [vmem:[#allocation11 + $0x3b0] sm:$0xff]
    %v1163 = vld [vmem:[#allocation11 + $0x3b8] sm:$0xff]
    %v1164 = vld [vmem:[#allocation11 + $0x3c0] sm:$0xff]
    %v1165 = vld [vmem:[#allocation11 + $0x3c8] sm:$0xff]
    %v1166 = vld [vmem:[#allocation11 + $0x3d0] sm:$0xff]
    %v1167 = vld [vmem:[#allocation11 + $0x3d8] sm:$0xff]
    %v1168 = vld [vmem:[#allocation11 + $0x3e0] sm:$0xff]
    %v1169 = vld [vmem:[#allocation11 + $0x3e8] sm:$0xff]
    %v1170 = vld [vmem:[#allocation11 + $0x3f0] sm:$0xff]
    %v1171 = vld [vmem:[#allocation11 + $0x3f8] sm:$0xff]
    %v1172 = vld [vmem:[#allocation11 + $0x400] sm:$0xff]
    %v1173 = vld [vmem:[#allocation11 + $0x408] sm:$0xff]
    %v1174 = vld [vmem:[#allocation11 + $0x410] sm:$0xff]
    %v1175 = vld [vmem:[#allocation11 + $0x418] sm:$0xff]
    %v1176 = vld [vmem:[#allocation11 + $0x420] sm:$0xff]
    %v1177 = vld [vmem:[#allocation11 + $0x428] sm:$0xff]
    %v1178 = vld [vmem:[#allocation11 + $0x430] sm:$0xff]
    %v1179 = vld [vmem:[#allocation11 + $0x438] sm:$0xff]
    %v1180 = vld [vmem:[#allocation11 + $0x440] sm:$0xff]
    %v1181 = vld [vmem:[#allocation11 + $0x448] sm:$0xff]
    %v1182 = vld [vmem:[#allocation11 + $0x450] sm:$0xff]
    %v1183 = vld [vmem:[#allocation11 + $0x458] sm:$0xff]
    %v1184 = vld [vmem:[#allocation11 + $0x460] sm:$0xff]
    %v1185 = vld [vmem:[#allocation11 + $0x468] sm:$0xff]
    %v1186 = vld [vmem:[#allocation11 + $0x470] sm:$0xff]
    %v1187 = vld [vmem:[#allocation11 + $0x478] sm:$0xff]
    %v1188 = vld [vmem:[#allocation11 + $0x480] sm:$0xff]
    %v1189 = vld [vmem:[#allocation11 + $0x488] sm:$0xff]
    %v1190 = vld [vmem:[#allocation11 + $0x490] sm:$0xff]
    %v1191 = vld [vmem:[#allocation11 + $0x498] sm:$0xff]
    %v1192 = vld [vmem:[#allocation11 + $0x4a0] sm:$0xff]
    %v1193 = vld [vmem:[#allocation11 + $0x4a8] sm:$0xff]
    %v1194 = vld [vmem:[#allocation11 + $0x4b0] sm:$0xff]
    %v1195 = vld [vmem:[#allocation11 + $0x4b8] sm:$0xff]
    %v1196 = vld [vmem:[#allocation11 + $0x4c0] sm:$0xff]
    %v1197 = vld [vmem:[#allocation11 + $0x4c8] sm:$0xff]
    %v1198 = vld [vmem:[#allocation11 + $0x4d0] sm:$0xff]
    %v1199 = vld [vmem:[#allocation11 + $0x4d8] sm:$0xff]
    %v1200 = vld [vmem:[#allocation11 + $0x4e0] sm:$0xff]
    %v1201 = vld [vmem:[#allocation11 + $0x4e8] sm:$0xff]
    %v1202 = vld [vmem:[#allocation11 + $0x4f0] sm:$0xff]
    %v1203 = vld [vmem:[#allocation11 + $0x4f8] sm:$0xff]
    %v1204 = vld [vmem:[#allocation11 + $0x500] sm:$0xff]
    %v1205 = vld [vmem:[#allocation11 + $0x508] sm:$0xff]
    %v1206 = vld [vmem:[#allocation11 + $0x510] sm:$0xff]
    %v1207 = vld [vmem:[#allocation11 + $0x518] sm:$0xff]
    %v1208 = vld [vmem:[#allocation11 + $0x520] sm:$0xff]
    %v1209 = vld [vmem:[#allocation11 + $0x528] sm:$0xff]
    %v1210 = vld [vmem:[#allocation11 + $0x530] sm:$0xff]
    %v1211 = vld [vmem:[#allocation11 + $0x538] sm:$0xff]
    %v1212 = vld [vmem:[#allocation11 + $0x540] sm:$0xff]
    %v1213 = vld [vmem:[#allocation11 + $0x548] sm:$0xff]
    %v1214 = vld [vmem:[#allocation11 + $0x550] sm:$0xff]
    %v1215 = vld [vmem:[#allocation11 + $0x558] sm:$0xff]
    %v1216 = vld [vmem:[#allocation11 + $0x560] sm:$0xff]
    %v1217 = vld [vmem:[#allocation11 + $0x568] sm:$0xff]
    %v1218 = vld [vmem:[#allocation11 + $0x570] sm:$0xff]
    %v1219 = vld [vmem:[#allocation11 + $0x578] sm:$0xff]
    %v1220 = vld [vmem:[#allocation11 + $0x580] sm:$0xff]
    %v1221 = vld [vmem:[#allocation11 + $0x588] sm:$0xff]
    %v1222 = vld [vmem:[#allocation11 + $0x590] sm:$0xff]
    %v1223 = vld [vmem:[#allocation11 + $0x598] sm:$0xff]
    %v1224 = vld [vmem:[#allocation11 + $0x5a0] sm:$0xff]
    %v1225 = vld [vmem:[#allocation11 + $0x5a8] sm:$0xff]
    %v1226 = vld [vmem:[#allocation11 + $0x5b0] sm:$0xff]
    %v1227 = vld [vmem:[#allocation11 + $0x5b8] sm:$0xff]
    %v1228 = vld [vmem:[#allocation11 + $0x5c0] sm:$0xff]
    %v1229 = vld [vmem:[#allocation11 + $0x5c8] sm:$0xff]
    %v1230 = vld [vmem:[#allocation11 + $0x5d0] sm:$0xff]
    %v1231 = vld [vmem:[#allocation11 + $0x5d8] sm:$0xff]
    %v1232 = vld [vmem:[#allocation11 + $0x5e0] sm:$0xff]
    %v1233 = vld [vmem:[#allocation11 + $0x5e8] sm:$0xff]
    %v1234 = vld [vmem:[#allocation11 + $0x5f0] sm:$0xff]
    %v1235 = vld [vmem:[#allocation11 + $0x5f8] sm:$0xff]
    %v1236 = vld [vmem:[#allocation11 + $0x600] sm:$0xff]
    %v1237 = vld [vmem:[#allocation11 + $0x608] sm:$0xff]
    %v1238 = vld [vmem:[#allocation11 + $0x610] sm:$0xff]
    %v1239 = vld [vmem:[#allocation11 + $0x618] sm:$0xff]
    %v1240 = vld [vmem:[#allocation11 + $0x620] sm:$0xff]
    %v1241 = vld [vmem:[#allocation11 + $0x628] sm:$0xff]
    %v1242 = vld [vmem:[#allocation11 + $0x630] sm:$0xff]
    %v1243 = vld [vmem:[#allocation11 + $0x638] sm:$0xff]
    %v1244 = vld [vmem:[#allocation11 + $0x640] sm:$0xff]
    %v1245 = vld [vmem:[#allocation11 + $0x648] sm:$0xff]
    %v1246 = vld [vmem:[#allocation11 + $0x650] sm:$0xff]
    %v1247 = vld [vmem:[#allocation11 + $0x658] sm:$0xff]
    %v1248 = vld [vmem:[#allocation11 + $0x660] sm:$0xff]
    %v1249 = vld [vmem:[#allocation11 + $0x668] sm:$0xff]
    %v1250 = vld [vmem:[#allocation11 + $0x670] sm:$0xff]
    %v1251 = vld [vmem:[#allocation11 + $0x678] sm:$0xff]
    %v1252 = vld [vmem:[#allocation11 + $0x680] sm:$0xff]
    %v1253 = vld [vmem:[#allocation11 + $0x688] sm:$0xff]
    %v1254 = vld [vmem:[#allocation11 + $0x690] sm:$0xff]
    %v1255 = vld [vmem:[#allocation11 + $0x698] sm:$0xff]
    %v1256 = vld [vmem:[#allocation11 + $0x6a0] sm:$0xff]
    %v1257 = vld [vmem:[#allocation11 + $0x6a8] sm:$0xff]
    %v1258 = vld [vmem:[#allocation11 + $0x6b0] sm:$0xff]
    %v1259 = vld [vmem:[#allocation11 + $0x6b8] sm:$0xff]
    %v1260 = vld [vmem:[#allocation11 + $0x6c0] sm:$0xff]
    %v1261 = vld [vmem:[#allocation11 + $0x6c8] sm:$0xff]
    %v1262 = vld [vmem:[#allocation11 + $0x6d0] sm:$0xff]
    %v1263 = vld [vmem:[#allocation11 + $0x6d8] sm:$0xff]
    %v1264 = vld [vmem:[#allocation11 + $0x6e0] sm:$0xff]
    %v1265 = vld [vmem:[#allocation11 + $0x6e8] sm:$0xff]
    %v1266 = vld [vmem:[#allocation11 + $0x6f0] sm:$0xff]
    %v1267 = vld [vmem:[#allocation11 + $0x6f8] sm:$0xff]
    %v1268 = vld [vmem:[#allocation11 + $0x700] sm:$0xff]
    %v1269 = vld [vmem:[#allocation11 + $0x708] sm:$0xff]
    %v1270 = vld [vmem:[#allocation11 + $0x710] sm:$0xff]
    %v1271 = vld [vmem:[#allocation11 + $0x718] sm:$0xff]
    %v1272 = vld [vmem:[#allocation11 + $0x720] sm:$0xff]
    %v1273 = vld [vmem:[#allocation11 + $0x728] sm:$0xff]
    %v1274 = vld [vmem:[#allocation11 + $0x730] sm:$0xff]
    %v1275 = vld [vmem:[#allocation11 + $0x738] sm:$0xff]
    %v1276 = vld [vmem:[#allocation11 + $0x740] sm:$0xff]
    %v1277 = vld [vmem:[#allocation11 + $0x748] sm:$0xff]
    %v1278 = vld [vmem:[#allocation11 + $0x750] sm:$0xff]
    %v1279 = vld [vmem:[#allocation11 + $0x758] sm:$0xff]
    %v1280 = vld [vmem:[#allocation11 + $0x760] sm:$0xff]
    %v1281 = vld [vmem:[#allocation11 + $0x768] sm:$0xff]
    %v1282 = vld [vmem:[#allocation11 + $0x770] sm:$0xff]
    %v1283 = vld [vmem:[#allocation11 + $0x778] sm:$0xff]
    %v1284 = vld [vmem:[#allocation11 + $0x780] sm:$0xff]
    %v1285 = vld [vmem:[#allocation11 + $0x788] sm:$0xff]
    %v1286 = vld [vmem:[#allocation11 + $0x790] sm:$0xff]
    %v1287 = vld [vmem:[#allocation11 + $0x798] sm:$0xff]
    %v1288 = vld [vmem:[#allocation11 + $0x7a0] sm:$0xff]
    %v1289 = vld [vmem:[#allocation11 + $0x7a8] sm:$0xff]
    %v1290 = vld [vmem:[#allocation11 + $0x7b0] sm:$0xff]
    %v1291 = vld [vmem:[#allocation11 + $0x7b8] sm:$0xff]
    %v1292 = vld [vmem:[#allocation11 + $0x7c0] sm:$0xff]
    %v1293 = vld [vmem:[#allocation11 + $0x7c8] sm:$0xff]
    %v1294 = vld [vmem:[#allocation11 + $0x7d0] sm:$0xff]
    %v1295 = vld [vmem:[#allocation11 + $0x7d8] sm:$0xff]
    %v1296 = vld [vmem:[#allocation11 + $0x7e0] sm:$0xff]
    %v1297 = vld [vmem:[#allocation11 + $0x7e8] sm:$0xff]
    %v1298 = vld [vmem:[#allocation11 + $0x7f0] sm:$0xff]
    %v1299 = vld [vmem:[#allocation11 + $0x7f8] sm:$0xff]
    %v1300 = vld [vmem:[%s6] sm:$0xf]
    %v1302 = vlaneseq
    %v1303 = vshrl.u32 %v1302, 7
    %v1304 = vsub.s32 0, %v1303
    %v1305 = vrot.slane %v1300, %v1304
    %v1306 = vlaneseq
    %v1307 = vshrl.u32 %v1306, 7
    %v1308 = vsub.s32 1, %v1307
    %v1309 = vrot.slane %v1300, %v1308
    %v1310 = vlaneseq
    %v1311 = vshrl.u32 %v1310, 7
    %v1312 = vsub.s32 2, %v1311
    %v1313 = vrot.slane %v1300, %v1312
    %v1314 = vlaneseq
    %v1315 = vshrl.u32 %v1314, 7
    %v1316 = vsub.s32 3, %v1315
    %v1317 = vrot.slane %v1300, %v1316
    %v1578 = vunpack.c.l.b16 %v1044
    %v1579 = vunpack.c.h.b16 %v1044
    %v1580 = vunpack.c.l.b16 %v1045
    %v1581 = vunpack.c.h.b16 %v1045
    %v1582 = vunpack.c.l.b16 %v1046
    %v1583 = vunpack.c.h.b16 %v1046
    %v1584 = vunpack.c.l.b16 %v1047
    %v1585 = vunpack.c.h.b16 %v1047
    %v1586 = vunpack.c.l.b16 %v1048
    %v1587 = vunpack.c.h.b16 %v1048
    %v1588 = vunpack.c.l.b16 %v1049
    %v1589 = vunpack.c.h.b16 %v1049
    %v1590 = vunpack.c.l.b16 %v1050
    %v1591 = vunpack.c.h.b16 %v1050
    %v1592 = vunpack.c.l.b16 %v1051
    %v1593 = vunpack.c.h.b16 %v1051
    %v1594 = vunpack.c.l.b16 %v1052
    %v1595 = vunpack.c.h.b16 %v1052
    %v1596 = vunpack.c.l.b16 %v1053
    %v1597 = vunpack.c.h.b16 %v1053
    %v1598 = vunpack.c.l.b16 %v1054
    %v1599 = vunpack.c.h.b16 %v1054
    %v1600 = vunpack.c.l.b16 %v1055
    %v1601 = vunpack.c.h.b16 %v1055
    %v1602 = vunpack.c.l.b16 %v1056
    %v1603 = vunpack.c.h.b16 %v1056
    %v1604 = vunpack.c.l.b16 %v1057
    %v1605 = vunpack.c.h.b16 %v1057
    %v1606 = vunpack.c.l.b16 %v1058
    %v1607 = vunpack.c.h.b16 %v1058
    %v1608 = vunpack.c.l.b16 %v1059
    %v1609 = vunpack.c.h.b16 %v1059
    %v1610 = vunpack.c.l.b16 %v1060
    %v1611 = vunpack.c.h.b16 %v1060
    %v1612 = vunpack.c.l.b16 %v1061
    %v1613 = vunpack.c.h.b16 %v1061
    %v1614 = vunpack.c.l.b16 %v1062
    %v1615 = vunpack.c.h.b16 %v1062
    %v1616 = vunpack.c.l.b16 %v1063
    %v1617 = vunpack.c.h.b16 %v1063
    %v1618 = vunpack.c.l.b16 %v1064
    %v1619 = vunpack.c.h.b16 %v1064
    %v1620 = vunpack.c.l.b16 %v1065
    %v1621 = vunpack.c.h.b16 %v1065
    %v1622 = vunpack.c.l.b16 %v1066
    %v1623 = vunpack.c.h.b16 %v1066
    %v1624 = vunpack.c.l.b16 %v1067
    %v1625 = vunpack.c.h.b16 %v1067
    %v1626 = vunpack.c.l.b16 %v1068
    %v1627 = vunpack.c.h.b16 %v1068
    %v1628 = vunpack.c.l.b16 %v1069
    %v1629 = vunpack.c.h.b16 %v1069
    %v1630 = vunpack.c.l.b16 %v1070
    %v1631 = vunpack.c.h.b16 %v1070
    %v1632 = vunpack.c.l.b16 %v1071
    %v1633 = vunpack.c.h.b16 %v1071
    %v1634 = vunpack.c.l.b16 %v1072
    %v1635 = vunpack.c.h.b16 %v1072
    %v1636 = vunpack.c.l.b16 %v1073
    %v1637 = vunpack.c.h.b16 %v1073
    %v1638 = vunpack.c.l.b16 %v1074
    %v1639 = vunpack.c.h.b16 %v1074
    %v1640 = vunpack.c.l.b16 %v1075
    %v1641 = vunpack.c.h.b16 %v1075
    %v1642 = vunpack.c.l.b16 %v1076
    %v1643 = vunpack.c.h.b16 %v1076
    %v1644 = vunpack.c.l.b16 %v1077
    %v1645 = vunpack.c.h.b16 %v1077
    %v1646 = vunpack.c.l.b16 %v1078
    %v1647 = vunpack.c.h.b16 %v1078
    %v1648 = vunpack.c.l.b16 %v1079
    %v1649 = vunpack.c.h.b16 %v1079
    %v1650 = vunpack.c.l.b16 %v1080
    %v1651 = vunpack.c.h.b16 %v1080
    %v1652 = vunpack.c.l.b16 %v1081
    %v1653 = vunpack.c.h.b16 %v1081
    %v1654 = vunpack.c.l.b16 %v1082
    %v1655 = vunpack.c.h.b16 %v1082
    %v1656 = vunpack.c.l.b16 %v1083
    %v1657 = vunpack.c.h.b16 %v1083
    %v1658 = vunpack.c.l.b16 %v1084
    %v1659 = vunpack.c.h.b16 %v1084
    %v1660 = vunpack.c.l.b16 %v1085
    %v1661 = vunpack.c.h.b16 %v1085
    %v1662 = vunpack.c.l.b16 %v1086
    %v1663 = vunpack.c.h.b16 %v1086
    %v1664 = vunpack.c.l.b16 %v1087
    %v1665 = vunpack.c.h.b16 %v1087
    %v1666 = vunpack.c.l.b16 %v1088
    %v1667 = vunpack.c.h.b16 %v1088
    %v1668 = vunpack.c.l.b16 %v1089
    %v1669 = vunpack.c.h.b16 %v1089
    %v1670 = vunpack.c.l.b16 %v1090
    %v1671 = vunpack.c.h.b16 %v1090
    %v1672 = vunpack.c.l.b16 %v1091
    %v1673 = vunpack.c.h.b16 %v1091
    %v1674 = vunpack.c.l.b16 %v1092
    %v1675 = vunpack.c.h.b16 %v1092
    %v1676 = vunpack.c.l.b16 %v1093
    %v1677 = vunpack.c.h.b16 %v1093
    %v1678 = vunpack.c.l.b16 %v1094
    %v1679 = vunpack.c.h.b16 %v1094
    %v1680 = vunpack.c.l.b16 %v1095
    %v1681 = vunpack.c.h.b16 %v1095
    %v1682 = vunpack.c.l.b16 %v1096
    %v1683 = vunpack.c.h.b16 %v1096
    %v1684 = vunpack.c.l.b16 %v1097
    %v1685 = vunpack.c.h.b16 %v1097
    %v1686 = vunpack.c.l.b16 %v1098
    %v1687 = vunpack.c.h.b16 %v1098
    %v1688 = vunpack.c.l.b16 %v1099
    %v1689 = vunpack.c.h.b16 %v1099
    %v1690 = vunpack.c.l.b16 %v1100
    %v1691 = vunpack.c.h.b16 %v1100
    %v1692 = vunpack.c.l.b16 %v1101
    %v1693 = vunpack.c.h.b16 %v1101
    %v1694 = vunpack.c.l.b16 %v1102
    %v1695 = vunpack.c.h.b16 %v1102
    %v1696 = vunpack.c.l.b16 %v1103
    %v1697 = vunpack.c.h.b16 %v1103
    %v1698 = vunpack.c.l.b16 %v1104
    %v1699 = vunpack.c.h.b16 %v1104
    %v1700 = vunpack.c.l.b16 %v1105
    %v1701 = vunpack.c.h.b16 %v1105
    %v1702 = vunpack.c.l.b16 %v1106
    %v1703 = vunpack.c.h.b16 %v1106
    %v1704 = vunpack.c.l.b16 %v1107
    %v1705 = vunpack.c.h.b16 %v1107
    %v1706 = vunpack.c.l.b16 %v1108
    %v1707 = vunpack.c.h.b16 %v1108
    %v1708 = vunpack.c.l.b16 %v1109
    %v1709 = vunpack.c.h.b16 %v1109
    %v1710 = vunpack.c.l.b16 %v1110
    %v1711 = vunpack.c.h.b16 %v1110
    %v1712 = vunpack.c.l.b16 %v1111
    %v1713 = vunpack.c.h.b16 %v1111
    %v1714 = vunpack.c.l.b16 %v1112
    %v1715 = vunpack.c.h.b16 %v1112
    %v1716 = vunpack.c.l.b16 %v1113
    %v1717 = vunpack.c.h.b16 %v1113
    %v1718 = vunpack.c.l.b16 %v1114
    %v1719 = vunpack.c.h.b16 %v1114
    %v1720 = vunpack.c.l.b16 %v1115
    %v1721 = vunpack.c.h.b16 %v1115
    %v1722 = vunpack.c.l.b16 %v1116
    %v1723 = vunpack.c.h.b16 %v1116
    %v1724 = vunpack.c.l.b16 %v1117
    %v1725 = vunpack.c.h.b16 %v1117
    %v1726 = vunpack.c.l.b16 %v1118
    %v1727 = vunpack.c.h.b16 %v1118
    %v1728 = vunpack.c.l.b16 %v1119
    %v1729 = vunpack.c.h.b16 %v1119
    %v1730 = vunpack.c.l.b16 %v1120
    %v1731 = vunpack.c.h.b16 %v1120
    %v1732 = vunpack.c.l.b16 %v1121
    %v1733 = vunpack.c.h.b16 %v1121
    %v1734 = vunpack.c.l.b16 %v1122
    %v1735 = vunpack.c.h.b16 %v1122
    %v1736 = vunpack.c.l.b16 %v1123
    %v1737 = vunpack.c.h.b16 %v1123
    %v1738 = vunpack.c.l.b16 %v1124
    %v1739 = vunpack.c.h.b16 %v1124
    %v1740 = vunpack.c.l.b16 %v1125
    %v1741 = vunpack.c.h.b16 %v1125
    %v1742 = vunpack.c.l.b16 %v1126
    %v1743 = vunpack.c.h.b16 %v1126
    %v1744 = vunpack.c.l.b16 %v1127
    %v1745 = vunpack.c.h.b16 %v1127
    %v1746 = vunpack.c.l.b16 %v1128
    %v1747 = vunpack.c.h.b16 %v1128
    %v1748 = vunpack.c.l.b16 %v1129
    %v1749 = vunpack.c.h.b16 %v1129
    %v1750 = vunpack.c.l.b16 %v1130
    %v1751 = vunpack.c.h.b16 %v1130
    %v1752 = vunpack.c.l.b16 %v1131
    %v1753 = vunpack.c.h.b16 %v1131
    %v1754 = vunpack.c.l.b16 %v1132
    %v1755 = vunpack.c.h.b16 %v1132
    %v1756 = vunpack.c.l.b16 %v1133
    %v1757 = vunpack.c.h.b16 %v1133
    %v1758 = vunpack.c.l.b16 %v1134
    %v1759 = vunpack.c.h.b16 %v1134
    %v1760 = vunpack.c.l.b16 %v1135
    %v1761 = vunpack.c.h.b16 %v1135
    %v1762 = vunpack.c.l.b16 %v1136
    %v1763 = vunpack.c.h.b16 %v1136
    %v1764 = vunpack.c.l.b16 %v1137
    %v1765 = vunpack.c.h.b16 %v1137
    %v1766 = vunpack.c.l.b16 %v1138
    %v1767 = vunpack.c.h.b16 %v1138
    %v1768 = vunpack.c.l.b16 %v1139
    %v1769 = vunpack.c.h.b16 %v1139
    %v1770 = vunpack.c.l.b16 %v1140
    %v1771 = vunpack.c.h.b16 %v1140
    %v1772 = vunpack.c.l.b16 %v1141
    %v1773 = vunpack.c.h.b16 %v1141
    %v1774 = vunpack.c.l.b16 %v1142
    %v1775 = vunpack.c.h.b16 %v1142
    %v1776 = vunpack.c.l.b16 %v1143
    %v1777 = vunpack.c.h.b16 %v1143
    %v1778 = vunpack.c.l.b16 %v1144
    %v1779 = vunpack.c.h.b16 %v1144
    %v1780 = vunpack.c.l.b16 %v1145
    %v1781 = vunpack.c.h.b16 %v1145
    %v1782 = vunpack.c.l.b16 %v1146
    %v1783 = vunpack.c.h.b16 %v1146
    %v1784 = vunpack.c.l.b16 %v1147
    %v1785 = vunpack.c.h.b16 %v1147
    %v1786 = vunpack.c.l.b16 %v1148
    %v1787 = vunpack.c.h.b16 %v1148
    %v1788 = vunpack.c.l.b16 %v1149
    %v1789 = vunpack.c.h.b16 %v1149
    %v1790 = vunpack.c.l.b16 %v1150
    %v1791 = vunpack.c.h.b16 %v1150
    %v1792 = vunpack.c.l.b16 %v1151
    %v1793 = vunpack.c.h.b16 %v1151
    %v1794 = vunpack.c.l.b16 %v1152
    %v1795 = vunpack.c.h.b16 %v1152
    %v1796 = vunpack.c.l.b16 %v1153
    %v1797 = vunpack.c.h.b16 %v1153
    %v1798 = vunpack.c.l.b16 %v1154
    %v1799 = vunpack.c.h.b16 %v1154
    %v1800 = vunpack.c.l.b16 %v1155
    %v1801 = vunpack.c.h.b16 %v1155
    %v1802 = vunpack.c.l.b16 %v1156
    %v1803 = vunpack.c.h.b16 %v1156
    %v1804 = vunpack.c.l.b16 %v1157
    %v1805 = vunpack.c.h.b16 %v1157
    %v1806 = vunpack.c.l.b16 %v1158
    %v1807 = vunpack.c.h.b16 %v1158
    %v1808 = vunpack.c.l.b16 %v1159
    %v1809 = vunpack.c.h.b16 %v1159
    %v1810 = vunpack.c.l.b16 %v1160
    %v1811 = vunpack.c.h.b16 %v1160
    %v1812 = vunpack.c.l.b16 %v1161
    %v1813 = vunpack.c.h.b16 %v1161
    %v1814 = vunpack.c.l.b16 %v1162
    %v1815 = vunpack.c.h.b16 %v1162
    %v1816 = vunpack.c.l.b16 %v1163
    %v1817 = vunpack.c.h.b16 %v1163
    %v1818 = vunpack.c.l.b16 %v1164
    %v1819 = vunpack.c.h.b16 %v1164
    %v1820 = vunpack.c.l.b16 %v1165
    %v1821 = vunpack.c.h.b16 %v1165
    %v1822 = vunpack.c.l.b16 %v1166
    %v1823 = vunpack.c.h.b16 %v1166
    %v1824 = vunpack.c.l.b16 %v1167
    %v1825 = vunpack.c.h.b16 %v1167
    %v1826 = vunpack.c.l.b16 %v1168
    %v1827 = vunpack.c.h.b16 %v1168
    %v1828 = vunpack.c.l.b16 %v1169
    %v1829 = vunpack.c.h.b16 %v1169
    %v1830 = vunpack.c.l.b16 %v1170
    %v1831 = vunpack.c.h.b16 %v1170
    %v1832 = vunpack.c.l.b16 %v1171
    %v1833 = vunpack.c.h.b16 %v1171
    %v1834 = vunpack.c.l.b16 %v1172
    %v1835 = vunpack.c.h.b16 %v1172
    %v1836 = vunpack.c.l.b16 %v1173
    %v1837 = vunpack.c.h.b16 %v1173
    %v1838 = vunpack.c.l.b16 %v1174
    %v1839 = vunpack.c.h.b16 %v1174
    %v1840 = vunpack.c.l.b16 %v1175
    %v1841 = vunpack.c.h.b16 %v1175
    %v1842 = vunpack.c.l.b16 %v1176
    %v1843 = vunpack.c.h.b16 %v1176
    %v1844 = vunpack.c.l.b16 %v1177
    %v1845 = vunpack.c.h.b16 %v1177
    %v1846 = vunpack.c.l.b16 %v1178
    %v1847 = vunpack.c.h.b16 %v1178
    %v1848 = vunpack.c.l.b16 %v1179
    %v1849 = vunpack.c.h.b16 %v1179
    %v1850 = vunpack.c.l.b16 %v1180
    %v1851 = vunpack.c.h.b16 %v1180
    %v1852 = vunpack.c.l.b16 %v1181
    %v1853 = vunpack.c.h.b16 %v1181
    %v1854 = vunpack.c.l.b16 %v1182
    %v1855 = vunpack.c.h.b16 %v1182
    %v1856 = vunpack.c.l.b16 %v1183
    %v1857 = vunpack.c.h.b16 %v1183
    %v1858 = vunpack.c.l.b16 %v1184
    %v1859 = vunpack.c.h.b16 %v1184
    %v1860 = vunpack.c.l.b16 %v1185
    %v1861 = vunpack.c.h.b16 %v1185
    %v1862 = vunpack.c.l.b16 %v1186
    %v1863 = vunpack.c.h.b16 %v1186
    %v1864 = vunpack.c.l.b16 %v1187
    %v1865 = vunpack.c.h.b16 %v1187
    %v1866 = vunpack.c.l.b16 %v1188
    %v1867 = vunpack.c.h.b16 %v1188
    %v1868 = vunpack.c.l.b16 %v1189
    %v1869 = vunpack.c.h.b16 %v1189
    %v1870 = vunpack.c.l.b16 %v1190
    %v1871 = vunpack.c.h.b16 %v1190
    %v1872 = vunpack.c.l.b16 %v1191
    %v1873 = vunpack.c.h.b16 %v1191
    %v1874 = vunpack.c.l.b16 %v1192
    %v1875 = vunpack.c.h.b16 %v1192
    %v1876 = vunpack.c.l.b16 %v1193
    %v1877 = vunpack.c.h.b16 %v1193
    %v1878 = vunpack.c.l.b16 %v1194
    %v1879 = vunpack.c.h.b16 %v1194
    %v1880 = vunpack.c.l.b16 %v1195
    %v1881 = vunpack.c.h.b16 %v1195
    %v1882 = vunpack.c.l.b16 %v1196
    %v1883 = vunpack.c.h.b16 %v1196
    %v1884 = vunpack.c.l.b16 %v1197
    %v1885 = vunpack.c.h.b16 %v1197
    %v1886 = vunpack.c.l.b16 %v1198
    %v1887 = vunpack.c.h.b16 %v1198
    %v1888 = vunpack.c.l.b16 %v1199
    %v1889 = vunpack.c.h.b16 %v1199
    %v1890 = vunpack.c.l.b16 %v1200
    %v1891 = vunpack.c.h.b16 %v1200
    %v1892 = vunpack.c.l.b16 %v1201
    %v1893 = vunpack.c.h.b16 %v1201
    %v1894 = vunpack.c.l.b16 %v1202
    %v1895 = vunpack.c.h.b16 %v1202
    %v1896 = vunpack.c.l.b16 %v1203
    %v1897 = vunpack.c.h.b16 %v1203
    %v1898 = vunpack.c.l.b16 %v1204
    %v1899 = vunpack.c.h.b16 %v1204
    %v1900 = vunpack.c.l.b16 %v1205
    %v1901 = vunpack.c.h.b16 %v1205
    %v1902 = vunpack.c.l.b16 %v1206
    %v1903 = vunpack.c.h.b16 %v1206
    %v1904 = vunpack.c.l.b16 %v1207
    %v1905 = vunpack.c.h.b16 %v1207
    %v1906 = vunpack.c.l.b16 %v1208
    %v1907 = vunpack.c.h.b16 %v1208
    %v1908 = vunpack.c.l.b16 %v1209
    %v1909 = vunpack.c.h.b16 %v1209
    %v1910 = vunpack.c.l.b16 %v1210
    %v1911 = vunpack.c.h.b16 %v1210
    %v1912 = vunpack.c.l.b16 %v1211
    %v1913 = vunpack.c.h.b16 %v1211
    %v1914 = vunpack.c.l.b16 %v1212
    %v1915 = vunpack.c.h.b16 %v1212
    %v1916 = vunpack.c.l.b16 %v1213
    %v1917 = vunpack.c.h.b16 %v1213
    %v1918 = vunpack.c.l.b16 %v1214
    %v1919 = vunpack.c.h.b16 %v1214
    %v1920 = vunpack.c.l.b16 %v1215
    %v1921 = vunpack.c.h.b16 %v1215
    %v1922 = vunpack.c.l.b16 %v1216
    %v1923 = vunpack.c.h.b16 %v1216
    %v1924 = vunpack.c.l.b16 %v1217
    %v1925 = vunpack.c.h.b16 %v1217
    %v1926 = vunpack.c.l.b16 %v1218
    %v1927 = vunpack.c.h.b16 %v1218
    %v1928 = vunpack.c.l.b16 %v1219
    %v1929 = vunpack.c.h.b16 %v1219
    %v1930 = vunpack.c.l.b16 %v1220
    %v1931 = vunpack.c.h.b16 %v1220
    %v1932 = vunpack.c.l.b16 %v1221
    %v1933 = vunpack.c.h.b16 %v1221
    %v1934 = vunpack.c.l.b16 %v1222
    %v1935 = vunpack.c.h.b16 %v1222
    %v1936 = vunpack.c.l.b16 %v1223
    %v1937 = vunpack.c.h.b16 %v1223
    %v1938 = vunpack.c.l.b16 %v1224
    %v1939 = vunpack.c.h.b16 %v1224
    %v1940 = vunpack.c.l.b16 %v1225
    %v1941 = vunpack.c.h.b16 %v1225
    %v1942 = vunpack.c.l.b16 %v1226
    %v1943 = vunpack.c.h.b16 %v1226
    %v1944 = vunpack.c.l.b16 %v1227
    %v1945 = vunpack.c.h.b16 %v1227
    %v1946 = vunpack.c.l.b16 %v1228
    %v1947 = vunpack.c.h.b16 %v1228
    %v1948 = vunpack.c.l.b16 %v1229
    %v1949 = vunpack.c.h.b16 %v1229
    %v1950 = vunpack.c.l.b16 %v1230
    %v1951 = vunpack.c.h.b16 %v1230
    %v1952 = vunpack.c.l.b16 %v1231
    %v1953 = vunpack.c.h.b16 %v1231
    %v1954 = vunpack.c.l.b16 %v1232
    %v1955 = vunpack.c.h.b16 %v1232
    %v1956 = vunpack.c.l.b16 %v1233
    %v1957 = vunpack.c.h.b16 %v1233
    %v1958 = vunpack.c.l.b16 %v1234
    %v1959 = vunpack.c.h.b16 %v1234
    %v1960 = vunpack.c.l.b16 %v1235
    %v1961 = vunpack.c.h.b16 %v1235
    %v1962 = vunpack.c.l.b16 %v1236
    %v1963 = vunpack.c.h.b16 %v1236
    %v1964 = vunpack.c.l.b16 %v1237
    %v1965 = vunpack.c.h.b16 %v1237
    %v1966 = vunpack.c.l.b16 %v1238
    %v1967 = vunpack.c.h.b16 %v1238
    %v1968 = vunpack.c.l.b16 %v1239
    %v1969 = vunpack.c.h.b16 %v1239
    %v1970 = vunpack.c.l.b16 %v1240
    %v1971 = vunpack.c.h.b16 %v1240
    %v1972 = vunpack.c.l.b16 %v1241
    %v1973 = vunpack.c.h.b16 %v1241
    %v1974 = vunpack.c.l.b16 %v1242
    %v1975 = vunpack.c.h.b16 %v1242
    %v1976 = vunpack.c.l.b16 %v1243
    %v1977 = vunpack.c.h.b16 %v1243
    %v1978 = vunpack.c.l.b16 %v1244
    %v1979 = vunpack.c.h.b16 %v1244
    %v1980 = vunpack.c.l.b16 %v1245
    %v1981 = vunpack.c.h.b16 %v1245
    %v1982 = vunpack.c.l.b16 %v1246
    %v1983 = vunpack.c.h.b16 %v1246
    %v1984 = vunpack.c.l.b16 %v1247
    %v1985 = vunpack.c.h.b16 %v1247
    %v1986 = vunpack.c.l.b16 %v1248
    %v1987 = vunpack.c.h.b16 %v1248
    %v1988 = vunpack.c.l.b16 %v1249
    %v1989 = vunpack.c.h.b16 %v1249
    %v1990 = vunpack.c.l.b16 %v1250
    %v1991 = vunpack.c.h.b16 %v1250
    %v1992 = vunpack.c.l.b16 %v1251
    %v1993 = vunpack.c.h.b16 %v1251
    %v1994 = vunpack.c.l.b16 %v1252
    %v1995 = vunpack.c.h.b16 %v1252
    %v1996 = vunpack.c.l.b16 %v1253
    %v1997 = vunpack.c.h.b16 %v1253
    %v1998 = vunpack.c.l.b16 %v1254
    %v1999 = vunpack.c.h.b16 %v1254
    %v2000 = vunpack.c.l.b16 %v1255
    %v2001 = vunpack.c.h.b16 %v1255
    %v2002 = vunpack.c.l.b16 %v1256
    %v2003 = vunpack.c.h.b16 %v1256
    %v2004 = vunpack.c.l.b16 %v1257
    %v2005 = vunpack.c.h.b16 %v1257
    %v2006 = vunpack.c.l.b16 %v1258
    %v2007 = vunpack.c.h.b16 %v1258
    %v2008 = vunpack.c.l.b16 %v1259
    %v2009 = vunpack.c.h.b16 %v1259
    %v2010 = vunpack.c.l.b16 %v1260
    %v2011 = vunpack.c.h.b16 %v1260
    %v2012 = vunpack.c.l.b16 %v1261
    %v2013 = vunpack.c.h.b16 %v1261
    %v2014 = vunpack.c.l.b16 %v1262
    %v2015 = vunpack.c.h.b16 %v1262
    %v2016 = vunpack.c.l.b16 %v1263
    %v2017 = vunpack.c.h.b16 %v1263
    %v2018 = vunpack.c.l.b16 %v1264
    %v2019 = vunpack.c.h.b16 %v1264
    %v2020 = vunpack.c.l.b16 %v1265
    %v2021 = vunpack.c.h.b16 %v1265
    %v2022 = vunpack.c.l.b16 %v1266
    %v2023 = vunpack.c.h.b16 %v1266
    %v2024 = vunpack.c.l.b16 %v1267
    %v2025 = vunpack.c.h.b16 %v1267
    %v2026 = vunpack.c.l.b16 %v1268
    %v2027 = vunpack.c.h.b16 %v1268
    %v2028 = vunpack.c.l.b16 %v1269
    %v2029 = vunpack.c.h.b16 %v1269
    %v2030 = vunpack.c.l.b16 %v1270
    %v2031 = vunpack.c.h.b16 %v1270
    %v2032 = vunpack.c.l.b16 %v1271
    %v2033 = vunpack.c.h.b16 %v1271
    %v2034 = vunpack.c.l.b16 %v1272
    %v2035 = vunpack.c.h.b16 %v1272
    %v2036 = vunpack.c.l.b16 %v1273
    %v2037 = vunpack.c.h.b16 %v1273
    %v2038 = vunpack.c.l.b16 %v1274
    %v2039 = vunpack.c.h.b16 %v1274
    %v2040 = vunpack.c.l.b16 %v1275
    %v2041 = vunpack.c.h.b16 %v1275
    %v2042 = vunpack.c.l.b16 %v1276
    %v2043 = vunpack.c.h.b16 %v1276
    %v2044 = vunpack.c.l.b16 %v1277
    %v2045 = vunpack.c.h.b16 %v1277
    %v2046 = vunpack.c.l.b16 %v1278
    %v2047 = vunpack.c.h.b16 %v1278
    %v2048 = vunpack.c.l.b16 %v1279
    %v2049 = vunpack.c.h.b16 %v1279
    %v2050 = vunpack.c.l.b16 %v1280
    %v2051 = vunpack.c.h.b16 %v1280
    %v2052 = vunpack.c.l.b16 %v1281
    %v2053 = vunpack.c.h.b16 %v1281
    %v2054 = vunpack.c.l.b16 %v1282
    %v2055 = vunpack.c.h.b16 %v1282
    %v2056 = vunpack.c.l.b16 %v1283
    %v2057 = vunpack.c.h.b16 %v1283
    %v2058 = vunpack.c.l.b16 %v1284
    %v2059 = vunpack.c.h.b16 %v1284
    %v2060 = vunpack.c.l.b16 %v1285
    %v2061 = vunpack.c.h.b16 %v1285
    %v2062 = vunpack.c.l.b16 %v1286
    %v2063 = vunpack.c.h.b16 %v1286
    %v2064 = vunpack.c.l.b16 %v1287
    %v2065 = vunpack.c.h.b16 %v1287
    %v2066 = vunpack.c.l.b16 %v1288
    %v2067 = vunpack.c.h.b16 %v1288
    %v2068 = vunpack.c.l.b16 %v1289
    %v2069 = vunpack.c.h.b16 %v1289
    %v2070 = vunpack.c.l.b16 %v1290
    %v2071 = vunpack.c.h.b16 %v1290
    %v2072 = vunpack.c.l.b16 %v1291
    %v2073 = vunpack.c.h.b16 %v1291
    %v2074 = vunpack.c.l.b16 %v1292
    %v2075 = vunpack.c.h.b16 %v1292
    %v2076 = vunpack.c.l.b16 %v1293
    %v2077 = vunpack.c.h.b16 %v1293
    %v2078 = vunpack.c.l.b16 %v1294
    %v2079 = vunpack.c.h.b16 %v1294
    %v2080 = vunpack.c.l.b16 %v1295
    %v2081 = vunpack.c.h.b16 %v1295
    %v2082 = vunpack.c.l.b16 %v1296
    %v2083 = vunpack.c.h.b16 %v1296
    %v2084 = vunpack.c.l.b16 %v1297
    %v2085 = vunpack.c.h.b16 %v1297
    %v2086 = vunpack.c.l.b16 %v1298
    %v2087 = vunpack.c.h.b16 %v1298
    %v2088 = vunpack.c.l.b16 %v1299
    %v2089 = vunpack.c.h.b16 %v1299
    %v2090 = vpack.c.b16 %v1582, %v1578
    %v2091 = vpack.c.b16 %v1583, %v1579
    %v2092 = vpack.c.b16 %v1584, %v1580
    %v2093 = vpack.c.b16 %v1585, %v1581
    %v2094 = vpack.c.b16 %v1590, %v1586
    %v2095 = vpack.c.b16 %v1591, %v1587
    %v2096 = vpack.c.b16 %v1592, %v1588
    %v2097 = vpack.c.b16 %v1593, %v1589
    %v2098 = vpack.c.b16 %v1598, %v1594
    %v2099 = vpack.c.b16 %v1599, %v1595
    %v2100 = vpack.c.b16 %v1600, %v1596
    %v2101 = vpack.c.b16 %v1601, %v1597
    %v2102 = vpack.c.b16 %v1606, %v1602
    %v2103 = vpack.c.b16 %v1607, %v1603
    %v2104 = vpack.c.b16 %v1608, %v1604
    %v2105 = vpack.c.b16 %v1609, %v1605
    %v2106 = vpack.c.b16 %v1614, %v1610
    %v2107 = vpack.c.b16 %v1615, %v1611
    %v2108 = vpack.c.b16 %v1616, %v1612
    %v2109 = vpack.c.b16 %v1617, %v1613
    %v2110 = vpack.c.b16 %v1622, %v1618
    %v2111 = vpack.c.b16 %v1623, %v1619
    %v2112 = vpack.c.b16 %v1624, %v1620
    %v2113 = vpack.c.b16 %v1625, %v1621
    %v2114 = vpack.c.b16 %v1630, %v1626
    %v2115 = vpack.c.b16 %v1631, %v1627
    %v2116 = vpack.c.b16 %v1632, %v1628
    %v2117 = vpack.c.b16 %v1633, %v1629
    %v2118 = vpack.c.b16 %v1638, %v1634
    %v2119 = vpack.c.b16 %v1639, %v1635
    %v2120 = vpack.c.b16 %v1640, %v1636
    %v2121 = vpack.c.b16 %v1641, %v1637
    %v2122 = vpack.c.b16 %v1646, %v1642
    %v2123 = vpack.c.b16 %v1647, %v1643
    %v2124 = vpack.c.b16 %v1648, %v1644
    %v2125 = vpack.c.b16 %v1649, %v1645
    %v2126 = vpack.c.b16 %v1654, %v1650
    %v2127 = vpack.c.b16 %v1655, %v1651
    %v2128 = vpack.c.b16 %v1656, %v1652
    %v2129 = vpack.c.b16 %v1657, %v1653
    %v2130 = vpack.c.b16 %v1662, %v1658
    %v2131 = vpack.c.b16 %v1663, %v1659
    %v2132 = vpack.c.b16 %v1664, %v1660
    %v2133 = vpack.c.b16 %v1665, %v1661
    %v2134 = vpack.c.b16 %v1670, %v1666
    %v2135 = vpack.c.b16 %v1671, %v1667
    %v2136 = vpack.c.b16 %v1672, %v1668
    %v2137 = vpack.c.b16 %v1673, %v1669
    %v2138 = vpack.c.b16 %v1678, %v1674
    %v2139 = vpack.c.b16 %v1679, %v1675
    %v2140 = vpack.c.b16 %v1680, %v1676
    %v2141 = vpack.c.b16 %v1681, %v1677
    %v2142 = vpack.c.b16 %v1686, %v1682
    %v2143 = vpack.c.b16 %v1687, %v1683
    %v2144 = vpack.c.b16 %v1688, %v1684
    %v2145 = vpack.c.b16 %v1689, %v1685
    %v2146 = vpack.c.b16 %v1694, %v1690
    %v2147 = vpack.c.b16 %v1695, %v1691
    %v2148 = vpack.c.b16 %v1696, %v1692
    %v2149 = vpack.c.b16 %v1697, %v1693
    %v2150 = vpack.c.b16 %v1702, %v1698
    %v2151 = vpack.c.b16 %v1703, %v1699
    %v2152 = vpack.c.b16 %v1704, %v1700
    %v2153 = vpack.c.b16 %v1705, %v1701
    %v2154 = vpack.c.b16 %v1710, %v1706
    %v2155 = vpack.c.b16 %v1711, %v1707
    %v2156 = vpack.c.b16 %v1712, %v1708
    %v2157 = vpack.c.b16 %v1713, %v1709
    %v2158 = vpack.c.b16 %v1718, %v1714
    %v2159 = vpack.c.b16 %v1719, %v1715
    %v2160 = vpack.c.b16 %v1720, %v1716
    %v2161 = vpack.c.b16 %v1721, %v1717
    %v2162 = vpack.c.b16 %v1726, %v1722
    %v2163 = vpack.c.b16 %v1727, %v1723
    %v2164 = vpack.c.b16 %v1728, %v1724
    %v2165 = vpack.c.b16 %v1729, %v1725
    %v2166 = vpack.c.b16 %v1734, %v1730
    %v2167 = vpack.c.b16 %v1735, %v1731
    %v2168 = vpack.c.b16 %v1736, %v1732
    %v2169 = vpack.c.b16 %v1737, %v1733
    %v2170 = vpack.c.b16 %v1742, %v1738
    %v2171 = vpack.c.b16 %v1743, %v1739
    %v2172 = vpack.c.b16 %v1744, %v1740
    %v2173 = vpack.c.b16 %v1745, %v1741
    %v2174 = vpack.c.b16 %v1750, %v1746
    %v2175 = vpack.c.b16 %v1751, %v1747
    %v2176 = vpack.c.b16 %v1752, %v1748
    %v2177 = vpack.c.b16 %v1753, %v1749
    %v2178 = vpack.c.b16 %v1758, %v1754
    %v2179 = vpack.c.b16 %v1759, %v1755
    %v2180 = vpack.c.b16 %v1760, %v1756
    %v2181 = vpack.c.b16 %v1761, %v1757
    %v2182 = vpack.c.b16 %v1766, %v1762
    %v2183 = vpack.c.b16 %v1767, %v1763
    %v2184 = vpack.c.b16 %v1768, %v1764
    %v2185 = vpack.c.b16 %v1769, %v1765
    %v2186 = vpack.c.b16 %v1774, %v1770
    %v2187 = vpack.c.b16 %v1775, %v1771
    %v2188 = vpack.c.b16 %v1776, %v1772
    %v2189 = vpack.c.b16 %v1777, %v1773
    %v2190 = vpack.c.b16 %v1782, %v1778
    %v2191 = vpack.c.b16 %v1783, %v1779
    %v2192 = vpack.c.b16 %v1784, %v1780
    %v2193 = vpack.c.b16 %v1785, %v1781
    %v2194 = vpack.c.b16 %v1790, %v1786
    %v2195 = vpack.c.b16 %v1791, %v1787
    %v2196 = vpack.c.b16 %v1792, %v1788
    %v2197 = vpack.c.b16 %v1793, %v1789
    %v2198 = vpack.c.b16 %v1798, %v1794
    %v2199 = vpack.c.b16 %v1799, %v1795
    %v2200 = vpack.c.b16 %v1800, %v1796
    %v2201 = vpack.c.b16 %v1801, %v1797
    %v2202 = vpack.c.b16 %v1806, %v1802
    %v2203 = vpack.c.b16 %v1807, %v1803
    %v2204 = vpack.c.b16 %v1808, %v1804
    %v2205 = vpack.c.b16 %v1809, %v1805
    %v2206 = vpack.c.b16 %v1814, %v1810
    %v2207 = vpack.c.b16 %v1815, %v1811
    %v2208 = vpack.c.b16 %v1816, %v1812
    %v2209 = vpack.c.b16 %v1817, %v1813
    %v2210 = vpack.c.b16 %v1822, %v1818
    %v2211 = vpack.c.b16 %v1823, %v1819
    %v2212 = vpack.c.b16 %v1824, %v1820
    %v2213 = vpack.c.b16 %v1825, %v1821
    %v2214 = vpack.c.b16 %v1830, %v1826
    %v2215 = vpack.c.b16 %v1831, %v1827
    %v2216 = vpack.c.b16 %v1832, %v1828
    %v2217 = vpack.c.b16 %v1833, %v1829
    %v2218 = vpack.c.b16 %v1838, %v1834
    %v2219 = vpack.c.b16 %v1839, %v1835
    %v2220 = vpack.c.b16 %v1840, %v1836
    %v2221 = vpack.c.b16 %v1841, %v1837
    %v2222 = vpack.c.b16 %v1846, %v1842
    %v2223 = vpack.c.b16 %v1847, %v1843
    %v2224 = vpack.c.b16 %v1848, %v1844
    %v2225 = vpack.c.b16 %v1849, %v1845
    %v2226 = vpack.c.b16 %v1854, %v1850
    %v2227 = vpack.c.b16 %v1855, %v1851
    %v2228 = vpack.c.b16 %v1856, %v1852
    %v2229 = vpack.c.b16 %v1857, %v1853
    %v2230 = vpack.c.b16 %v1862, %v1858
    %v2231 = vpack.c.b16 %v1863, %v1859
    %v2232 = vpack.c.b16 %v1864, %v1860
    %v2233 = vpack.c.b16 %v1865, %v1861
    %v2234 = vpack.c.b16 %v1870, %v1866
    %v2235 = vpack.c.b16 %v1871, %v1867
    %v2236 = vpack.c.b16 %v1872, %v1868
    %v2237 = vpack.c.b16 %v1873, %v1869
    %v2238 = vpack.c.b16 %v1878, %v1874
    %v2239 = vpack.c.b16 %v1879, %v1875
    %v2240 = vpack.c.b16 %v1880, %v1876
    %v2241 = vpack.c.b16 %v1881, %v1877
    %v2242 = vpack.c.b16 %v1886, %v1882
    %v2243 = vpack.c.b16 %v1887, %v1883
    %v2244 = vpack.c.b16 %v1888, %v1884
    %v2245 = vpack.c.b16 %v1889, %v1885
    %v2246 = vpack.c.b16 %v1894, %v1890
    %v2247 = vpack.c.b16 %v1895, %v1891
    %v2248 = vpack.c.b16 %v1896, %v1892
    %v2249 = vpack.c.b16 %v1897, %v1893
    %v2250 = vpack.c.b16 %v1902, %v1898
    %v2251 = vpack.c.b16 %v1903, %v1899
    %v2252 = vpack.c.b16 %v1904, %v1900
    %v2253 = vpack.c.b16 %v1905, %v1901
    %v2254 = vpack.c.b16 %v1910, %v1906
    %v2255 = vpack.c.b16 %v1911, %v1907
    %v2256 = vpack.c.b16 %v1912, %v1908
    %v2257 = vpack.c.b16 %v1913, %v1909
    %v2258 = vpack.c.b16 %v1918, %v1914
    %v2259 = vpack.c.b16 %v1919, %v1915
    %v2260 = vpack.c.b16 %v1920, %v1916
    %v2261 = vpack.c.b16 %v1921, %v1917
    %v2262 = vpack.c.b16 %v1926, %v1922
    %v2263 = vpack.c.b16 %v1927, %v1923
    %v2264 = vpack.c.b16 %v1928, %v1924
    %v2265 = vpack.c.b16 %v1929, %v1925
    %v2266 = vpack.c.b16 %v1934, %v1930
    %v2267 = vpack.c.b16 %v1935, %v1931
    %v2268 = vpack.c.b16 %v1936, %v1932
    %v2269 = vpack.c.b16 %v1937, %v1933
    %v2270 = vpack.c.b16 %v1942, %v1938
    %v2271 = vpack.c.b16 %v1943, %v1939
    %v2272 = vpack.c.b16 %v1944, %v1940
    %v2273 = vpack.c.b16 %v1945, %v1941
    %v2274 = vpack.c.b16 %v1950, %v1946
    %v2275 = vpack.c.b16 %v1951, %v1947
    %v2276 = vpack.c.b16 %v1952, %v1948
    %v2277 = vpack.c.b16 %v1953, %v1949
    %v2278 = vpack.c.b16 %v1958, %v1954
    %v2279 = vpack.c.b16 %v1959, %v1955
    %v2280 = vpack.c.b16 %v1960, %v1956
    %v2281 = vpack.c.b16 %v1961, %v1957
    %v2282 = vpack.c.b16 %v1966, %v1962
    %v2283 = vpack.c.b16 %v1967, %v1963
    %v2284 = vpack.c.b16 %v1968, %v1964
    %v2285 = vpack.c.b16 %v1969, %v1965
    %v2286 = vpack.c.b16 %v1974, %v1970
    %v2287 = vpack.c.b16 %v1975, %v1971
    %v2288 = vpack.c.b16 %v1976, %v1972
    %v2289 = vpack.c.b16 %v1977, %v1973
    %v2290 = vpack.c.b16 %v1982, %v1978
    %v2291 = vpack.c.b16 %v1983, %v1979
    %v2292 = vpack.c.b16 %v1984, %v1980
    %v2293 = vpack.c.b16 %v1985, %v1981
    %v2294 = vpack.c.b16 %v1990, %v1986
    %v2295 = vpack.c.b16 %v1991, %v1987
    %v2296 = vpack.c.b16 %v1992, %v1988
    %v2297 = vpack.c.b16 %v1993, %v1989
    %v2298 = vpack.c.b16 %v1998, %v1994
    %v2299 = vpack.c.b16 %v1999, %v1995
    %v2300 = vpack.c.b16 %v2000, %v1996
    %v2301 = vpack.c.b16 %v2001, %v1997
    %v2302 = vpack.c.b16 %v2006, %v2002
    %v2303 = vpack.c.b16 %v2007, %v2003
    %v2304 = vpack.c.b16 %v2008, %v2004
    %v2305 = vpack.c.b16 %v2009, %v2005
    %v2306 = vpack.c.b16 %v2014, %v2010
    %v2307 = vpack.c.b16 %v2015, %v2011
    %v2308 = vpack.c.b16 %v2016, %v2012
    %v2309 = vpack.c.b16 %v2017, %v2013
    %v2310 = vpack.c.b16 %v2022, %v2018
    %v2311 = vpack.c.b16 %v2023, %v2019
    %v2312 = vpack.c.b16 %v2024, %v2020
    %v2313 = vpack.c.b16 %v2025, %v2021
    %v2314 = vpack.c.b16 %v2030, %v2026
    %v2315 = vpack.c.b16 %v2031, %v2027
    %v2316 = vpack.c.b16 %v2032, %v2028
    %v2317 = vpack.c.b16 %v2033, %v2029
    %v2318 = vpack.c.b16 %v2038, %v2034
    %v2319 = vpack.c.b16 %v2039, %v2035
    %v2320 = vpack.c.b16 %v2040, %v2036
    %v2321 = vpack.c.b16 %v2041, %v2037
    %v2322 = vpack.c.b16 %v2046, %v2042
    %v2323 = vpack.c.b16 %v2047, %v2043
    %v2324 = vpack.c.b16 %v2048, %v2044
    %v2325 = vpack.c.b16 %v2049, %v2045
    %v2326 = vpack.c.b16 %v2054, %v2050
    %v2327 = vpack.c.b16 %v2055, %v2051
    %v2328 = vpack.c.b16 %v2056, %v2052
    %v2329 = vpack.c.b16 %v2057, %v2053
    %v2330 = vpack.c.b16 %v2062, %v2058
    %v2331 = vpack.c.b16 %v2063, %v2059
    %v2332 = vpack.c.b16 %v2064, %v2060
    %v2333 = vpack.c.b16 %v2065, %v2061
    %v2334 = vpack.c.b16 %v2070, %v2066
    %v2335 = vpack.c.b16 %v2071, %v2067
    %v2336 = vpack.c.b16 %v2072, %v2068
    %v2337 = vpack.c.b16 %v2073, %v2069
    %v2338 = vpack.c.b16 %v2078, %v2074
    %v2339 = vpack.c.b16 %v2079, %v2075
    %v2340 = vpack.c.b16 %v2080, %v2076
    %v2341 = vpack.c.b16 %v2081, %v2077
    %v2342 = vpack.c.b16 %v2086, %v2082
    %v2343 = vpack.c.b16 %v2087, %v2083
    %v2344 = vpack.c.b16 %v2088, %v2084
    %v2345 = vpack.c.b16 %v2089, %v2085
    %2602 = vmatprep.subr.bf16.mxu0 %v2119
    %2603 = vmatpush1.bf16.msra.mxu0 %v2118
    %2604 = vmatprep.subr.bf16.mxu0 %v2115
    %2605 = vmatpush1.bf16.msra.mxu0 %v2114
    %2606 = vmatprep.subr.bf16.mxu0 %v2111
    %2607 = vmatpush1.bf16.msra.mxu0 %v2110
    %2608 = vmatprep.subr.bf16.mxu0 %v2107
    %2609 = vmatpush1.bf16.msra.mxu0 %v2106
    %2610 = vmatprep.subr.bf16.mxu0 %v2103
    %2611 = vmatpush1.bf16.msra.mxu0 %v2102
    %2612 = vmatprep.subr.bf16.mxu0 %v2099
    %2613 = vmatpush1.bf16.msra.mxu0 %v2098
    %2614 = vmatprep.subr.bf16.mxu0 %v2095
    %2615 = vmatpush1.bf16.msra.mxu0 %v2094
    %2616 = vmatprep.subr.bf16.mxu0 %v2091
    %2617 = vmatpush1.bf16.msra.mxu0 %v2090
    %2618 = vmatprep.subr.bf16.mxu0 %v2151
    %2619 = vmatpush2.bf16.msra.mxu0 %v2150
    %2620 = vmatprep.subr.bf16.mxu0 %v2147
    %2621 = vmatpush2.bf16.msra.mxu0 %v2146
    %2622 = vmatprep.subr.bf16.mxu0 %v2143
    %2623 = vmatpush2.bf16.msra.mxu0 %v2142
    %2624 = vmatprep.subr.bf16.mxu0 %v2139
    %2625 = vmatpush2.bf16.msra.mxu0 %v2138
    %2626 = vmatprep.subr.bf16.mxu0 %v2135
    %2627 = vmatpush2.bf16.msra.mxu0 %v2134
    %2628 = vmatprep.subr.bf16.mxu0 %v2131
    %2629 = vmatpush2.bf16.msra.mxu0 %v2130
    %2630 = vmatprep.subr.bf16.mxu0 %v2127
    %2631 = vmatpush2.bf16.msra.mxu0 %v2126
    %2632 = vmatprep.subr.bf16.mxu0 %v2123
    %2633 = vmatpush2.bf16.msra.mxu0 %v2122
    %2634 = vmatprep.mubr.bf16.mxu0 %v1037
    %2635 = vmatmul.mubr.bf16.gmra.mxu0 %v1036
    %v2636 = vpop.f32.mrf.mxu0
    %v2637 = vadd.f32 %v1305, %v2636
    %v2638 = vpop.f32.mrf.mxu0
    %v2639 = vadd.f32 %v1309, %v2638
    %v2640 = vpop.f32.mrf.mxu0
    %v2641 = vpop.f32.mrf.mxu0
    %2642 = vdwg.mxu0
    %2643 = vmatprep.subr.bf16.mxu0 %v2183
    %2644 = vmatpush1.bf16.msra.mxu0 %v2182
    %2645 = vmatprep.subr.bf16.mxu0 %v2179
    %2646 = vmatpush1.bf16.msra.mxu0 %v2178
    %2647 = vmatprep.subr.bf16.mxu0 %v2175
    %2648 = vmatpush1.bf16.msra.mxu0 %v2174
    %2649 = vmatprep.subr.bf16.mxu0 %v2171
    %2650 = vmatpush1.bf16.msra.mxu0 %v2170
    %2651 = vmatprep.subr.bf16.mxu0 %v2167
    %2652 = vmatpush1.bf16.msra.mxu0 %v2166
    %2653 = vmatprep.subr.bf16.mxu0 %v2163
    %2654 = vmatpush1.bf16.msra.mxu0 %v2162
    %2655 = vmatprep.subr.bf16.mxu0 %v2159
    %2656 = vmatpush1.bf16.msra.mxu0 %v2158
    %2657 = vmatprep.subr.bf16.mxu0 %v2155
    %2658 = vmatpush1.bf16.msra.mxu0 %v2154
    %2659 = vmatprep.subr.bf16.mxu0 %v2215
    %2660 = vmatpush2.bf16.msra.mxu0 %v2214
    %2661 = vmatprep.subr.bf16.mxu0 %v2211
    %2662 = vmatpush2.bf16.msra.mxu0 %v2210
    %2663 = vmatprep.subr.bf16.mxu0 %v2207
    %2664 = vmatpush2.bf16.msra.mxu0 %v2206
    %2665 = vmatprep.subr.bf16.mxu0 %v2203
    %2666 = vmatpush2.bf16.msra.mxu0 %v2202
    %2667 = vmatprep.subr.bf16.mxu0 %v2199
    %2668 = vmatpush2.bf16.msra.mxu0 %v2198
    %2669 = vmatprep.subr.bf16.mxu0 %v2195
    %2670 = vmatpush2.bf16.msra.mxu0 %v2194
    %2671 = vmatprep.subr.bf16.mxu0 %v2191
    %2672 = vmatpush2.bf16.msra.mxu0 %v2190
    %2673 = vmatprep.subr.bf16.mxu0 %v2187
    %2674 = vmatpush2.bf16.msra.mxu0 %v2186
    %2675 = vmatprep.mubr.bf16.mxu0 %v1039
    %2676 = vmatmul.mubr.bf16.gmra.mxu0 %v1038
    %v2677 = vpop.f32.mrf.mxu0
    %v2678 = vadd.f32 %v2637, %v2677
    %v2679 = vpop.f32.mrf.mxu0
    %v2680 = vadd.f32 %v2639, %v2679
    %v2681 = vpop.f32.mrf.mxu0
    %v2682 = vpop.f32.mrf.mxu0
    %2683 = vdwg.mxu0
    %2684 = vmatprep.subr.bf16.mxu0 %v2247
    %2685 = vmatpush1.bf16.msra.mxu0 %v2246
    %2686 = vmatprep.subr.bf16.mxu0 %v2243
    %2687 = vmatpush1.bf16.msra.mxu0 %v2242
    %2688 = vmatprep.subr.bf16.mxu0 %v2239
    %2689 = vmatpush1.bf16.msra.mxu0 %v2238
    %2690 = vmatprep.subr.bf16.mxu0 %v2235
    %2691 = vmatpush1.bf16.msra.mxu0 %v2234
    %2692 = vmatprep.subr.bf16.mxu0 %v2231
    %2693 = vmatpush1.bf16.msra.mxu0 %v2230
    %2694 = vmatprep.subr.bf16.mxu0 %v2227
    %2695 = vmatpush1.bf16.msra.mxu0 %v2226
    %2696 = vmatprep.subr.bf16.mxu0 %v2223
    %2697 = vmatpush1.bf16.msra.mxu0 %v2222
    %2698 = vmatprep.subr.bf16.mxu0 %v2219
    %2699 = vmatpush1.bf16.msra.mxu0 %v2218
    %2700 = vmatprep.subr.bf16.mxu0 %v2279
    %2701 = vmatpush2.bf16.msra.mxu0 %v2278
    %2702 = vmatprep.subr.bf16.mxu0 %v2275
    %2703 = vmatpush2.bf16.msra.mxu0 %v2274
    %2704 = vmatprep.subr.bf16.mxu0 %v2271
    %2705 = vmatpush2.bf16.msra.mxu0 %v2270
    %2706 = vmatprep.subr.bf16.mxu0 %v2267
    %2707 = vmatpush2.bf16.msra.mxu0 %v2266
    %2708 = vmatprep.subr.bf16.mxu0 %v2263
    %2709 = vmatpush2.bf16.msra.mxu0 %v2262
    %2710 = vmatprep.subr.bf16.mxu0 %v2259
    %2711 = vmatpush2.bf16.msra.mxu0 %v2258
    %2712 = vmatprep.subr.bf16.mxu0 %v2255
    %2713 = vmatpush2.bf16.msra.mxu0 %v2254
    %2714 = vmatprep.subr.bf16.mxu0 %v2251
    %2715 = vmatpush2.bf16.msra.mxu0 %v2250
    %2716 = vmatprep.mubr.bf16.mxu0 %v1041
    %2717 = vmatmul.mubr.bf16.gmra.mxu0 %v1040
    %v2718 = vpop.f32.mrf.mxu0
    %v2719 = vadd.f32 %v2678, %v2718
    %v2720 = vpop.f32.mrf.mxu0
    %v2721 = vadd.f32 %v2680, %v2720
    %v2722 = vpop.f32.mrf.mxu0
    %v2723 = vpop.f32.mrf.mxu0
    %2724 = vdwg.mxu0
    %2725 = vmatprep.subr.bf16.mxu0 %v2311
    %2726 = vmatpush1.bf16.msra.mxu0 %v2310
    %2727 = vmatprep.subr.bf16.mxu0 %v2307
    %2728 = vmatpush1.bf16.msra.mxu0 %v2306
    %2729 = vmatprep.subr.bf16.mxu0 %v2303
    %2730 = vmatpush1.bf16.msra.mxu0 %v2302
    %2731 = vmatprep.subr.bf16.mxu0 %v2299
    %2732 = vmatpush1.bf16.msra.mxu0 %v2298
    %2733 = vmatprep.subr.bf16.mxu0 %v2295
    %2734 = vmatpush1.bf16.msra.mxu0 %v2294
    %2735 = vmatprep.subr.bf16.mxu0 %v2291
    %2736 = vmatpush1.bf16.msra.mxu0 %v2290
    %2737 = vmatprep.subr.bf16.mxu0 %v2287
    %2738 = vmatpush1.bf16.msra.mxu0 %v2286
    %2739 = vmatprep.subr.bf16.mxu0 %v2283
    %2740 = vmatpush1.bf16.msra.mxu0 %v2282
    %2741 = vmatprep.subr.bf16.mxu0 %v2343
    %2742 = vmatpush2.bf16.msra.mxu0 %v2342
    %2743 = vmatprep.subr.bf16.mxu0 %v2339
    %2744 = vmatpush2.bf16.msra.mxu0 %v2338
    %2745 = vmatprep.subr.bf16.mxu0 %v2335
    %2746 = vmatpush2.bf16.msra.mxu0 %v2334
    %2747 = vmatprep.subr.bf16.mxu0 %v2331
    %2748 = vmatpush2.bf16.msra.mxu0 %v2330
    %2749 = vmatprep.subr.bf16.mxu0 %v2327
    %2750 = vmatpush2.bf16.msra.mxu0 %v2326
    %2751 = vmatprep.subr.bf16.mxu0 %v2323
    %2752 = vmatpush2.bf16.msra.mxu0 %v2322
    %2753 = vmatprep.subr.bf16.mxu0 %v2319
    %2754 = vmatpush2.bf16.msra.mxu0 %v2318
    %2755 = vmatprep.subr.bf16.mxu0 %v2315
    %2756 = vmatpush2.bf16.msra.mxu0 %v2314
    %2757 = vmatprep.mubr.bf16.mxu0 %v1043
    %2758 = vmatmul.mubr.bf16.gmra.mxu0 %v1042
    %v2759 = vpop.f32.mrf.mxu0
    %v2760 = vadd.f32 %v2719, %v2759
    %v2761 = vpop.f32.mrf.mxu0
    %v2762 = vadd.f32 %v2721, %v2761
    %v2763 = vpop.f32.mrf.mxu0
    %v2764 = vpop.f32.mrf.mxu0
    %2765 = vdwg.mxu0
    %2766 = vmatprep.subr.bf16.mxu0 %v2121
    %2767 = vmatpush1.bf16.msra.mxu0 %v2120
    %2768 = vmatprep.subr.bf16.mxu0 %v2117
    %2769 = vmatpush1.bf16.msra.mxu0 %v2116
    %2770 = vmatprep.subr.bf16.mxu0 %v2113
    %2771 = vmatpush1.bf16.msra.mxu0 %v2112
    %2772 = vmatprep.subr.bf16.mxu0 %v2109
    %2773 = vmatpush1.bf16.msra.mxu0 %v2108
    %2774 = vmatprep.subr.bf16.mxu0 %v2105
    %2775 = vmatpush1.bf16.msra.mxu0 %v2104
    %2776 = vmatprep.subr.bf16.mxu0 %v2101
    %2777 = vmatpush1.bf16.msra.mxu0 %v2100
    %2778 = vmatprep.subr.bf16.mxu0 %v2097
    %2779 = vmatpush1.bf16.msra.mxu0 %v2096
    %2780 = vmatprep.subr.bf16.mxu0 %v2093
    %2781 = vmatpush1.bf16.msra.mxu0 %v2092
    %2782 = vmatprep.subr.bf16.mxu0 %v2153
    %2783 = vmatpush2.bf16.msra.mxu0 %v2152
    %2784 = vmatprep.subr.bf16.mxu0 %v2149
    %2785 = vmatpush2.bf16.msra.mxu0 %v2148
    %2786 = vmatprep.subr.bf16.mxu0 %v2145
    %2787 = vmatpush2.bf16.msra.mxu0 %v2144
    %2788 = vmatprep.subr.bf16.mxu0 %v2141
    %2789 = vmatpush2.bf16.msra.mxu0 %v2140
    %2790 = vmatprep.subr.bf16.mxu0 %v2137
    %2791 = vmatpush2.bf16.msra.mxu0 %v2136
    %2792 = vmatprep.subr.bf16.mxu0 %v2133
    %2793 = vmatpush2.bf16.msra.mxu0 %v2132
    %2794 = vmatprep.subr.bf16.mxu0 %v2129
    %2795 = vmatpush2.bf16.msra.mxu0 %v2128
    %2796 = vmatprep.subr.bf16.mxu0 %v2125
    %2797 = vmatpush2.bf16.msra.mxu0 %v2124
    %2798 = vmatprep.mubr.bf16.mxu0 %v1037
    %2799 = vmatmul.mubr.bf16.gmra.mxu0 %v1036
    %v2800 = vpop.f32.mrf.mxu0
    %v2801 = vadd.f32 %v1313, %v2800
    %v2802 = vpop.f32.mrf.mxu0
    %v2803 = vadd.f32 %v1317, %v2802
    %v2804 = vpop.f32.mrf.mxu0
    %v2805 = vpop.f32.mrf.mxu0
    %2806 = vdwg.mxu0
    %2807 = vmatprep.subr.bf16.mxu0 %v2185
    %2808 = vmatpush1.bf16.msra.mxu0 %v2184
    %2809 = vmatprep.subr.bf16.mxu0 %v2181
    %2810 = vmatpush1.bf16.msra.mxu0 %v2180
    %2811 = vmatprep.subr.bf16.mxu0 %v2177
    %2812 = vmatpush1.bf16.msra.mxu0 %v2176
    %2813 = vmatprep.subr.bf16.mxu0 %v2173
    %2814 = vmatpush1.bf16.msra.mxu0 %v2172
    %2815 = vmatprep.subr.bf16.mxu0 %v2169
    %2816 = vmatpush1.bf16.msra.mxu0 %v2168
    %2817 = vmatprep.subr.bf16.mxu0 %v2165
    %2818 = vmatpush1.bf16.msra.mxu0 %v2164
    %2819 = vmatprep.subr.bf16.mxu0 %v2161
    %2820 = vmatpush1.bf16.msra.mxu0 %v2160
    %2821 = vmatprep.subr.bf16.mxu0 %v2157
    %2822 = vmatpush1.bf16.msra.mxu0 %v2156
    %2823 = vmatprep.subr.bf16.mxu0 %v2217
    %2824 = vmatpush2.bf16.msra.mxu0 %v2216
    %2825 = vmatprep.subr.bf16.mxu0 %v2213
    %2826 = vmatpush2.bf16.msra.mxu0 %v2212
    %2827 = vmatprep.subr.bf16.mxu0 %v2209
    %2828 = vmatpush2.bf16.msra.mxu0 %v2208
    %2829 = vmatprep.subr.bf16.mxu0 %v2205
    %2830 = vmatpush2.bf16.msra.mxu0 %v2204
    %2831 = vmatprep.subr.bf16.mxu0 %v2201
    %2832 = vmatpush2.bf16.msra.mxu0 %v2200
    %2833 = vmatprep.subr.bf16.mxu0 %v2197
    %2834 = vmatpush2.bf16.msra.mxu0 %v2196
    %2835 = vmatprep.subr.bf16.mxu0 %v2193
    %2836 = vmatpush2.bf16.msra.mxu0 %v2192
    %2837 = vmatprep.subr.bf16.mxu0 %v2189
    %2838 = vmatpush2.bf16.msra.mxu0 %v2188
    %2839 = vmatprep.mubr.bf16.mxu0 %v1039
    %2840 = vmatmul.mubr.bf16.gmra.mxu0 %v1038
    %v2841 = vpop.f32.mrf.mxu0
    %v2842 = vadd.f32 %v2801, %v2841
    %v2843 = vpop.f32.mrf.mxu0
    %v2844 = vadd.f32 %v2803, %v2843
    %v2845 = vpop.f32.mrf.mxu0
    %v2846 = vpop.f32.mrf.mxu0
    %2847 = vdwg.mxu0
    %2848 = vmatprep.subr.bf16.mxu0 %v2249
    %2849 = vmatpush1.bf16.msra.mxu0 %v2248
    %2850 = vmatprep.subr.bf16.mxu0 %v2245
    %2851 = vmatpush1.bf16.msra.mxu0 %v2244
    %2852 = vmatprep.subr.bf16.mxu0 %v2241
    %2853 = vmatpush1.bf16.msra.mxu0 %v2240
    %2854 = vmatprep.subr.bf16.mxu0 %v2237
    %2855 = vmatpush1.bf16.msra.mxu0 %v2236
    %2856 = vmatprep.subr.bf16.mxu0 %v2233
    %2857 = vmatpush1.bf16.msra.mxu0 %v2232
    %2858 = vmatprep.subr.bf16.mxu0 %v2229
    %2859 = vmatpush1.bf16.msra.mxu0 %v2228
    %2860 = vmatprep.subr.bf16.mxu0 %v2225
    %2861 = vmatpush1.bf16.msra.mxu0 %v2224
    %2862 = vmatprep.subr.bf16.mxu0 %v2221
    %2863 = vmatpush1.bf16.msra.mxu0 %v2220
    %2864 = vmatprep.subr.bf16.mxu0 %v2281
    %2865 = vmatpush2.bf16.msra.mxu0 %v2280
    %2866 = vmatprep.subr.bf16.mxu0 %v2277
    %2867 = vmatpush2.bf16.msra.mxu0 %v2276
    %2868 = vmatprep.subr.bf16.mxu0 %v2273
    %2869 = vmatpush2.bf16.msra.mxu0 %v2272
    %2870 = vmatprep.subr.bf16.mxu0 %v2269
    %2871 = vmatpush2.bf16.msra.mxu0 %v2268
    %2872 = vmatprep.subr.bf16.mxu0 %v2265
    %2873 = vmatpush2.bf16.msra.mxu0 %v2264
    %2874 = vmatprep.subr.bf16.mxu0 %v2261
    %2875 = vmatpush2.bf16.msra.mxu0 %v2260
    %2876 = vmatprep.subr.bf16.mxu0 %v2257
    %2877 = vmatpush2.bf16.msra.mxu0 %v2256
    %2878 = vmatprep.subr.bf16.mxu0 %v2253
    %2879 = vmatpush2.bf16.msra.mxu0 %v2252
    %2880 = vmatprep.mubr.bf16.mxu0 %v1041
    %2881 = vmatmul.mubr.bf16.gmra.mxu0 %v1040
    %v2882 = vpop.f32.mrf.mxu0
    %v2883 = vadd.f32 %v2842, %v2882
    %v2884 = vpop.f32.mrf.mxu0
    %v2885 = vadd.f32 %v2844, %v2884
    %v2886 = vpop.f32.mrf.mxu0
    %v2887 = vpop.f32.mrf.mxu0
    %2888 = vdwg.mxu0
    %2889 = vmatprep.subr.bf16.mxu0 %v2313
    %2890 = vmatpush1.bf16.msra.mxu0 %v2312
    %2891 = vmatprep.subr.bf16.mxu0 %v2309
    %2892 = vmatpush1.bf16.msra.mxu0 %v2308
    %2893 = vmatprep.subr.bf16.mxu0 %v2305
    %2894 = vmatpush1.bf16.msra.mxu0 %v2304
    %2895 = vmatprep.subr.bf16.mxu0 %v2301
    %2896 = vmatpush1.bf16.msra.mxu0 %v2300
    %2897 = vmatprep.subr.bf16.mxu0 %v2297
    %2898 = vmatpush1.bf16.msra.mxu0 %v2296
    %2899 = vmatprep.subr.bf16.mxu0 %v2293
    %2900 = vmatpush1.bf16.msra.mxu0 %v2292
    %2901 = vmatprep.subr.bf16.mxu0 %v2289
    %2902 = vmatpush1.bf16.msra.mxu0 %v2288
    %2903 = vmatprep.subr.bf16.mxu0 %v2285
    %2904 = vmatpush1.bf16.msra.mxu0 %v2284
    %2905 = vmatprep.subr.bf16.mxu0 %v2345
    %2906 = vmatpush2.bf16.msra.mxu0 %v2344
    %2907 = vmatprep.subr.bf16.mxu0 %v2341
    %2908 = vmatpush2.bf16.msra.mxu0 %v2340
    %2909 = vmatprep.subr.bf16.mxu0 %v2337
    %2910 = vmatpush2.bf16.msra.mxu0 %v2336
    %2911 = vmatprep.subr.bf16.mxu0 %v2333
    %2912 = vmatpush2.bf16.msra.mxu0 %v2332
    %2913 = vmatprep.subr.bf16.mxu0 %v2329
    %2914 = vmatpush2.bf16.msra.mxu0 %v2328
    %2915 = vmatprep.subr.bf16.mxu0 %v2325
    %2916 = vmatpush2.bf16.msra.mxu0 %v2324
    %2917 = vmatprep.subr.bf16.mxu0 %v2321
    %2918 = vmatpush2.bf16.msra.mxu0 %v2320
    %2919 = vmatprep.subr.bf16.mxu0 %v2317
    %2920 = vmatpush2.bf16.msra.mxu0 %v2316
    %2921 = vmatprep.mubr.bf16.mxu0 %v1043
    %2922 = vmatmul.mubr.bf16.gmra.mxu0 %v1042
    %v2923 = vpop.f32.mrf.mxu0
    %v2924 = vadd.f32 %v2883, %v2923
    %v2925 = vpop.f32.mrf.mxu0
    %v2926 = vadd.f32 %v2885, %v2925
    %v2927 = vpop.f32.mrf.mxu0
    %v2928 = vpop.f32.mrf.mxu0
    %2929 = vdwg.mxu0
    %v2930 = vld [vmem:[%s7] sm:$0xf]
    %v2931 = vld [vmem:[%s8] sm:$0xf]
    %v2932 = vadd.f32 %v2760, %v2762
    %v2933 = vadd.f32 %v2932, %v2924
    %v2934 = vadd.f32 %v2933, %v2926
    %2935 = vadd.xlane.f32.xlu0 %v2934
    %v2936 = vpop.xlane.xlu0 %2935
    %v2937 = vmul.f32 %v2760, %v2760
    %v2938 = vmul.f32 %v2762, %v2762
    %v2939 = vmul.f32 %v2924, %v2924
    %v2940 = vmul.f32 %v2926, %v2926
    %v2941 = vadd.f32 %v2937, %v2938
    %v2942 = vadd.f32 %v2941, %v2939
    %v2943 = vadd.f32 %v2942, %v2940
    %2944 = vadd.xlane.f32.xlu0 %v2943
    %v2945 = vpop.xlane.xlu0 %2944
    %v2946 = vmul.f32 %v2936, 0.001953125
    %v2947 = vmul.f32 %v2945, 0.001953125
    %v2948 = vmul.f32 %v2946, %v2946
    %v2949 = vsub.f32 %v2947, %v2948
    %v2950 = vadd.f32 %v2949, 1e-05
    %v2951 = vrsqrt.pop %v2950
    %v2952 = vsub.f32 %v2760, %v2946
    %v2953 = vsub.f32 %v2762, %v2946
    %v2954 = vsub.f32 %v2924, %v2946
    %v2955 = vsub.f32 %v2926, %v2946
    %v2956 = vmul.f32 %v2952, %v2951
    %v2957 = vmul.f32 %v2953, %v2951
    %v2958 = vmul.f32 %v2954, %v2951
    %v2959 = vmul.f32 %v2955, %v2951
    %v2960 = vpack.c.bf16 %v2956, %v2956
    %v2961 = vpack.c.bf16 %v2957, %v2957
    %v2962 = vpack.c.bf16 %v2958, %v2958
    %v2963 = vpack.c.bf16 %v2959, %v2959
    %v2966 = vunpack.c.l.s4 1966171168
    %v2967 = vunpack.c.0.s8 %v2966
    %v2968 = vlaneseq
    %v2969 = vshrl.u32 %v2968, 7
    %v2970 = vsub.s32 %v2967, %v2969
    %v2971 = vrot.slane %v2930, %v2970
    %v2972 = vcombine.high %v2971, %v2971
    %v2974 = vunpack.c.l.s4 1966171168
    %v2975 = vunpack.c.0.s8 %v2974
    %v2976 = vlaneseq
    %v2977 = vshrl.u32 %v2976, 7
    %v2978 = vsub.s32 %v2975, %v2977
    %v2979 = vrot.slane %v2971, %v2978
    %v2981 = vunpack.c.l.s4 1966171168
    %v2982 = vunpack.c.0.s8 %v2981
    %v2983 = vlaneseq
    %v2984 = vshrl.u32 %v2983, 7
    %v2985 = vsub.s32 %v2982, %v2984
    %v2986 = vrot.slane %v2972, %v2985
    %v2987 = vcombine.high %v2979, %v2979
    %v2988 = vcombine.high %v2986, %v2986
    %v2990 = vpack.i.b16 %v2979, %v2979
    %v2992 = vlaneseq
    %v2993 = vshrl.u32 %v2992, 7
    %v2994 = vsub.s32 0, %v2993
    %v2995 = vrot.slane %v2990, %v2994
    %v2997 = vpack.i.b16 %v2986, %v2986
    %v2999 = vlaneseq
    %v3000 = vshrl.u32 %v2999, 7
    %v3001 = vsub.s32 0, %v3000
    %v3002 = vrot.slane %v2997, %v3001
    %v3004 = vpack.i.b16 %v2987, %v2987
    %v3006 = vlaneseq
    %v3007 = vshrl.u32 %v3006, 7
    %v3008 = vsub.s32 0, %v3007
    %v3009 = vrot.slane %v3004, %v3008
    %v3011 = vpack.i.b16 %v2988, %v2988
    %v3013 = vlaneseq
    %v3014 = vshrl.u32 %v3013, 7
    %v3015 = vsub.s32 0, %v3014
    %v3016 = vrot.slane %v3011, %v3015
    %v3017 = vmul.bf16 %v2960, %v2995
    %v3018 = vmul.bf16 %v2961, %v3002
    %v3019 = vmul.bf16 %v2962, %v3009
    %v3020 = vmul.bf16 %v2963, %v3016
    %v3023 = vunpack.c.l.s4 1966171168
    %v3024 = vunpack.c.0.s8 %v3023
    %v3025 = vlaneseq
    %v3026 = vshrl.u32 %v3025, 7
    %v3027 = vsub.s32 %v3024, %v3026
    %v3028 = vrot.slane %v2931, %v3027
    %v3029 = vcombine.high %v3028, %v3028
    %v3031 = vunpack.c.l.s4 1966171168
    %v3032 = vunpack.c.0.s8 %v3031
    %v3033 = vlaneseq
    %v3034 = vshrl.u32 %v3033, 7
    %v3035 = vsub.s32 %v3032, %v3034
    %v3036 = vrot.slane %v3028, %v3035
    %v3038 = vunpack.c.l.s4 1966171168
    %v3039 = vunpack.c.0.s8 %v3038
    %v3040 = vlaneseq
    %v3041 = vshrl.u32 %v3040, 7
    %v3042 = vsub.s32 %v3039, %v3041
    %v3043 = vrot.slane %v3029, %v3042
    %v3044 = vcombine.high %v3036, %v3036
    %v3045 = vcombine.high %v3043, %v3043
    %v3047 = vpack.i.b16 %v3036, %v3036
    %v3049 = vlaneseq
    %v3050 = vshrl.u32 %v3049, 7
    %v3051 = vsub.s32 0, %v3050
    %v3052 = vrot.slane %v3047, %v3051
    %v3054 = vpack.i.b16 %v3043, %v3043
    %v3056 = vlaneseq
    %v3057 = vshrl.u32 %v3056, 7
    %v3058 = vsub.s32 0, %v3057
    %v3059 = vrot.slane %v3054, %v3058
    %v3061 = vpack.i.b16 %v3044, %v3044
    %v3063 = vlaneseq
    %v3064 = vshrl.u32 %v3063, 7
    %v3065 = vsub.s32 0, %v3064
    %v3066 = vrot.slane %v3061, %v3065
    %v3068 = vpack.i.b16 %v3045, %v3045
    %v3070 = vlaneseq
    %v3071 = vshrl.u32 %v3070, 7
    %v3072 = vsub.s32 0, %v3071
    %v3073 = vrot.slane %v3068, %v3072
    %v3074 = vadd.bf16 %v3017, %v3052
    %v3075 = vadd.bf16 %v3018, %v3059
    %v3076 = vadd.bf16 %v3019, %v3066
    %v3077 = vadd.bf16 %v3020, %v3073
    %v3078 = vmax.bf16 %v3074, 0
    %v3079 = vmax.bf16 %v3075, 0
    %v3080 = vmax.bf16 %v3076, 0
    %v3081 = vmax.bf16 %v3077, 0
    %v3082 = vld [vmem:[#allocation13] sm:$0xff]
    %v3083 = vld [vmem:[#allocation13 + $0x8] sm:$0xff]
    %v3084 = vld [vmem:[#allocation13 + $0x10] sm:$0xff]
    %v3085 = vld [vmem:[#allocation13 + $0x18] sm:$0xff]
    %v3086 = vld [vmem:[#allocation13 + $0x20] sm:$0xff]
    %v3087 = vld [vmem:[#allocation13 + $0x28] sm:$0xff]
    %v3088 = vld [vmem:[#allocation13 + $0x30] sm:$0xff]
    %v3089 = vld [vmem:[#allocation13 + $0x38] sm:$0xff]
    %v3090 = vld [vmem:[#allocation13 + $0x40] sm:$0xff]
    %v3091 = vld [vmem:[#allocation13 + $0x48] sm:$0xff]
    %v3092 = vld [vmem:[#allocation13 + $0x50] sm:$0xff]
    %v3093 = vld [vmem:[#allocation13 + $0x58] sm:$0xff]
    %v3094 = vld [vmem:[#allocation13 + $0x60] sm:$0xff]
    %v3095 = vld [vmem:[#allocation13 + $0x68] sm:$0xff]
    %v3096 = vld [vmem:[#allocation13 + $0x70] sm:$0xff]
    %v3097 = vld [vmem:[#allocation13 + $0x78] sm:$0xff]
    %v3098 = vld [vmem:[#allocation13 + $0x80] sm:$0xff]
    %v3099 = vld [vmem:[#allocation13 + $0x88] sm:$0xff]
    %v3100 = vld [vmem:[#allocation13 + $0x90] sm:$0xff]
    %v3101 = vld [vmem:[#allocation13 + $0x98] sm:$0xff]
    %v3102 = vld [vmem:[#allocation13 + $0xa0] sm:$0xff]
    %v3103 = vld [vmem:[#allocation13 + $0xa8] sm:$0xff]
    %v3104 = vld [vmem:[#allocation13 + $0xb0] sm:$0xff]
    %v3105 = vld [vmem:[#allocation13 + $0xb8] sm:$0xff]
    %v3106 = vld [vmem:[#allocation13 + $0xc0] sm:$0xff]
    %v3107 = vld [vmem:[#allocation13 + $0xc8] sm:$0xff]
    %v3108 = vld [vmem:[#allocation13 + $0xd0] sm:$0xff]
    %v3109 = vld [vmem:[#allocation13 + $0xd8] sm:$0xff]
    %v3110 = vld [vmem:[#allocation13 + $0xe0] sm:$0xff]
    %v3111 = vld [vmem:[#allocation13 + $0xe8] sm:$0xff]
    %v3112 = vld [vmem:[#allocation13 + $0xf0] sm:$0xff]
    %v3113 = vld [vmem:[#allocation13 + $0xf8] sm:$0xff]
    %v3114 = vld [vmem:[#allocation13 + $0x100] sm:$0xff]
    %v3115 = vld [vmem:[#allocation13 + $0x108] sm:$0xff]
    %v3116 = vld [vmem:[#allocation13 + $0x110] sm:$0xff]
    %v3117 = vld [vmem:[#allocation13 + $0x118] sm:$0xff]
    %v3118 = vld [vmem:[#allocation13 + $0x120] sm:$0xff]
    %v3119 = vld [vmem:[#allocation13 + $0x128] sm:$0xff]
    %v3120 = vld [vmem:[#allocation13 + $0x130] sm:$0xff]
    %v3121 = vld [vmem:[#allocation13 + $0x138] sm:$0xff]
    %v3122 = vld [vmem:[#allocation13 + $0x140] sm:$0xff]
    %v3123 = vld [vmem:[#allocation13 + $0x148] sm:$0xff]
    %v3124 = vld [vmem:[#allocation13 + $0x150] sm:$0xff]
    %v3125 = vld [vmem:[#allocation13 + $0x158] sm:$0xff]
    %v3126 = vld [vmem:[#allocation13 + $0x160] sm:$0xff]
    %v3127 = vld [vmem:[#allocation13 + $0x168] sm:$0xff]
    %v3128 = vld [vmem:[#allocation13 + $0x170] sm:$0xff]
    %v3129 = vld [vmem:[#allocation13 + $0x178] sm:$0xff]
    %v3130 = vld [vmem:[#allocation13 + $0x180] sm:$0xff]
    %v3131 = vld [vmem:[#allocation13 + $0x188] sm:$0xff]
    %v3132 = vld [vmem:[#allocation13 + $0x190] sm:$0xff]
    %v3133 = vld [vmem:[#allocation13 + $0x198] sm:$0xff]
    %v3134 = vld [vmem:[#allocation13 + $0x1a0] sm:$0xff]
    %v3135 = vld [vmem:[#allocation13 + $0x1a8] sm:$0xff]
    %v3136 = vld [vmem:[#allocation13 + $0x1b0] sm:$0xff]
    %v3137 = vld [vmem:[#allocation13 + $0x1b8] sm:$0xff]
    %v3138 = vld [vmem:[#allocation13 + $0x1c0] sm:$0xff]
    %v3139 = vld [vmem:[#allocation13 + $0x1c8] sm:$0xff]
    %v3140 = vld [vmem:[#allocation13 + $0x1d0] sm:$0xff]
    %v3141 = vld [vmem:[#allocation13 + $0x1d8] sm:$0xff]
    %v3142 = vld [vmem:[#allocation13 + $0x1e0] sm:$0xff]
    %v3143 = vld [vmem:[#allocation13 + $0x1e8] sm:$0xff]
    %v3144 = vld [vmem:[#allocation13 + $0x1f0] sm:$0xff]
    %v3145 = vld [vmem:[#allocation13 + $0x1f8] sm:$0xff]
    %v3146 = vld [vmem:[#allocation13 + $0x200] sm:$0xff]
    %v3147 = vld [vmem:[#allocation13 + $0x208] sm:$0xff]
    %v3148 = vld [vmem:[#allocation13 + $0x210] sm:$0xff]
    %v3149 = vld [vmem:[#allocation13 + $0x218] sm:$0xff]
    %v3150 = vld [vmem:[#allocation13 + $0x220] sm:$0xff]
    %v3151 = vld [vmem:[#allocation13 + $0x228] sm:$0xff]
    %v3152 = vld [vmem:[#allocation13 + $0x230] sm:$0xff]
    %v3153 = vld [vmem:[#allocation13 + $0x238] sm:$0xff]
    %v3154 = vld [vmem:[#allocation13 + $0x240] sm:$0xff]
    %v3155 = vld [vmem:[#allocation13 + $0x248] sm:$0xff]
    %v3156 = vld [vmem:[#allocation13 + $0x250] sm:$0xff]
    %v3157 = vld [vmem:[#allocation13 + $0x258] sm:$0xff]
    %v3158 = vld [vmem:[#allocation13 + $0x260] sm:$0xff]
    %v3159 = vld [vmem:[#allocation13 + $0x268] sm:$0xff]
    %v3160 = vld [vmem:[#allocation13 + $0x270] sm:$0xff]
    %v3161 = vld [vmem:[#allocation13 + $0x278] sm:$0xff]
    %v3162 = vld [vmem:[#allocation13 + $0x280] sm:$0xff]
    %v3163 = vld [vmem:[#allocation13 + $0x288] sm:$0xff]
    %v3164 = vld [vmem:[#allocation13 + $0x290] sm:$0xff]
    %v3165 = vld [vmem:[#allocation13 + $0x298] sm:$0xff]
    %v3166 = vld [vmem:[#allocation13 + $0x2a0] sm:$0xff]
    %v3167 = vld [vmem:[#allocation13 + $0x2a8] sm:$0xff]
    %v3168 = vld [vmem:[#allocation13 + $0x2b0] sm:$0xff]
    %v3169 = vld [vmem:[#allocation13 + $0x2b8] sm:$0xff]
    %v3170 = vld [vmem:[#allocation13 + $0x2c0] sm:$0xff]
    %v3171 = vld [vmem:[#allocation13 + $0x2c8] sm:$0xff]
    %v3172 = vld [vmem:[#allocation13 + $0x2d0] sm:$0xff]
    %v3173 = vld [vmem:[#allocation13 + $0x2d8] sm:$0xff]
    %v3174 = vld [vmem:[#allocation13 + $0x2e0] sm:$0xff]
    %v3175 = vld [vmem:[#allocation13 + $0x2e8] sm:$0xff]
    %v3176 = vld [vmem:[#allocation13 + $0x2f0] sm:$0xff]
    %v3177 = vld [vmem:[#allocation13 + $0x2f8] sm:$0xff]
    %v3178 = vld [vmem:[#allocation13 + $0x300] sm:$0xff]
    %v3179 = vld [vmem:[#allocation13 + $0x308] sm:$0xff]
    %v3180 = vld [vmem:[#allocation13 + $0x310] sm:$0xff]
    %v3181 = vld [vmem:[#allocation13 + $0x318] sm:$0xff]
    %v3182 = vld [vmem:[#allocation13 + $0x320] sm:$0xff]
    %v3183 = vld [vmem:[#allocation13 + $0x328] sm:$0xff]
    %v3184 = vld [vmem:[#allocation13 + $0x330] sm:$0xff]
    %v3185 = vld [vmem:[#allocation13 + $0x338] sm:$0xff]
    %v3186 = vld [vmem:[#allocation13 + $0x340] sm:$0xff]
    %v3187 = vld [vmem:[#allocation13 + $0x348] sm:$0xff]
    %v3188 = vld [vmem:[#allocation13 + $0x350] sm:$0xff]
    %v3189 = vld [vmem:[#allocation13 + $0x358] sm:$0xff]
    %v3190 = vld [vmem:[#allocation13 + $0x360] sm:$0xff]
    %v3191 = vld [vmem:[#allocation13 + $0x368] sm:$0xff]
    %v3192 = vld [vmem:[#allocation13 + $0x370] sm:$0xff]
    %v3193 = vld [vmem:[#allocation13 + $0x378] sm:$0xff]
    %v3194 = vld [vmem:[#allocation13 + $0x380] sm:$0xff]
    %v3195 = vld [vmem:[#allocation13 + $0x388] sm:$0xff]
    %v3196 = vld [vmem:[#allocation13 + $0x390] sm:$0xff]
    %v3197 = vld [vmem:[#allocation13 + $0x398] sm:$0xff]
    %v3198 = vld [vmem:[#allocation13 + $0x3a0] sm:$0xff]
    %v3199 = vld [vmem:[#allocation13 + $0x3a8] sm:$0xff]
    %v3200 = vld [vmem:[#allocation13 + $0x3b0] sm:$0xff]
    %v3201 = vld [vmem:[#allocation13 + $0x3b8] sm:$0xff]
    %v3202 = vld [vmem:[#allocation13 + $0x3c0] sm:$0xff]
    %v3203 = vld [vmem:[#allocation13 + $0x3c8] sm:$0xff]
    %v3204 = vld [vmem:[#allocation13 + $0x3d0] sm:$0xff]
    %v3205 = vld [vmem:[#allocation13 + $0x3d8] sm:$0xff]
    %v3206 = vld [vmem:[#allocation13 + $0x3e0] sm:$0xff]
    %v3207 = vld [vmem:[#allocation13 + $0x3e8] sm:$0xff]
    %v3208 = vld [vmem:[#allocation13 + $0x3f0] sm:$0xff]
    %v3209 = vld [vmem:[#allocation13 + $0x3f8] sm:$0xff]
    %v3210 = vld [vmem:[%s10] sm:$0xf]
    %v3212 = vlaneseq
    %v3213 = vshrl.u32 %v3212, 7
    %v3214 = vsub.s32 0, %v3213
    %v3215 = vrot.slane %v3210, %v3214
    %v3216 = vlaneseq
    %v3217 = vshrl.u32 %v3216, 7
    %v3218 = vsub.s32 1, %v3217
    %v3219 = vrot.slane %v3210, %v3218
    %v3220 = vlaneseq
    %v3221 = vshrl.u32 %v3220, 7
    %v3222 = vsub.s32 2, %v3221
    %v3223 = vrot.slane %v3210, %v3222
    %v3224 = vlaneseq
    %v3225 = vshrl.u32 %v3224, 7
    %v3226 = vsub.s32 3, %v3225
    %v3227 = vrot.slane %v3210, %v3226
    %v3360 = vunpack.c.l.b16 %v3082
    %v3361 = vunpack.c.h.b16 %v3082
    %v3362 = vunpack.c.l.b16 %v3083
    %v3363 = vunpack.c.h.b16 %v3083
    %v3364 = vunpack.c.l.b16 %v3084
    %v3365 = vunpack.c.h.b16 %v3084
    %v3366 = vunpack.c.l.b16 %v3085
    %v3367 = vunpack.c.h.b16 %v3085
    %v3368 = vunpack.c.l.b16 %v3086
    %v3369 = vunpack.c.h.b16 %v3086
    %v3370 = vunpack.c.l.b16 %v3087
    %v3371 = vunpack.c.h.b16 %v3087
    %v3372 = vunpack.c.l.b16 %v3088
    %v3373 = vunpack.c.h.b16 %v3088
    %v3374 = vunpack.c.l.b16 %v3089
    %v3375 = vunpack.c.h.b16 %v3089
    %v3376 = vunpack.c.l.b16 %v3090
    %v3377 = vunpack.c.h.b16 %v3090
    %v3378 = vunpack.c.l.b16 %v3091
    %v3379 = vunpack.c.h.b16 %v3091
    %v3380 = vunpack.c.l.b16 %v3092
    %v3381 = vunpack.c.h.b16 %v3092
    %v3382 = vunpack.c.l.b16 %v3093
    %v3383 = vunpack.c.h.b16 %v3093
    %v3384 = vunpack.c.l.b16 %v3094
    %v3385 = vunpack.c.h.b16 %v3094
    %v3386 = vunpack.c.l.b16 %v3095
    %v3387 = vunpack.c.h.b16 %v3095
    %v3388 = vunpack.c.l.b16 %v3096
    %v3389 = vunpack.c.h.b16 %v3096
    %v3390 = vunpack.c.l.b16 %v3097
    %v3391 = vunpack.c.h.b16 %v3097
    %v3392 = vunpack.c.l.b16 %v3098
    %v3393 = vunpack.c.h.b16 %v3098
    %v3394 = vunpack.c.l.b16 %v3099
    %v3395 = vunpack.c.h.b16 %v3099
    %v3396 = vunpack.c.l.b16 %v3100
    %v3397 = vunpack.c.h.b16 %v3100
    %v3398 = vunpack.c.l.b16 %v3101
    %v3399 = vunpack.c.h.b16 %v3101
    %v3400 = vunpack.c.l.b16 %v3102
    %v3401 = vunpack.c.h.b16 %v3102
    %v3402 = vunpack.c.l.b16 %v3103
    %v3403 = vunpack.c.h.b16 %v3103
    %v3404 = vunpack.c.l.b16 %v3104
    %v3405 = vunpack.c.h.b16 %v3104
    %v3406 = vunpack.c.l.b16 %v3105
    %v3407 = vunpack.c.h.b16 %v3105
    %v3408 = vunpack.c.l.b16 %v3106
    %v3409 = vunpack.c.h.b16 %v3106
    %v3410 = vunpack.c.l.b16 %v3107
    %v3411 = vunpack.c.h.b16 %v3107
    %v3412 = vunpack.c.l.b16 %v3108
    %v3413 = vunpack.c.h.b16 %v3108
    %v3414 = vunpack.c.l.b16 %v3109
    %v3415 = vunpack.c.h.b16 %v3109
    %v3416 = vunpack.c.l.b16 %v3110
    %v3417 = vunpack.c.h.b16 %v3110
    %v3418 = vunpack.c.l.b16 %v3111
    %v3419 = vunpack.c.h.b16 %v3111
    %v3420 = vunpack.c.l.b16 %v3112
    %v3421 = vunpack.c.h.b16 %v3112
    %v3422 = vunpack.c.l.b16 %v3113
    %v3423 = vunpack.c.h.b16 %v3113
    %v3424 = vunpack.c.l.b16 %v3114
    %v3425 = vunpack.c.h.b16 %v3114
    %v3426 = vunpack.c.l.b16 %v3115
    %v3427 = vunpack.c.h.b16 %v3115
    %v3428 = vunpack.c.l.b16 %v3116
    %v3429 = vunpack.c.h.b16 %v3116
    %v3430 = vunpack.c.l.b16 %v3117
    %v3431 = vunpack.c.h.b16 %v3117
    %v3432 = vunpack.c.l.b16 %v3118
    %v3433 = vunpack.c.h.b16 %v3118
    %v3434 = vunpack.c.l.b16 %v3119
    %v3435 = vunpack.c.h.b16 %v3119
    %v3436 = vunpack.c.l.b16 %v3120
    %v3437 = vunpack.c.h.b16 %v3120
    %v3438 = vunpack.c.l.b16 %v3121
    %v3439 = vunpack.c.h.b16 %v3121
    %v3440 = vunpack.c.l.b16 %v3122
    %v3441 = vunpack.c.h.b16 %v3122
    %v3442 = vunpack.c.l.b16 %v3123
    %v3443 = vunpack.c.h.b16 %v3123
    %v3444 = vunpack.c.l.b16 %v3124
    %v3445 = vunpack.c.h.b16 %v3124
    %v3446 = vunpack.c.l.b16 %v3125
    %v3447 = vunpack.c.h.b16 %v3125
    %v3448 = vunpack.c.l.b16 %v3126
    %v3449 = vunpack.c.h.b16 %v3126
    %v3450 = vunpack.c.l.b16 %v3127
    %v3451 = vunpack.c.h.b16 %v3127
    %v3452 = vunpack.c.l.b16 %v3128
    %v3453 = vunpack.c.h.b16 %v3128
    %v3454 = vunpack.c.l.b16 %v3129
    %v3455 = vunpack.c.h.b16 %v3129
    %v3456 = vunpack.c.l.b16 %v3130
    %v3457 = vunpack.c.h.b16 %v3130
    %v3458 = vunpack.c.l.b16 %v3131
    %v3459 = vunpack.c.h.b16 %v3131
    %v3460 = vunpack.c.l.b16 %v3132
    %v3461 = vunpack.c.h.b16 %v3132
    %v3462 = vunpack.c.l.b16 %v3133
    %v3463 = vunpack.c.h.b16 %v3133
    %v3464 = vunpack.c.l.b16 %v3134
    %v3465 = vunpack.c.h.b16 %v3134
    %v3466 = vunpack.c.l.b16 %v3135
    %v3467 = vunpack.c.h.b16 %v3135
    %v3468 = vunpack.c.l.b16 %v3136
    %v3469 = vunpack.c.h.b16 %v3136
    %v3470 = vunpack.c.l.b16 %v3137
    %v3471 = vunpack.c.h.b16 %v3137
    %v3472 = vunpack.c.l.b16 %v3138
    %v3473 = vunpack.c.h.b16 %v3138
    %v3474 = vunpack.c.l.b16 %v3139
    %v3475 = vunpack.c.h.b16 %v3139
    %v3476 = vunpack.c.l.b16 %v3140
    %v3477 = vunpack.c.h.b16 %v3140
    %v3478 = vunpack.c.l.b16 %v3141
    %v3479 = vunpack.c.h.b16 %v3141
    %v3480 = vunpack.c.l.b16 %v3142
    %v3481 = vunpack.c.h.b16 %v3142
    %v3482 = vunpack.c.l.b16 %v3143
    %v3483 = vunpack.c.h.b16 %v3143
    %v3484 = vunpack.c.l.b16 %v3144
    %v3485 = vunpack.c.h.b16 %v3144
    %v3486 = vunpack.c.l.b16 %v3145
    %v3487 = vunpack.c.h.b16 %v3145
    %v3488 = vunpack.c.l.b16 %v3146
    %v3489 = vunpack.c.h.b16 %v3146
    %v3490 = vunpack.c.l.b16 %v3147
    %v3491 = vunpack.c.h.b16 %v3147
    %v3492 = vunpack.c.l.b16 %v3148
    %v3493 = vunpack.c.h.b16 %v3148
    %v3494 = vunpack.c.l.b16 %v3149
    %v3495 = vunpack.c.h.b16 %v3149
    %v3496 = vunpack.c.l.b16 %v3150
    %v3497 = vunpack.c.h.b16 %v3150
    %v3498 = vunpack.c.l.b16 %v3151
    %v3499 = vunpack.c.h.b16 %v3151
    %v3500 = vunpack.c.l.b16 %v3152
    %v3501 = vunpack.c.h.b16 %v3152
    %v3502 = vunpack.c.l.b16 %v3153
    %v3503 = vunpack.c.h.b16 %v3153
    %v3504 = vunpack.c.l.b16 %v3154
    %v3505 = vunpack.c.h.b16 %v3154
    %v3506 = vunpack.c.l.b16 %v3155
    %v3507 = vunpack.c.h.b16 %v3155
    %v3508 = vunpack.c.l.b16 %v3156
    %v3509 = vunpack.c.h.b16 %v3156
    %v3510 = vunpack.c.l.b16 %v3157
    %v3511 = vunpack.c.h.b16 %v3157
    %v3512 = vunpack.c.l.b16 %v3158
    %v3513 = vunpack.c.h.b16 %v3158
    %v3514 = vunpack.c.l.b16 %v3159
    %v3515 = vunpack.c.h.b16 %v3159
    %v3516 = vunpack.c.l.b16 %v3160
    %v3517 = vunpack.c.h.b16 %v3160
    %v3518 = vunpack.c.l.b16 %v3161
    %v3519 = vunpack.c.h.b16 %v3161
    %v3520 = vunpack.c.l.b16 %v3162
    %v3521 = vunpack.c.h.b16 %v3162
    %v3522 = vunpack.c.l.b16 %v3163
    %v3523 = vunpack.c.h.b16 %v3163
    %v3524 = vunpack.c.l.b16 %v3164
    %v3525 = vunpack.c.h.b16 %v3164
    %v3526 = vunpack.c.l.b16 %v3165
    %v3527 = vunpack.c.h.b16 %v3165
    %v3528 = vunpack.c.l.b16 %v3166
    %v3529 = vunpack.c.h.b16 %v3166
    %v3530 = vunpack.c.l.b16 %v3167
    %v3531 = vunpack.c.h.b16 %v3167
    %v3532 = vunpack.c.l.b16 %v3168
    %v3533 = vunpack.c.h.b16 %v3168
    %v3534 = vunpack.c.l.b16 %v3169
    %v3535 = vunpack.c.h.b16 %v3169
    %v3536 = vunpack.c.l.b16 %v3170
    %v3537 = vunpack.c.h.b16 %v3170
    %v3538 = vunpack.c.l.b16 %v3171
    %v3539 = vunpack.c.h.b16 %v3171
    %v3540 = vunpack.c.l.b16 %v3172
    %v3541 = vunpack.c.h.b16 %v3172
    %v3542 = vunpack.c.l.b16 %v3173
    %v3543 = vunpack.c.h.b16 %v3173
    %v3544 = vunpack.c.l.b16 %v3174
    %v3545 = vunpack.c.h.b16 %v3174
    %v3546 = vunpack.c.l.b16 %v3175
    %v3547 = vunpack.c.h.b16 %v3175
    %v3548 = vunpack.c.l.b16 %v3176
    %v3549 = vunpack.c.h.b16 %v3176
    %v3550 = vunpack.c.l.b16 %v3177
    %v3551 = vunpack.c.h.b16 %v3177
    %v3552 = vunpack.c.l.b16 %v3178
    %v3553 = vunpack.c.h.b16 %v3178
    %v3554 = vunpack.c.l.b16 %v3179
    %v3555 = vunpack.c.h.b16 %v3179
    %v3556 = vunpack.c.l.b16 %v3180
    %v3557 = vunpack.c.h.b16 %v3180
    %v3558 = vunpack.c.l.b16 %v3181
    %v3559 = vunpack.c.h.b16 %v3181
    %v3560 = vunpack.c.l.b16 %v3182
    %v3561 = vunpack.c.h.b16 %v3182
    %v3562 = vunpack.c.l.b16 %v3183
    %v3563 = vunpack.c.h.b16 %v3183
    %v3564 = vunpack.c.l.b16 %v3184
    %v3565 = vunpack.c.h.b16 %v3184
    %v3566 = vunpack.c.l.b16 %v3185
    %v3567 = vunpack.c.h.b16 %v3185
    %v3568 = vunpack.c.l.b16 %v3186
    %v3569 = vunpack.c.h.b16 %v3186
    %v3570 = vunpack.c.l.b16 %v3187
    %v3571 = vunpack.c.h.b16 %v3187
    %v3572 = vunpack.c.l.b16 %v3188
    %v3573 = vunpack.c.h.b16 %v3188
    %v3574 = vunpack.c.l.b16 %v3189
    %v3575 = vunpack.c.h.b16 %v3189
    %v3576 = vunpack.c.l.b16 %v3190
    %v3577 = vunpack.c.h.b16 %v3190
    %v3578 = vunpack.c.l.b16 %v3191
    %v3579 = vunpack.c.h.b16 %v3191
    %v3580 = vunpack.c.l.b16 %v3192
    %v3581 = vunpack.c.h.b16 %v3192
    %v3582 = vunpack.c.l.b16 %v3193
    %v3583 = vunpack.c.h.b16 %v3193
    %v3584 = vunpack.c.l.b16 %v3194
    %v3585 = vunpack.c.h.b16 %v3194
    %v3586 = vunpack.c.l.b16 %v3195
    %v3587 = vunpack.c.h.b16 %v3195
    %v3588 = vunpack.c.l.b16 %v3196
    %v3589 = vunpack.c.h.b16 %v3196
    %v3590 = vunpack.c.l.b16 %v3197
    %v3591 = vunpack.c.h.b16 %v3197
    %v3592 = vunpack.c.l.b16 %v3198
    %v3593 = vunpack.c.h.b16 %v3198
    %v3594 = vunpack.c.l.b16 %v3199
    %v3595 = vunpack.c.h.b16 %v3199
    %v3596 = vunpack.c.l.b16 %v3200
    %v3597 = vunpack.c.h.b16 %v3200
    %v3598 = vunpack.c.l.b16 %v3201
    %v3599 = vunpack.c.h.b16 %v3201
    %v3600 = vunpack.c.l.b16 %v3202
    %v3601 = vunpack.c.h.b16 %v3202
    %v3602 = vunpack.c.l.b16 %v3203
    %v3603 = vunpack.c.h.b16 %v3203
    %v3604 = vunpack.c.l.b16 %v3204
    %v3605 = vunpack.c.h.b16 %v3204
    %v3606 = vunpack.c.l.b16 %v3205
    %v3607 = vunpack.c.h.b16 %v3205
    %v3608 = vunpack.c.l.b16 %v3206
    %v3609 = vunpack.c.h.b16 %v3206
    %v3610 = vunpack.c.l.b16 %v3207
    %v3611 = vunpack.c.h.b16 %v3207
    %v3612 = vunpack.c.l.b16 %v3208
    %v3613 = vunpack.c.h.b16 %v3208
    %v3614 = vunpack.c.l.b16 %v3209
    %v3615 = vunpack.c.h.b16 %v3209
    %v3616 = vpack.c.b16 %v3364, %v3360
    %v3617 = vpack.c.b16 %v3365, %v3361
    %v3618 = vpack.c.b16 %v3366, %v3362
    %v3619 = vpack.c.b16 %v3367, %v3363
    %v3620 = vpack.c.b16 %v3372, %v3368
    %v3621 = vpack.c.b16 %v3373, %v3369
    %v3622 = vpack.c.b16 %v3374, %v3370
    %v3623 = vpack.c.b16 %v3375, %v3371
    %v3624 = vpack.c.b16 %v3380, %v3376
    %v3625 = vpack.c.b16 %v3381, %v3377
    %v3626 = vpack.c.b16 %v3382, %v3378
    %v3627 = vpack.c.b16 %v3383, %v3379
    %v3628 = vpack.c.b16 %v3388, %v3384
    %v3629 = vpack.c.b16 %v3389, %v3385
    %v3630 = vpack.c.b16 %v3390, %v3386
    %v3631 = vpack.c.b16 %v3391, %v3387
    %v3632 = vpack.c.b16 %v3396, %v3392
    %v3633 = vpack.c.b16 %v3397, %v3393
    %v3634 = vpack.c.b16 %v3398, %v3394
    %v3635 = vpack.c.b16 %v3399, %v3395
    %v3636 = vpack.c.b16 %v3404, %v3400
    %v3637 = vpack.c.b16 %v3405, %v3401
    %v3638 = vpack.c.b16 %v3406, %v3402
    %v3639 = vpack.c.b16 %v3407, %v3403
    %v3640 = vpack.c.b16 %v3412, %v3408
    %v3641 = vpack.c.b16 %v3413, %v3409
    %v3642 = vpack.c.b16 %v3414, %v3410
    %v3643 = vpack.c.b16 %v3415, %v3411
    %v3644 = vpack.c.b16 %v3420, %v3416
    %v3645 = vpack.c.b16 %v3421, %v3417
    %v3646 = vpack.c.b16 %v3422, %v3418
    %v3647 = vpack.c.b16 %v3423, %v3419
    %v3648 = vpack.c.b16 %v3428, %v3424
    %v3649 = vpack.c.b16 %v3429, %v3425
    %v3650 = vpack.c.b16 %v3430, %v3426
    %v3651 = vpack.c.b16 %v3431, %v3427
    %v3652 = vpack.c.b16 %v3436, %v3432
    %v3653 = vpack.c.b16 %v3437, %v3433
    %v3654 = vpack.c.b16 %v3438, %v3434
    %v3655 = vpack.c.b16 %v3439, %v3435
    %v3656 = vpack.c.b16 %v3444, %v3440
    %v3657 = vpack.c.b16 %v3445, %v3441
    %v3658 = vpack.c.b16 %v3446, %v3442
    %v3659 = vpack.c.b16 %v3447, %v3443
    %v3660 = vpack.c.b16 %v3452, %v3448
    %v3661 = vpack.c.b16 %v3453, %v3449
    %v3662 = vpack.c.b16 %v3454, %v3450
    %v3663 = vpack.c.b16 %v3455, %v3451
    %v3664 = vpack.c.b16 %v3460, %v3456
    %v3665 = vpack.c.b16 %v3461, %v3457
    %v3666 = vpack.c.b16 %v3462, %v3458
    %v3667 = vpack.c.b16 %v3463, %v3459
    %v3668 = vpack.c.b16 %v3468, %v3464
    %v3669 = vpack.c.b16 %v3469, %v3465
    %v3670 = vpack.c.b16 %v3470, %v3466
    %v3671 = vpack.c.b16 %v3471, %v3467
    %v3672 = vpack.c.b16 %v3476, %v3472
    %v3673 = vpack.c.b16 %v3477, %v3473
    %v3674 = vpack.c.b16 %v3478, %v3474
    %v3675 = vpack.c.b16 %v3479, %v3475
    %v3676 = vpack.c.b16 %v3484, %v3480
    %v3677 = vpack.c.b16 %v3485, %v3481
    %v3678 = vpack.c.b16 %v3486, %v3482
    %v3679 = vpack.c.b16 %v3487, %v3483
    %v3680 = vpack.c.b16 %v3492, %v3488
    %v3681 = vpack.c.b16 %v3493, %v3489
    %v3682 = vpack.c.b16 %v3494, %v3490
    %v3683 = vpack.c.b16 %v3495, %v3491
    %v3684 = vpack.c.b16 %v3500, %v3496
    %v3685 = vpack.c.b16 %v3501, %v3497
    %v3686 = vpack.c.b16 %v3502, %v3498
    %v3687 = vpack.c.b16 %v3503, %v3499
    %v3688 = vpack.c.b16 %v3508, %v3504
    %v3689 = vpack.c.b16 %v3509, %v3505
    %v3690 = vpack.c.b16 %v3510, %v3506
    %v3691 = vpack.c.b16 %v3511, %v3507
    %v3692 = vpack.c.b16 %v3516, %v3512
    %v3693 = vpack.c.b16 %v3517, %v3513
    %v3694 = vpack.c.b16 %v3518, %v3514
    %v3695 = vpack.c.b16 %v3519, %v3515
    %v3696 = vpack.c.b16 %v3524, %v3520
    %v3697 = vpack.c.b16 %v3525, %v3521
    %v3698 = vpack.c.b16 %v3526, %v3522
    %v3699 = vpack.c.b16 %v3527, %v3523
    %v3700 = vpack.c.b16 %v3532, %v3528
    %v3701 = vpack.c.b16 %v3533, %v3529
    %v3702 = vpack.c.b16 %v3534, %v3530
    %v3703 = vpack.c.b16 %v3535, %v3531
    %v3704 = vpack.c.b16 %v3540, %v3536
    %v3705 = vpack.c.b16 %v3541, %v3537
    %v3706 = vpack.c.b16 %v3542, %v3538
    %v3707 = vpack.c.b16 %v3543, %v3539
    %v3708 = vpack.c.b16 %v3548, %v3544
    %v3709 = vpack.c.b16 %v3549, %v3545
    %v3710 = vpack.c.b16 %v3550, %v3546
    %v3711 = vpack.c.b16 %v3551, %v3547
    %v3712 = vpack.c.b16 %v3556, %v3552
    %v3713 = vpack.c.b16 %v3557, %v3553
    %v3714 = vpack.c.b16 %v3558, %v3554
    %v3715 = vpack.c.b16 %v3559, %v3555
    %v3716 = vpack.c.b16 %v3564, %v3560
    %v3717 = vpack.c.b16 %v3565, %v3561
    %v3718 = vpack.c.b16 %v3566, %v3562
    %v3719 = vpack.c.b16 %v3567, %v3563
    %v3720 = vpack.c.b16 %v3572, %v3568
    %v3721 = vpack.c.b16 %v3573, %v3569
    %v3722 = vpack.c.b16 %v3574, %v3570
    %v3723 = vpack.c.b16 %v3575, %v3571
    %v3724 = vpack.c.b16 %v3580, %v3576
    %v3725 = vpack.c.b16 %v3581, %v3577
    %v3726 = vpack.c.b16 %v3582, %v3578
    %v3727 = vpack.c.b16 %v3583, %v3579
    %v3728 = vpack.c.b16 %v3588, %v3584
    %v3729 = vpack.c.b16 %v3589, %v3585
    %v3730 = vpack.c.b16 %v3590, %v3586
    %v3731 = vpack.c.b16 %v3591, %v3587
    %v3732 = vpack.c.b16 %v3596, %v3592
    %v3733 = vpack.c.b16 %v3597, %v3593
    %v3734 = vpack.c.b16 %v3598, %v3594
    %v3735 = vpack.c.b16 %v3599, %v3595
    %v3736 = vpack.c.b16 %v3604, %v3600
    %v3737 = vpack.c.b16 %v3605, %v3601
    %v3738 = vpack.c.b16 %v3606, %v3602
    %v3739 = vpack.c.b16 %v3607, %v3603
    %v3740 = vpack.c.b16 %v3612, %v3608
    %v3741 = vpack.c.b16 %v3613, %v3609
    %v3742 = vpack.c.b16 %v3614, %v3610
    %v3743 = vpack.c.b16 %v3615, %v3611
    %3872 = vmatprep.subr.bf16.mxu0 %v3645
    %3873 = vmatpush1.bf16.msra.mxu0 %v3644
    %3874 = vmatprep.subr.bf16.mxu0 %v3641
    %3875 = vmatpush1.bf16.msra.mxu0 %v3640
    %3876 = vmatprep.subr.bf16.mxu0 %v3637
    %3877 = vmatpush1.bf16.msra.mxu0 %v3636
    %3878 = vmatprep.subr.bf16.mxu0 %v3633
    %3879 = vmatpush1.bf16.msra.mxu0 %v3632
    %3880 = vmatprep.subr.bf16.mxu0 %v3629
    %3881 = vmatpush1.bf16.msra.mxu0 %v3628
    %3882 = vmatprep.subr.bf16.mxu0 %v3625
    %3883 = vmatpush1.bf16.msra.mxu0 %v3624
    %3884 = vmatprep.subr.bf16.mxu0 %v3621
    %3885 = vmatpush1.bf16.msra.mxu0 %v3620
    %3886 = vmatprep.subr.bf16.mxu0 %v3617
    %3887 = vmatpush1.bf16.msra.mxu0 %v3616
    %3888 = vmatprep.subr.bf16.mxu0 %v3677
    %3889 = vmatpush2.bf16.msra.mxu0 %v3676
    %3890 = vmatprep.subr.bf16.mxu0 %v3673
    %3891 = vmatpush2.bf16.msra.mxu0 %v3672
    %3892 = vmatprep.subr.bf16.mxu0 %v3669
    %3893 = vmatpush2.bf16.msra.mxu0 %v3668
    %3894 = vmatprep.subr.bf16.mxu0 %v3665
    %3895 = vmatpush2.bf16.msra.mxu0 %v3664
    %3896 = vmatprep.subr.bf16.mxu0 %v3661
    %3897 = vmatpush2.bf16.msra.mxu0 %v3660
    %3898 = vmatprep.subr.bf16.mxu0 %v3657
    %3899 = vmatpush2.bf16.msra.mxu0 %v3656
    %3900 = vmatprep.subr.bf16.mxu0 %v3653
    %3901 = vmatpush2.bf16.msra.mxu0 %v3652
    %3902 = vmatprep.subr.bf16.mxu0 %v3649
    %3903 = vmatpush2.bf16.msra.mxu0 %v3648
    %3904 = vmatprep.mubr.bf16.mxu0 %v3079
    %3905 = vmatmul.mubr.bf16.gmra.mxu0 %v3078
    %v3906 = vpop.f32.mrf.mxu0
    %v3907 = vadd.f32 %v3215, %v3906
    %v3908 = vpop.f32.mrf.mxu0
    %v3909 = vadd.f32 %v3219, %v3908
    %v3910 = vpop.f32.mrf.mxu0
    %v3911 = vpop.f32.mrf.mxu0
    %3912 = vdwg.mxu0
    %3913 = vmatprep.subr.bf16.mxu0 %v3709
    %3914 = vmatpush1.bf16.msra.mxu0 %v3708
    %3915 = vmatprep.subr.bf16.mxu0 %v3705
    %3916 = vmatpush1.bf16.msra.mxu0 %v3704
    %3917 = vmatprep.subr.bf16.mxu0 %v3701
    %3918 = vmatpush1.bf16.msra.mxu0 %v3700
    %3919 = vmatprep.subr.bf16.mxu0 %v3697
    %3920 = vmatpush1.bf16.msra.mxu0 %v3696
    %3921 = vmatprep.subr.bf16.mxu0 %v3693
    %3922 = vmatpush1.bf16.msra.mxu0 %v3692
    %3923 = vmatprep.subr.bf16.mxu0 %v3689
    %3924 = vmatpush1.bf16.msra.mxu0 %v3688
    %3925 = vmatprep.subr.bf16.mxu0 %v3685
    %3926 = vmatpush1.bf16.msra.mxu0 %v3684
    %3927 = vmatprep.subr.bf16.mxu0 %v3681
    %3928 = vmatpush1.bf16.msra.mxu0 %v3680
    %3929 = vmatprep.subr.bf16.mxu0 %v3741
    %3930 = vmatpush2.bf16.msra.mxu0 %v3740
    %3931 = vmatprep.subr.bf16.mxu0 %v3737
    %3932 = vmatpush2.bf16.msra.mxu0 %v3736
    %3933 = vmatprep.subr.bf16.mxu0 %v3733
    %3934 = vmatpush2.bf16.msra.mxu0 %v3732
    %3935 = vmatprep.subr.bf16.mxu0 %v3729
    %3936 = vmatpush2.bf16.msra.mxu0 %v3728
    %3937 = vmatprep.subr.bf16.mxu0 %v3725
    %3938 = vmatpush2.bf16.msra.mxu0 %v3724
    %3939 = vmatprep.subr.bf16.mxu0 %v3721
    %3940 = vmatpush2.bf16.msra.mxu0 %v3720
    %3941 = vmatprep.subr.bf16.mxu0 %v3717
    %3942 = vmatpush2.bf16.msra.mxu0 %v3716
    %3943 = vmatprep.subr.bf16.mxu0 %v3713
    %3944 = vmatpush2.bf16.msra.mxu0 %v3712
    %3945 = vmatprep.mubr.bf16.mxu0 %v3081
    %3946 = vmatmul.mubr.bf16.gmra.mxu0 %v3080
    %v3947 = vpop.f32.mrf.mxu0
    %v3948 = vadd.f32 %v3907, %v3947
    %v3949 = vpop.f32.mrf.mxu0
    %v3950 = vadd.f32 %v3909, %v3949
    %v3951 = vpop.f32.mrf.mxu0
    %v3952 = vpop.f32.mrf.mxu0
    %3953 = vdwg.mxu0
    %3954 = vmatprep.subr.bf16.mxu0 %v3647
    %3955 = vmatpush1.bf16.msra.mxu0 %v3646
    %3956 = vmatprep.subr.bf16.mxu0 %v3643
    %3957 = vmatpush1.bf16.msra.mxu0 %v3642
    %3958 = vmatprep.subr.bf16.mxu0 %v3639
    %3959 = vmatpush1.bf16.msra.mxu0 %v3638
    %3960 = vmatprep.subr.bf16.mxu0 %v3635
    %3961 = vmatpush1.bf16.msra.mxu0 %v3634
    %3962 = vmatprep.subr.bf16.mxu0 %v3631
    %3963 = vmatpush1.bf16.msra.mxu0 %v3630
    %3964 = vmatprep.subr.bf16.mxu0 %v3627
    %3965 = vmatpush1.bf16.msra.mxu0 %v3626
    %3966 = vmatprep.subr.bf16.mxu0 %v3623
    %3967 = vmatpush1.bf16.msra.mxu0 %v3622
    %3968 = vmatprep.subr.bf16.mxu0 %v3619
    %3969 = vmatpush1.bf16.msra.mxu0 %v3618
    %3970 = vmatprep.subr.bf16.mxu0 %v3679
    %3971 = vmatpush2.bf16.msra.mxu0 %v3678
    %3972 = vmatprep.subr.bf16.mxu0 %v3675
    %3973 = vmatpush2.bf16.msra.mxu0 %v3674
    %3974 = vmatprep.subr.bf16.mxu0 %v3671
    %3975 = vmatpush2.bf16.msra.mxu0 %v3670
    %3976 = vmatprep.subr.bf16.mxu0 %v3667
    %3977 = vmatpush2.bf16.msra.mxu0 %v3666
    %3978 = vmatprep.subr.bf16.mxu0 %v3663
    %3979 = vmatpush2.bf16.msra.mxu0 %v3662
    %3980 = vmatprep.subr.bf16.mxu0 %v3659
    %3981 = vmatpush2.bf16.msra.mxu0 %v3658
    %3982 = vmatprep.subr.bf16.mxu0 %v3655
    %3983 = vmatpush2.bf16.msra.mxu0 %v3654
    %3984 = vmatprep.subr.bf16.mxu0 %v3651
    %3985 = vmatpush2.bf16.msra.mxu0 %v3650
    %3986 = vmatprep.mubr.bf16.mxu0 %v3079
    %3987 = vmatmul.mubr.bf16.gmra.mxu0 %v3078
    %v3988 = vpop.f32.mrf.mxu0
    %v3989 = vadd.f32 %v3223, %v3988
    %v3990 = vpop.f32.mrf.mxu0
    %v3991 = vadd.f32 %v3227, %v3990
    %v3992 = vpop.f32.mrf.mxu0
    %v3993 = vpop.f32.mrf.mxu0
    %3994 = vdwg.mxu0
    %3995 = vmatprep.subr.bf16.mxu0 %v3711
    %3996 = vmatpush1.bf16.msra.mxu0 %v3710
    %3997 = vmatprep.subr.bf16.mxu0 %v3707
    %3998 = vmatpush1.bf16.msra.mxu0 %v3706
    %3999 = vmatprep.subr.bf16.mxu0 %v3703
    %4000 = vmatpush1.bf16.msra.mxu0 %v3702
    %4001 = vmatprep.subr.bf16.mxu0 %v3699
    %4002 = vmatpush1.bf16.msra.mxu0 %v3698
    %4003 = vmatprep.subr.bf16.mxu0 %v3695
    %4004 = vmatpush1.bf16.msra.mxu0 %v3694
    %4005 = vmatprep.subr.bf16.mxu0 %v3691
    %4006 = vmatpush1.bf16.msra.mxu0 %v3690
    %4007 = vmatprep.subr.bf16.mxu0 %v3687
    %4008 = vmatpush1.bf16.msra.mxu0 %v3686
    %4009 = vmatprep.subr.bf16.mxu0 %v3683
    %4010 = vmatpush1.bf16.msra.mxu0 %v3682
    %4011 = vmatprep.subr.bf16.mxu0 %v3743
    %4012 = vmatpush2.bf16.msra.mxu0 %v3742
    %4013 = vmatprep.subr.bf16.mxu0 %v3739
    %4014 = vmatpush2.bf16.msra.mxu0 %v3738
    %4015 = vmatprep.subr.bf16.mxu0 %v3735
    %4016 = vmatpush2.bf16.msra.mxu0 %v3734
    %4017 = vmatprep.subr.bf16.mxu0 %v3731
    %4018 = vmatpush2.bf16.msra.mxu0 %v3730
    %4019 = vmatprep.subr.bf16.mxu0 %v3727
    %4020 = vmatpush2.bf16.msra.mxu0 %v3726
    %4021 = vmatprep.subr.bf16.mxu0 %v3723
    %4022 = vmatpush2.bf16.msra.mxu0 %v3722
    %4023 = vmatprep.subr.bf16.mxu0 %v3719
    %4024 = vmatpush2.bf16.msra.mxu0 %v3718
    %4025 = vmatprep.subr.bf16.mxu0 %v3715
    %4026 = vmatpush2.bf16.msra.mxu0 %v3714
    %4027 = vmatprep.mubr.bf16.mxu0 %v3081
    %4028 = vmatmul.mubr.bf16.gmra.mxu0 %v3080
    %v4029 = vpop.f32.mrf.mxu0
    %v4030 = vadd.f32 %v3989, %v4029
    %v4031 = vpop.f32.mrf.mxu0
    %v4032 = vadd.f32 %v3991, %v4031
    %v4033 = vpop.f32.mrf.mxu0
    %v4034 = vpop.f32.mrf.mxu0
    %4035 = vdwg.mxu0
    %v4036 = vld [vmem:[%s11] sm:$0x3]
    %v4037 = vld [vmem:[%s12] sm:$0x3]
    %v4038 = vadd.f32 %v3948, %v3950
    %4039 = vadd.xlane.f32.xlu0 %v4038
    %v4040 = vpop.xlane.xlu0 %4039
    %v4041 = vmul.f32 %v3948, %v3948
    %v4042 = vmul.f32 %v3950, %v3950
    %v4043 = vadd.f32 %v4041, %v4042
    %4044 = vadd.xlane.f32.xlu0 %v4043
    %v4045 = vpop.xlane.xlu0 %4044
    %v4046 = vmul.f32 %v4040, 0.00390625
    %v4047 = vmul.f32 %v4045, 0.00390625
    %v4048 = vmul.f32 %v4046, %v4046
    %v4049 = vsub.f32 %v4047, %v4048
    %v4050 = vadd.f32 %v4049, 1e-05
    %v4051 = vrsqrt.pop %v4050
    %v4052 = vsub.f32 %v3948, %v4046
    %v4053 = vsub.f32 %v3950, %v4046
    %v4054 = vmul.f32 %v4052, %v4051
    %v4055 = vmul.f32 %v4053, %v4051
    %v4056 = vpack.c.bf16 %v4054, %v4054
    %v4057 = vpack.c.bf16 %v4055, %v4055
    %v4060 = vunpack.c.l.s4 1966171168
    %v4061 = vunpack.c.0.s8 %v4060
    %v4062 = vlaneseq
    %v4063 = vshrl.u32 %v4062, 7
    %v4064 = vsub.s32 %v4061, %v4063
    %v4065 = vrot.slane %v4036, %v4064
    %v4066 = vcombine.high %v4065, %v4065
    %v4068 = vunpack.c.l.s4 1966171168
    %v4069 = vunpack.c.0.s8 %v4068
    %v4070 = vlaneseq
    %v4071 = vshrl.u32 %v4070, 7
    %v4072 = vsub.s32 %v4069, %v4071
    %v4073 = vrot.slane %v4065, %v4072
    %v4075 = vunpack.c.l.s4 1966171168
    %v4076 = vunpack.c.0.s8 %v4075
    %v4077 = vlaneseq
    %v4078 = vshrl.u32 %v4077, 7
    %v4079 = vsub.s32 %v4076, %v4078
    %v4080 = vrot.slane %v4066, %v4079
    %v4082 = vpack.i.b16 %v4073, %v4073
    %v4084 = vlaneseq
    %v4085 = vshrl.u32 %v4084, 7
    %v4086 = vsub.s32 0, %v4085
    %v4087 = vrot.slane %v4082, %v4086
    %v4089 = vpack.i.b16 %v4080, %v4080
    %v4091 = vlaneseq
    %v4092 = vshrl.u32 %v4091, 7
    %v4093 = vsub.s32 0, %v4092
    %v4094 = vrot.slane %v4089, %v4093
    %v4095 = vmul.bf16 %v4056, %v4087
    %v4096 = vmul.bf16 %v4057, %v4094
    %v4099 = vunpack.c.l.s4 1966171168
    %v4100 = vunpack.c.0.s8 %v4099
    %v4101 = vlaneseq
    %v4102 = vshrl.u32 %v4101, 7
    %v4103 = vsub.s32 %v4100, %v4102
    %v4104 = vrot.slane %v4037, %v4103
    %v4105 = vcombine.high %v4104, %v4104
    %v4107 = vunpack.c.l.s4 1966171168
    %v4108 = vunpack.c.0.s8 %v4107
    %v4109 = vlaneseq
    %v4110 = vshrl.u32 %v4109, 7
    %v4111 = vsub.s32 %v4108, %v4110
    %v4112 = vrot.slane %v4104, %v4111
    %v4114 = vunpack.c.l.s4 1966171168
    %v4115 = vunpack.c.0.s8 %v4114
    %v4116 = vlaneseq
    %v4117 = vshrl.u32 %v4116, 7
    %v4118 = vsub.s32 %v4115, %v4117
    %v4119 = vrot.slane %v4105, %v4118
    %v4121 = vpack.i.b16 %v4112, %v4112
    %v4123 = vlaneseq
    %v4124 = vshrl.u32 %v4123, 7
    %v4125 = vsub.s32 0, %v4124
    %v4126 = vrot.slane %v4121, %v4125
    %v4128 = vpack.i.b16 %v4119, %v4119
    %v4130 = vlaneseq
    %v4131 = vshrl.u32 %v4130, 7
    %v4132 = vsub.s32 0, %v4131
    %v4133 = vrot.slane %v4128, %v4132
    %v4134 = vadd.bf16 %v4095, %v4126
    %v4135 = vadd.bf16 %v4096, %v4133
    %v4136 = vmax.bf16 %v4134, 0
    %v4137 = vmax.bf16 %v4135, 0
    %v4138 = vld [vmem:[%s13] sm:$0x3]
    %v4139 = vld [vmem:[%s14] sm:$0x3]
    %v4140 = vadd.f32 %v4030, %v4032
    %4141 = vadd.xlane.f32.xlu0 %v4140
    %v4142 = vpop.xlane.xlu0 %4141
    %v4143 = vmul.f32 %v4030, %v4030
    %v4144 = vmul.f32 %v4032, %v4032
    %v4145 = vadd.f32 %v4143, %v4144
    %4146 = vadd.xlane.f32.xlu0 %v4145
    %v4147 = vpop.xlane.xlu0 %4146
    %v4148 = vmul.f32 %v4142, 0.00390625
    %v4149 = vmul.f32 %v4147, 0.00390625
    %v4150 = vmul.f32 %v4148, %v4148
    %v4151 = vsub.f32 %v4149, %v4150
    %v4152 = vadd.f32 %v4151, 1e-05
    %v4153 = vrsqrt.pop %v4152
    %v4154 = vsub.f32 %v4030, %v4148
    %v4155 = vsub.f32 %v4032, %v4148
    %v4156 = vmul.f32 %v4154, %v4153
    %v4157 = vmul.f32 %v4155, %v4153
    %v4158 = vpack.c.bf16 %v4156, %v4156
    %v4159 = vpack.c.bf16 %v4157, %v4157
    %v4162 = vunpack.c.l.s4 1966171168
    %v4163 = vunpack.c.0.s8 %v4162
    %v4164 = vlaneseq
    %v4165 = vshrl.u32 %v4164, 7
    %v4166 = vsub.s32 %v4163, %v4165
    %v4167 = vrot.slane %v4138, %v4166
    %v4168 = vcombine.high %v4167, %v4167
    %v4170 = vunpack.c.l.s4 1966171168
    %v4171 = vunpack.c.0.s8 %v4170
    %v4172 = vlaneseq
    %v4173 = vshrl.u32 %v4172, 7
    %v4174 = vsub.s32 %v4171, %v4173
    %v4175 = vrot.slane %v4167, %v4174
    %v4177 = vunpack.c.l.s4 1966171168
    %v4178 = vunpack.c.0.s8 %v4177
    %v4179 = vlaneseq
    %v4180 = vshrl.u32 %v4179, 7
    %v4181 = vsub.s32 %v4178, %v4180
    %v4182 = vrot.slane %v4168, %v4181
    %v4184 = vpack.i.b16 %v4175, %v4175
    %v4186 = vlaneseq
    %v4187 = vshrl.u32 %v4186, 7
    %v4188 = vsub.s32 0, %v4187
    %v4189 = vrot.slane %v4184, %v4188
    %v4191 = vpack.i.b16 %v4182, %v4182
    %v4193 = vlaneseq
    %v4194 = vshrl.u32 %v4193, 7
    %v4195 = vsub.s32 0, %v4194
    %v4196 = vrot.slane %v4191, %v4195
    %v4197 = vmul.bf16 %v4158, %v4189
    %v4198 = vmul.bf16 %v4159, %v4196
    %v4201 = vunpack.c.l.s4 1966171168
    %v4202 = vunpack.c.0.s8 %v4201
    %v4203 = vlaneseq
    %v4204 = vshrl.u32 %v4203, 7
    %v4205 = vsub.s32 %v4202, %v4204
    %v4206 = vrot.slane %v4139, %v4205
    %v4207 = vcombine.high %v4206, %v4206
    %v4209 = vunpack.c.l.s4 1966171168
    %v4210 = vunpack.c.0.s8 %v4209
    %v4211 = vlaneseq
    %v4212 = vshrl.u32 %v4211, 7
    %v4213 = vsub.s32 %v4210, %v4212
    %v4214 = vrot.slane %v4206, %v4213
    %v4216 = vunpack.c.l.s4 1966171168
    %v4217 = vunpack.c.0.s8 %v4216
    %v4218 = vlaneseq
    %v4219 = vshrl.u32 %v4218, 7
    %v4220 = vsub.s32 %v4217, %v4219
    %v4221 = vrot.slane %v4207, %v4220
    %v4223 = vpack.i.b16 %v4214, %v4214
    %v4225 = vlaneseq
    %v4226 = vshrl.u32 %v4225, 7
    %v4227 = vsub.s32 0, %v4226
    %v4228 = vrot.slane %v4223, %v4227
    %v4230 = vpack.i.b16 %v4221, %v4221
    %v4232 = vlaneseq
    %v4233 = vshrl.u32 %v4232, 7
    %v4234 = vsub.s32 0, %v4233
    %v4235 = vrot.slane %v4230, %v4234
    %v4236 = vadd.bf16 %v4197, %v4228
    %v4237 = vadd.bf16 %v4198, %v4235
    %v4238 = vmax.bf16 %v4236, 0
    %v4239 = vmax.bf16 %v4237, 0
    %v4240 = vld [vmem:[#allocation14] sm:$0xf]
    %v4241 = vld [vmem:[#allocation14 + $0x4] sm:$0xf]
    %v4242 = vld [vmem:[#allocation14 + $0x8] sm:$0xf]
    %v4243 = vld [vmem:[#allocation14 + $0xc] sm:$0xf]
    %v4244 = vld [vmem:[#allocation14 + $0x10] sm:$0xf]
    %v4245 = vld [vmem:[#allocation14 + $0x14] sm:$0xf]
    %v4246 = vld [vmem:[#allocation14 + $0x18] sm:$0xf]
    %v4247 = vld [vmem:[#allocation14 + $0x1c] sm:$0xf]
    %v4248 = vld [vmem:[#allocation14 + $0x20] sm:$0xf]
    %v4249 = vld [vmem:[#allocation14 + $0x24] sm:$0xf]
    %v4250 = vld [vmem:[#allocation14 + $0x28] sm:$0xf]
    %v4251 = vld [vmem:[#allocation14 + $0x2c] sm:$0xf]
    %v4252 = vld [vmem:[#allocation14 + $0x30] sm:$0xf]
    %v4253 = vld [vmem:[#allocation14 + $0x34] sm:$0xf]
    %v4254 = vld [vmem:[#allocation14 + $0x38] sm:$0xf]
    %v4255 = vld [vmem:[#allocation14 + $0x3c] sm:$0xf]
    %v4256 = vld [vmem:[#allocation14 + $0x40] sm:$0xf]
    %v4257 = vld [vmem:[#allocation14 + $0x44] sm:$0xf]
    %v4258 = vld [vmem:[#allocation14 + $0x48] sm:$0xf]
    %v4259 = vld [vmem:[#allocation14 + $0x4c] sm:$0xf]
    %v4260 = vld [vmem:[#allocation14 + $0x50] sm:$0xf]
    %v4261 = vld [vmem:[#allocation14 + $0x54] sm:$0xf]
    %v4262 = vld [vmem:[#allocation14 + $0x58] sm:$0xf]
    %v4263 = vld [vmem:[#allocation14 + $0x5c] sm:$0xf]
    %v4264 = vld [vmem:[#allocation14 + $0x60] sm:$0xf]
    %v4265 = vld [vmem:[#allocation14 + $0x64] sm:$0xf]
    %v4266 = vld [vmem:[#allocation14 + $0x68] sm:$0xf]
    %v4267 = vld [vmem:[#allocation14 + $0x6c] sm:$0xf]
    %v4268 = vld [vmem:[#allocation14 + $0x70] sm:$0xf]
    %v4269 = vld [vmem:[#allocation14 + $0x74] sm:$0xf]
    %v4270 = vld [vmem:[#allocation14 + $0x78] sm:$0xf]
    %v4271 = vld [vmem:[#allocation14 + $0x7c] sm:$0xf]
    %v4272 = vld [vmem:[#allocation14 + $0x80] sm:$0xf]
    %v4273 = vld [vmem:[#allocation14 + $0x84] sm:$0xf]
    %v4274 = vld [vmem:[#allocation14 + $0x88] sm:$0xf]
    %v4275 = vld [vmem:[#allocation14 + $0x8c] sm:$0xf]
    %v4276 = vld [vmem:[#allocation14 + $0x90] sm:$0xf]
    %v4277 = vld [vmem:[#allocation14 + $0x94] sm:$0xf]
    %v4278 = vld [vmem:[#allocation14 + $0x98] sm:$0xf]
    %v4279 = vld [vmem:[#allocation14 + $0x9c] sm:$0xf]
    %v4280 = vld [vmem:[#allocation14 + $0xa0] sm:$0xf]
    %v4281 = vld [vmem:[#allocation14 + $0xa4] sm:$0xf]
    %v4282 = vld [vmem:[#allocation14 + $0xa8] sm:$0xf]
    %v4283 = vld [vmem:[#allocation14 + $0xac] sm:$0xf]
    %v4284 = vld [vmem:[#allocation14 + $0xb0] sm:$0xf]
    %v4285 = vld [vmem:[#allocation14 + $0xb4] sm:$0xf]
    %v4286 = vld [vmem:[#allocation14 + $0xb8] sm:$0xf]
    %v4287 = vld [vmem:[#allocation14 + $0xbc] sm:$0xf]
    %v4288 = vld [vmem:[#allocation14 + $0xc0] sm:$0xf]
    %v4289 = vld [vmem:[#allocation14 + $0xc4] sm:$0xf]
    %v4290 = vld [vmem:[#allocation14 + $0xc8] sm:$0xf]
    %v4291 = vld [vmem:[#allocation14 + $0xcc] sm:$0xf]
    %v4292 = vld [vmem:[#allocation14 + $0xd0] sm:$0xf]
    %v4293 = vld [vmem:[#allocation14 + $0xd4] sm:$0xf]
    %v4294 = vld [vmem:[#allocation14 + $0xd8] sm:$0xf]
    %v4295 = vld [vmem:[#allocation14 + $0xdc] sm:$0xf]
    %v4296 = vld [vmem:[#allocation14 + $0xe0] sm:$0xf]
    %v4297 = vld [vmem:[#allocation14 + $0xe4] sm:$0xf]
    %v4298 = vld [vmem:[#allocation14 + $0xe8] sm:$0xf]
    %v4299 = vld [vmem:[#allocation14 + $0xec] sm:$0xf]
    %v4300 = vld [vmem:[#allocation14 + $0xf0] sm:$0xf]
    %v4301 = vld [vmem:[#allocation14 + $0xf4] sm:$0xf]
    %v4302 = vld [vmem:[#allocation14 + $0xf8] sm:$0xf]
    %v4303 = vld [vmem:[#allocation14 + $0xfc] sm:$0xf]
    %v4304 = vld [vmem:[%s16] sm:$0x1]
    %v4306 = vlaneseq
    %v4307 = vshrl.u32 %v4306, 7
    %v4308 = vsub.s32 0, %v4307
    %v4309 = vrot.slane %v4304, %v4308
    %v4375 = vunpack.c.l.b16 %v4240
    %v4376 = vunpack.c.l.b16 %v4241
    %v4377 = vunpack.c.l.b16 %v4242
    %v4378 = vunpack.c.l.b16 %v4243
    %v4379 = vunpack.c.l.b16 %v4244
    %v4380 = vunpack.c.l.b16 %v4245
    %v4381 = vunpack.c.l.b16 %v4246
    %v4382 = vunpack.c.l.b16 %v4247
    %v4383 = vunpack.c.l.b16 %v4248
    %v4384 = vunpack.c.l.b16 %v4249
    %v4385 = vunpack.c.l.b16 %v4250
    %v4386 = vunpack.c.l.b16 %v4251
    %v4387 = vunpack.c.l.b16 %v4252
    %v4388 = vunpack.c.l.b16 %v4253
    %v4389 = vunpack.c.l.b16 %v4254
    %v4390 = vunpack.c.l.b16 %v4255
    %v4391 = vunpack.c.l.b16 %v4256
    %v4392 = vunpack.c.l.b16 %v4257
    %v4393 = vunpack.c.l.b16 %v4258
    %v4394 = vunpack.c.l.b16 %v4259
    %v4395 = vunpack.c.l.b16 %v4260
    %v4396 = vunpack.c.l.b16 %v4261
    %v4397 = vunpack.c.l.b16 %v4262
    %v4398 = vunpack.c.l.b16 %v4263
    %v4399 = vunpack.c.l.b16 %v4264
    %v4400 = vunpack.c.l.b16 %v4265
    %v4401 = vunpack.c.l.b16 %v4266
    %v4402 = vunpack.c.l.b16 %v4267
    %v4403 = vunpack.c.l.b16 %v4268
    %v4404 = vunpack.c.l.b16 %v4269
    %v4405 = vunpack.c.l.b16 %v4270
    %v4406 = vunpack.c.l.b16 %v4271
    %v4407 = vunpack.c.l.b16 %v4272
    %v4408 = vunpack.c.l.b16 %v4273
    %v4409 = vunpack.c.l.b16 %v4274
    %v4410 = vunpack.c.l.b16 %v4275
    %v4411 = vunpack.c.l.b16 %v4276
    %v4412 = vunpack.c.l.b16 %v4277
    %v4413 = vunpack.c.l.b16 %v4278
    %v4414 = vunpack.c.l.b16 %v4279
    %v4415 = vunpack.c.l.b16 %v4280
    %v4416 = vunpack.c.l.b16 %v4281
    %v4417 = vunpack.c.l.b16 %v4282
    %v4418 = vunpack.c.l.b16 %v4283
    %v4419 = vunpack.c.l.b16 %v4284
    %v4420 = vunpack.c.l.b16 %v4285
    %v4421 = vunpack.c.l.b16 %v4286
    %v4422 = vunpack.c.l.b16 %v4287
    %v4423 = vunpack.c.l.b16 %v4288
    %v4424 = vunpack.c.l.b16 %v4289
    %v4425 = vunpack.c.l.b16 %v4290
    %v4426 = vunpack.c.l.b16 %v4291
    %v4427 = vunpack.c.l.b16 %v4292
    %v4428 = vunpack.c.l.b16 %v4293
    %v4429 = vunpack.c.l.b16 %v4294
    %v4430 = vunpack.c.l.b16 %v4295
    %v4431 = vunpack.c.l.b16 %v4296
    %v4432 = vunpack.c.l.b16 %v4297
    %v4433 = vunpack.c.l.b16 %v4298
    %v4434 = vunpack.c.l.b16 %v4299
    %v4435 = vunpack.c.l.b16 %v4300
    %v4436 = vunpack.c.l.b16 %v4301
    %v4437 = vunpack.c.l.b16 %v4302
    %v4438 = vunpack.c.l.b16 %v4303
    %v4439 = vpack.c.b16 %v4376, %v4375
    %v4440 = vpack.c.b16 %v4378, %v4377
    %v4441 = vpack.c.b16 %v4380, %v4379
    %v4442 = vpack.c.b16 %v4382, %v4381
    %v4443 = vpack.c.b16 %v4384, %v4383
    %v4444 = vpack.c.b16 %v4386, %v4385
    %v4445 = vpack.c.b16 %v4388, %v4387
    %v4446 = vpack.c.b16 %v4390, %v4389
    %v4447 = vpack.c.b16 %v4392, %v4391
    %v4448 = vpack.c.b16 %v4394, %v4393
    %v4449 = vpack.c.b16 %v4396, %v4395
    %v4450 = vpack.c.b16 %v4398, %v4397
    %v4451 = vpack.c.b16 %v4400, %v4399
    %v4452 = vpack.c.b16 %v4402, %v4401
    %v4453 = vpack.c.b16 %v4404, %v4403
    %v4454 = vpack.c.b16 %v4406, %v4405
    %v4455 = vpack.c.b16 %v4408, %v4407
    %v4456 = vpack.c.b16 %v4410, %v4409
    %v4457 = vpack.c.b16 %v4412, %v4411
    %v4458 = vpack.c.b16 %v4414, %v4413
    %v4459 = vpack.c.b16 %v4416, %v4415
    %v4460 = vpack.c.b16 %v4418, %v4417
    %v4461 = vpack.c.b16 %v4420, %v4419
    %v4462 = vpack.c.b16 %v4422, %v4421
    %v4463 = vpack.c.b16 %v4424, %v4423
    %v4464 = vpack.c.b16 %v4426, %v4425
    %v4465 = vpack.c.b16 %v4428, %v4427
    %v4466 = vpack.c.b16 %v4430, %v4429
    %v4467 = vpack.c.b16 %v4432, %v4431
    %v4468 = vpack.c.b16 %v4434, %v4433
    %v4469 = vpack.c.b16 %v4436, %v4435
    %v4470 = vpack.c.b16 %v4438, %v4437
    %4503 = vmatprep.subr.bf16.mxu0 0
    %4504 = vmatpush1.bf16.msra.mxu0 %v4446
    %4505 = vmatprep.subr.bf16.mxu0 0
    %4506 = vmatpush1.bf16.msra.mxu0 %v4445
    %4507 = vmatprep.subr.bf16.mxu0 0
    %4508 = vmatpush1.bf16.msra.mxu0 %v4444
    %4509 = vmatprep.subr.bf16.mxu0 0
    %4510 = vmatpush1.bf16.msra.mxu0 %v4443
    %4511 = vmatprep.subr.bf16.mxu0 0
    %4512 = vmatpush1.bf16.msra.mxu0 %v4442
    %4513 = vmatprep.subr.bf16.mxu0 0
    %4514 = vmatpush1.bf16.msra.mxu0 %v4441
    %4515 = vmatprep.subr.bf16.mxu0 0
    %4516 = vmatpush1.bf16.msra.mxu0 %v4440
    %4517 = vmatprep.subr.bf16.mxu0 0
    %4518 = vmatpush1.bf16.msra.mxu0 %v4439
    %4519 = vmatprep.subr.bf16.mxu0 0
    %4520 = vmatpush2.bf16.msra.mxu0 %v4454
    %4521 = vmatprep.subr.bf16.mxu0 0
    %4522 = vmatpush2.bf16.msra.mxu0 %v4453
    %4523 = vmatprep.subr.bf16.mxu0 0
    %4524 = vmatpush2.bf16.msra.mxu0 %v4452
    %4525 = vmatprep.subr.bf16.mxu0 0
    %4526 = vmatpush2.bf16.msra.mxu0 %v4451
    %4527 = vmatprep.subr.bf16.mxu0 0
    %4528 = vmatpush2.bf16.msra.mxu0 %v4450
    %4529 = vmatprep.subr.bf16.mxu0 0
    %4530 = vmatpush2.bf16.msra.mxu0 %v4449
    %4531 = vmatprep.subr.bf16.mxu0 0
    %4532 = vmatpush2.bf16.msra.mxu0 %v4448
    %4533 = vmatprep.subr.bf16.mxu0 0
    %4534 = vmatpush2.bf16.msra.mxu0 %v4447
    %4535 = vmatprep.mubr.bf16.mxu0 %v4137
    %4536 = vmatmul.mubr.bf16.gmra.mxu0 %v4136
    %v4537 = vpop.f32.mrf.mxu0
    %v4538 = vadd.f32 %v4309, %v4537
    %v4539 = vpop.f32.mrf.mxu0
    %v4540 = vpop.f32.mrf.mxu0
    %v4541 = vpop.f32.mrf.mxu0
    %4542 = vdwg.mxu0
    %4543 = vmatprep.subr.bf16.mxu0 0
    %4544 = vmatpush1.bf16.msra.mxu0 %v4462
    %4545 = vmatprep.subr.bf16.mxu0 0
    %4546 = vmatpush1.bf16.msra.mxu0 %v4461
    %4547 = vmatprep.subr.bf16.mxu0 0
    %4548 = vmatpush1.bf16.msra.mxu0 %v4460
    %4549 = vmatprep.subr.bf16.mxu0 0
    %4550 = vmatpush1.bf16.msra.mxu0 %v4459
    %4551 = vmatprep.subr.bf16.mxu0 0
    %4552 = vmatpush1.bf16.msra.mxu0 %v4458
    %4553 = vmatprep.subr.bf16.mxu0 0
    %4554 = vmatpush1.bf16.msra.mxu0 %v4457
    %4555 = vmatprep.subr.bf16.mxu0 0
    %4556 = vmatpush1.bf16.msra.mxu0 %v4456
    %4557 = vmatprep.subr.bf16.mxu0 0
    %4558 = vmatpush1.bf16.msra.mxu0 %v4455
    %4559 = vmatprep.subr.bf16.mxu0 0
    %4560 = vmatpush2.bf16.msra.mxu0 %v4470
    %4561 = vmatprep.subr.bf16.mxu0 0
    %4562 = vmatpush2.bf16.msra.mxu0 %v4469
    %4563 = vmatprep.subr.bf16.mxu0 0
    %4564 = vmatpush2.bf16.msra.mxu0 %v4468
    %4565 = vmatprep.subr.bf16.mxu0 0
    %4566 = vmatpush2.bf16.msra.mxu0 %v4467
    %4567 = vmatprep.subr.bf16.mxu0 0
    %4568 = vmatpush2.bf16.msra.mxu0 %v4466
    %4569 = vmatprep.subr.bf16.mxu0 0
    %4570 = vmatpush2.bf16.msra.mxu0 %v4465
    %4571 = vmatprep.subr.bf16.mxu0 0
    %4572 = vmatpush2.bf16.msra.mxu0 %v4464
    %4573 = vmatprep.subr.bf16.mxu0 0
    %4574 = vmatpush2.bf16.msra.mxu0 %v4463
    %4575 = vmatprep.mubr.bf16.mxu0 %v4239
    %4576 = vmatmul.mubr.bf16.gmra.mxu0 %v4238
    %v4577 = vpop.f32.mrf.mxu0
    %v4578 = vadd.f32 %v4538, %v4577
    %v4579 = vpop.f32.mrf.mxu0
    %v4580 = vpop.f32.mrf.mxu0
    %v4581 = vpop.f32.mrf.mxu0
    %4582 = vdwg.mxu0
    %4583 = vadd.xlane.f32.xlu0 %v4578
    %v4584 = vpop.xlane.xlu0 %4583
    %v4585 = vmul.f32 %v4584, 0.125
    %v4586 = vsub.f32 %v4578, %v4585
    %4587 = vst [vmem:[#allocation16] sm:$0xff] %v4586
    // Predicated region
    $region102: #{tpu_custom_call.1} parent=1 // pred_check
      _
    $region103: #{tpu_custom_call.1} parent=1 // pred_check_branch
      %4589 = sbr.rel (0) target = $region105
    $region104: #{tpu_custom_call.1} parent=1 // pred_region
      %s4591 = ssub.s32 128, 128
      %4592 = vsyncadd [#allocation4], %s4591
      %s4594 = sshll.u32 [#allocation16], 4
      %s4595 = int_to_ptr.vmem [resolvable:$true] %s4594
      %4597 = dma.vmem_to_hbm [thread:$0]  %s4595, 128, %s17, [#allocation4]
    $region105: #{tpu_custom_call.1} parent=1 // pred_fallthru
      _
    // Predicated region
    $region106: #{tpu_custom_call.1} parent=1 // pred_check
      _
    $region107: #{tpu_custom_call.1} parent=1 // pred_check_branch
      %4599 = sbr.rel (0) target = $region109
    $region108: #{tpu_custom_call.1} parent=1 // pred_region
      %4600 = dma.done [#allocation4], 128
    $region109: #{tpu_custom_call.1} parent=1 // pred_fallthru
      _
    %4601 = vsyncpa [#allocation3], 1
    %4602 = vsyncpa [#allocation6], 1
    %4603 = vsyncpa [#allocation9], 1
    %4604 = vsyncpa [#allocation12], 1
    %4605 = vsyncpa [#allocation15], 1
    %4606 = vsyncpa [#allocation4], 1

</llo_original>
